<compile_context>
chip_gen: v5e
topology: v5e:2x2
jax: 0.10.0
libtpu: 0.0.40
codegen_flags: <defaults>
</compile_context>

<pallas_src>
import math
import functools

import jax
import jax.numpy as jnp
from jax import lax
from jax.experimental import pallas as pl
from jax.experimental.pallas import tpu as pltpu

NEG_INF = -1e30  # softmax mask fill (exp underflows to exactly 0 in f32)


def _decoder_layer_kernel(num_head, dph, k_rel, q_tile,
                          x_ref, enc_ref, tmask_ref, smask_ref,
                          wself_ref, bself_ref, wctx_ref, bctx_ref,
                          lng_ref, lnb_ref, wk_ref, wv_ref,
                          wff1_ref, bff1_ref, wff2_ref, bff2_ref,
                          out_ref,
                          ks_ref, vs_ref, kc_ref, vc_ref):
    T = x_ref.shape[1]
    H, d, K, Tq = num_head, dph, k_rel, q_tile
    scale = 1.0 / math.sqrt(d)
    bf16, f32 = jnp.bfloat16, jnp.float32

    def mm(a, w):                                      # bf16 MXU matmul, f32 acc
        return jnp.dot(a.astype(bf16), w.astype(bf16),
                       preferred_element_type=f32)

    # TODO(synk): replace slice+stack head split with a pltpu.einshape-based
    # relayout once its split-dim syntax is confirmed to lower in Mosaic.
    def split_heads(t):                                # (L, D) -> (H, L, d)
        return jnp.stack([t[:, h * d:(h + 1) * d] for h in range(H)], axis=0)

    def merge_heads(t):                                # (H, L, d) -> (L, D)
        return jnp.concatenate([t[h] for h in range(H)], axis=-1)

    def layer_norm(t, i):
        g, b = lng_ref[i], lnb_ref[i]
        mu = jnp.mean(t, axis=-1, keepdims=True)
        var = jnp.mean((t - mu) ** 2, axis=-1, keepdims=True)
        return (t - mu) * lax.rsqrt(var + 1e-6) * g + b

    def softmax(s):                                    # f32 stats, EUP reciprocal
        m = jnp.max(s, axis=-1, keepdims=True)
        e = jnp.exp(s - m)
        return e * pl.reciprocal(jnp.sum(e, axis=-1, keepdims=True), approx=True)

    # ---- K/V caches (self + cross), built once per batch element (t==0) ----
    @pl.when(pl.program_id(1) == 0)
    def _build_kv():
        x_full = x_ref[0]                              # (T, D)
        tkeep_full = 1.0 - tmask_ref[0]                # (T, 1)   1.0 == keep
        k = (mm(x_full, wself_ref[1]) + bself_ref[1]) * tkeep_full
        v = (mm(x_full, wself_ref[2]) + bself_ref[2]) * tkeep_full
        enc = enc_ref[0]                               # (S, D)
        k2 = mm(enc, wctx_ref[1]) + bctx_ref[1]
        v2 = mm(enc, wctx_ref[2]) + bctx_ref[2]
        for h in range(H):
            ks_ref[h] = k[:, h * d:(h + 1) * d].astype(bf16)
            vs_ref[h] = v[:, h * d:(h + 1) * d].astype(bf16)
            kc_ref[h] = k2[:, h * d:(h + 1) * d].astype(bf16)
            vc_ref[h] = v2[:, h * d:(h + 1) * d].astype(bf16)

    q0 = pl.multiple_of(pl.program_id(1) * Tq, Tq)
    x_q = x_ref[0, pl.ds(q0, Tq), :]                   # (Tq, D)
    tkeep_q = 1.0 - tmask_ref[0, pl.ds(q0, Tq), :]     # (Tq, 1)
    src_masked = smask_ref[0][None] > 0.5              # (1, 1, S) True == padded

    # -------- self attention (relative positions + causal mask) --------
    # scale folded into q; rel logits inherit it automatically.
    q = (mm(x_q, wself_ref[0]) + bself_ref[0]) * scale
    q3b = split_heads(q).astype(bf16)                  # (H, Tq, d)
    s = jnp.einsum('hqd,hkd->hqk', q3b, ks_ref[...],
                   preferred_element_type=f32)         # (H, Tq, T)

    # relative logits for buckets 0..K only (col>row buckets are masked anyway)
    wk = wk_ref[...][:K + 1].astype(bf16)              # (K+1, d)
    rel_c = lax.dot_general(q3b.reshape(H * Tq, d), wk,
                            (((1,), (1,)), ((), ())),
                            preferred_element_type=f32).reshape(H, Tq, K + 1)

    row = q0 + lax.broadcasted_iota(jnp.int32, (Tq, T), 0)
    col = lax.broadcasted_iota(jnp.int32, (Tq, T), 1)
    pos = jnp.clip(col - row, -K, K) + K               # (Tq, T), <=K iff unmasked
    causal = (col > row)[None]                         # (1, Tq, T)

    # TODO(synk): for large K replace this O(K) expansion with the
    # Transformer-XL skew (pad+reshape / pltpu.roll) + one edge jnp.where.
    for p in range(K + 1):
        s = s + rel_c[:, :, p:p + 1] * (pos == p).astype(f32)[None]
    s = jnp.where(causal, NEG_INF, s)
    attn = softmax(s)                                  # (H, Tq, T)

    ctx = jnp.einsum('hqk,hkd->hqd', attn.astype(bf16), vs_ref[...],
                     preferred_element_type=f32)       # (H, Tq, d)
    # relative-value term as a single MXU matmul over the K+1 live buckets.
    w_b = jnp.concatenate(
        [jnp.sum(jnp.where(pos[None] == p, attn, 0.0), axis=-1, keepdims=True)
         for p in range(K + 1)], axis=-1)              # (H, Tq, K+1)
    wv = wv_ref[...][:K + 1].astype(bf16)              # (K+1, d)
    ctx = ctx + jnp.dot(w_b.reshape(H * Tq, K + 1).astype(bf16), wv,
                        preferred_element_type=f32).reshape(H, Tq, d)

    a = (mm(merge_heads(ctx), wself_ref[3]) + bself_ref[3]) * tkeep_q
    h1 = layer_norm(a + x_q, 0)

    # -------- encoder-decoder (context) attention --------
    # Masked source keys get exact-zero softmax weight below, so the PyTorch
    # K/V zero-fill (and query zero-fill) is redundant and skipped.
    q2 = (mm(h1, wctx_ref[0]) + bctx_ref[0]) * scale
    q23b = split_heads(q2).astype(bf16)
    s2 = jnp.einsum('hqd,hkd->hqk', q23b, kc_ref[...],
                    preferred_element_type=f32)        # (H, Tq, S)
    s2 = jnp.where(src_masked, NEG_INF, s2)
    attn2 = softmax(s2)
    c = jnp.einsum('hqk,hkd->hqd', attn2.astype(bf16), vc_ref[...],
                   preferred_element_type=f32)         # (H, Tq, d)
    c = (mm(merge_heads(c), wctx_ref[3]) + bctx_ref[3]) * tkeep_q
    h2 = layer_norm(c + h1, 1)

    # -------- position-wise feed forward --------
    # TODO(synk): transformer.PositionwiseFeedForward source not provided;
    # assumed Linear -> ReLU -> (dropout=identity) -> Linear.
    ff = jnp.maximum(mm(h2, wff1_ref[...]) + bff1_ref[0], 0.0)
    ff = (mm(ff, wff2_ref[...]) + bff2_ref[0]) * tkeep_q

    out_ref[0] = layer_norm(ff + h2, 2)


def rel_transformer_decoder_layer(x, enc, tgt_mask, src_mask, params,
                                  num_head, k_rel, q_tile=None):
    B, T, D = x.shape
    S = enc.shape[1]
    dph = D // num_head
    if q_tile is None:                      # largest MXU-friendly tile dividing T
        q_tile = T
        for cand in (512, 256, 128):
            if T % cand == 0:
                q_tile = cand
                break
    Tq = q_tile
    assert T % Tq == 0 and (Tq % 8 == 0 or Tq == T)

    f32, bf16 = jnp.float32, jnp.bfloat16
    tmask = tgt_mask.astype(f32)[:, :, None]       # (B, T, 1)  1.0 == padded
    smask = src_mask.astype(f32)[:, None, :]       # (B, 1, S)  row form only

    # MXU weight operands in bf16 (f32 accumulation in-kernel); biases, LN
    # params and the tiny relative-position tables stay f32.
    w_self = params['w_self'].astype(bf16)
    w_ctx = params['w_ctx'].astype(bf16)
    w_ff1 = params['w_ff1'].astype(bf16)
    w_ff2 = params['w_ff2'].astype(bf16)

    args = (x, enc, tmask, smask,
            w_self, params['b_self'], w_ctx, params['b_ctx'],
            params['ln_g'], params['ln_b'],
            params['wk_emb'], params['wv_emb'],
            w_ff1, params['b_ff1'], w_ff2, params['b_ff2'])

    def batched(arr):
        return pl.BlockSpec((1,) + arr.shape[1:], lambda b, t: (b, 0, 0))

    def full(arr):
        nd = arr.ndim
        return pl.BlockSpec(arr.shape, lambda b, t, _nd=nd: (0,) * _nd)

    in_specs = [batched(x), batched(enc), batched(tmask), batched(smask)] + \
               [full(a) for a in args[4:]]

    kernel = functools.partial(_decoder_layer_kernel, num_head, dph, k_rel, Tq)
    return pl.pallas_call(
        kernel,
        out_shape=jax.ShapeDtypeStruct((B, T, D), f32),
        grid=(B, T // Tq),
        in_specs=in_specs,
        out_specs=pl.BlockSpec((1, Tq, D), lambda b, t: (b, t, 0)),
        scratch_shapes=[
            pltpu.VMEM((num_head, T, dph), bf16),   # self-attn K cache
            pltpu.VMEM((num_head, T, dph), bf16),   # self-attn V cache
            pltpu.VMEM((num_head, S, dph), bf16),   # cross-attn K cache
            pltpu.VMEM((num_head, S, dph), bf16),   # cross-attn V cache
        ],
        compiler_params=pltpu.CompilerParams(
            # batch axis parallel (megacore on v7x), q-tile axis carries the
            # persistent K/V scratch so it must stay "arbitrary".
            dimension_semantics=("parallel", "arbitrary"),
            vmem_limit_bytes=48 * 1024 * 1024),     # safe on v5e/v6e/v7x
    )(*args)


def _reference(x, enc, tgt_mask, src_mask, params, num_head, k_rel,
               mm_dtype=jnp.float32):
    """Pure-JAX mirror of the PyTorch forward (eval mode).

    mm_dtype=bfloat16 mirrors the kernel's bf16 matmul operands (f32 accum).
    """
    B, T, D = x.shape
    S = enc.shape[1]
    H = num_head
    d = D // H
    scale = 1.0 / math.sqrt(d)
    tkeep = (~tgt_mask).astype(jnp.float32)[:, :, None]
    skeep = (~src_mask).astype(jnp.float32)[:, :, None]
    cast = lambda t: t.astype(mm_dtype)

    def mm(a, b):
        return jnp.dot(cast(a), cast(b), preferred_element_type=jnp.float32)

    def ein(expr, a, b):
        return jnp.einsum(expr, cast(a), cast(b),
                          preferred_element_type=jnp.float32)

    def heads(t, L):
        return t.reshape(B, L, H, d).transpose(0, 2, 1, 3)

    def merge(t):
        return t.transpose(0, 2, 1, 3).reshape(B, -1, D)

    def ln(t, g, b):
        mu = t.mean(-1, keepdims=True)
        var = ((t - mu) ** 2).mean(-1, keepdims=True)
        return (t - mu) / jnp.sqrt(var + 1e-6) * g + b

    ws, bs = params['w_self'], params['b_self']
    q = heads((mm(x, ws[0]) + bs[0]) * tkeep, T)
    k = heads((mm(x, ws[1]) + bs[1]) * tkeep, T)
    v = heads((mm(x, ws[2]) + bs[2]) * tkeep, T)
    pos = jnp.clip(jnp.arange(T)[None, :] - jnp.arange(T)[:, None],
                   -k_rel, k_rel) + k_rel
    ak = params['wk_emb'][pos]                        # (T, T, d)
    av = params['wv_emb'][pos]
    scores = (ein('bhqd,bhkd->bhqk', q, k) + ein('bhqd,qvd->bhqv', q, ak)) * scale
    causal = jnp.triu(jnp.ones((T, T), bool), k=1)    # subseq mask replaces pad mask
    attn = jax.nn.softmax(jnp.where(causal[None, None], NEG_INF, scores), axis=-1)
    ctx = ein('bhqk,bhkd->bhqd', attn, v) \
        + jnp.einsum('bhqv,qvd->bhqd', attn, av)      # rel-value term stays f32
    a = (mm(merge(ctx), ws[3]) + bs[3]) * tkeep
    h1 = ln(a + x, params['ln_g'][0], params['ln_b'][0])

    wc, bc = params['w_ctx'], params['b_ctx']
    q2 = heads((mm(h1, wc[0]) + bc[0]) * tkeep, T)
    k2 = heads((mm(enc, wc[1]) + bc[1]) * skeep, S)
    v2 = heads((mm(enc, wc[2]) + bc[2]) * skeep, S)
    s2 = ein('bhqd,bhkd->bhqk', q2, k2) * scale
    attn2 = jax.nn.softmax(
        jnp.where(src_mask[:, None, None, :], NEG_INF, s2), axis=-1)
    c = (mm(merge(ein('bhqk,bhkd->bhqd', attn2, v2)), wc[3]) + bc[3]) * tkeep
    h2 = ln(c + h1, params['ln_g'][1], params['ln_b'][1])

    ff = jnp.maximum(mm(h2, params['w_ff1']) + params['b_ff1'][0], 0.0)
    ff = (mm(ff, params['w_ff2']) + params['b_ff2'][0]) * tkeep
    return ln(ff + h2, params['ln_g'][2], params['ln_b'][2])


if __name__ == "__main__":
    B, T, S, D, H, F, K = 2, 16, 16, 128, 4, 256, 4   # D=128 -> lane-dense stores
    Tq = 8                                            # 2 q-tiles: exercises KV cache reuse
    d = D // H
    key = jax.random.PRNGKey(0)
    ks = iter(jax.random.split(key, 16))
    params = {
        'w_self': 0.1 * jax.random.normal(next(ks), (4, D, D), jnp.float32),
        'b_self': 0.05 * jax.random.normal(next(ks), (4, D), jnp.float32),
        'w_ctx': 0.1 * jax.random.normal(next(ks), (4, D, D), jnp.float32),
        'b_ctx': 0.05 * jax.random.normal(next(ks), (4, D), jnp.float32),
        'ln_g': 1.0 + 0.1 * jax.random.normal(next(ks), (3, D), jnp.float32),
        'ln_b': 0.05 * jax.random.normal(next(ks), (3, D), jnp.float32),
        'w_ff1': 0.1 * jax.random.normal(next(ks), (D, F), jnp.float32),
        'b_ff1': 0.05 * jax.random.normal(next(ks), (1, F), jnp.float32),
        'w_ff2': 0.1 * jax.random.normal(next(ks), (F, D), jnp.float32),
        'b_ff2': 0.05 * jax.random.normal(next(ks), (1, D), jnp.float32),
        'wk_emb': 0.1 * jax.random.normal(next(ks), (2 * K + 1, d), jnp.float32),
        'wv_emb': 0.1 * jax.random.normal(next(ks), (2 * K + 1, d), jnp.float32),
    }
    x = jax.random.normal(next(ks), (B, T, D), jnp.float32)
    enc = jax.random.normal(next(ks), (B, S, D), jnp.float32)
    tgt_mask = jnp.zeros((B, T), bool).at[1, -3:].set(True)   # True == padded
    src_mask = jnp.zeros((B, S), bool).at[0, -5:].set(True)

    out = rel_transformer_decoder_layer(x, enc, tgt_mask, src_mask, params, H, K,
                                        q_tile=Tq)
    out = jax.block_until_ready(out)

    ref_bf16 = _reference(x, enc, tgt_mask, src_mask, params, H, K,
                          mm_dtype=jnp.bfloat16)
    ref_f32 = _reference(x, enc, tgt_mask, src_mask, params, H, K,
                         mm_dtype=jnp.float32)
    assert out.shape == (B, T, D)
    assert bool(jnp.all(jnp.isfinite(out)))
    err16 = float(jnp.max(jnp.abs(out - ref_bf16)))
    err32 = float(jnp.max(jnp.abs(out - ref_f32)))
    # bf16 matmul operands + approx reciprocal => loose bound vs the pure-f32
    # reference; tight bound vs the bf16-matched reference.
    assert err16 < 5e-2, f"max abs error vs bf16-matmul reference: {err16}"
    assert err32 < 1.5e-1, f"max abs error vs f32 reference: {err32}"
    print("KERNEL_OK")
</pallas_src>

<mosaic_0001>
module attributes {stable_mosaic.version = 11 : i64} {
  func.func @_decoder_layer_kernel(%arg0: i32, %arg1: i32, %arg2: memref<1x16x128xf32, #tpu.memory_space<vmem>>, %arg3: memref<1x16x128xf32, #tpu.memory_space<vmem>>, %arg4: memref<1x16x1xf32, #tpu.memory_space<vmem>>, %arg5: memref<1x1x16xf32, #tpu.memory_space<vmem>>, %arg6: memref<4x128x128xbf16, #tpu.memory_space<vmem>>, %arg7: memref<4x128xf32, #tpu.memory_space<vmem>>, %arg8: memref<4x128x128xbf16, #tpu.memory_space<vmem>>, %arg9: memref<4x128xf32, #tpu.memory_space<vmem>>, %arg10: memref<3x128xf32, #tpu.memory_space<vmem>>, %arg11: memref<3x128xf32, #tpu.memory_space<vmem>>, %arg12: memref<9x32xf32, #tpu.memory_space<vmem>>, %arg13: memref<9x32xf32, #tpu.memory_space<vmem>>, %arg14: memref<128x256xbf16, #tpu.memory_space<vmem>>, %arg15: memref<1x256xf32, #tpu.memory_space<vmem>>, %arg16: memref<256x128xbf16, #tpu.memory_space<vmem>>, %arg17: memref<1x128xf32, #tpu.memory_space<vmem>>, %arg18: memref<1x8x128xf32, #tpu.memory_space<vmem>>, %arg19: memref<4x16x32xbf16, #tpu.memory_space<vmem>>, %arg20: memref<4x16x32xbf16, #tpu.memory_space<vmem>>, %arg21: memref<4x16x32xbf16, #tpu.memory_space<vmem>>, %arg22: memref<4x16x32xbf16, #tpu.memory_space<vmem>>) attributes {dimension_semantics = [#tpu.dimension_semantics<parallel>, #tpu.dimension_semantics<arbitrary>], iteration_bounds = array<i64: 2, 2>, scalar_prefetch = 0 : i64, scratch_operands = 4 : i64, tpu.core_type = #tpu.core_type<tc>, window_params = [{transform_indices = @transform_0, window_bounds = array<i64: 1, 16, 128>}, {transform_indices = @transform_1, window_bounds = array<i64: 1, 16, 128>}, {transform_indices = @transform_2, window_bounds = array<i64: 1, 16, 1>}, {transform_indices = @transform_3, window_bounds = array<i64: 1, 1, 16>}, {pipeline_mode = #tpu.pipeline_mode<synchronous>, transform_indices = @transform_4, window_bounds = array<i64: 4, 128, 128>}, {pipeline_mode = #tpu.pipeline_mode<synchronous>, transform_indices = @transform_5, window_bounds = array<i64: 4, 128>}, {pipeline_mode = #tpu.pipeline_mode<synchronous>, transform_indices = @transform_6, window_bounds = array<i64: 4, 128, 128>}, {pipeline_mode = #tpu.pipeline_mode<synchronous>, transform_indices = @transform_7, window_bounds = array<i64: 4, 128>}, {pipeline_mode = #tpu.pipeline_mode<synchronous>, transform_indices = @transform_8, window_bounds = array<i64: 3, 128>}, {pipeline_mode = #tpu.pipeline_mode<synchronous>, transform_indices = @transform_9, window_bounds = array<i64: 3, 128>}, {pipeline_mode = #tpu.pipeline_mode<synchronous>, transform_indices = @transform_10, window_bounds = array<i64: 9, 32>}, {pipeline_mode = #tpu.pipeline_mode<synchronous>, transform_indices = @transform_11, window_bounds = array<i64: 9, 32>}, {pipeline_mode = #tpu.pipeline_mode<synchronous>, transform_indices = @transform_12, window_bounds = array<i64: 128, 256>}, {pipeline_mode = #tpu.pipeline_mode<synchronous>, transform_indices = @transform_13, window_bounds = array<i64: 1, 256>}, {pipeline_mode = #tpu.pipeline_mode<synchronous>, transform_indices = @transform_14, window_bounds = array<i64: 256, 128>}, {pipeline_mode = #tpu.pipeline_mode<synchronous>, transform_indices = @transform_15, window_bounds = array<i64: 1, 128>}, {transform_indices = @transform_16, window_bounds = array<i64: 1, 8, 128>}]} {
    %c0_i32 = arith.constant 0 : i32
    %0 = arith.cmpi eq, %arg1, %c0_i32 : i32
    %1 = arith.extui %0 : i1 to i32
    %c0_i32_0 = arith.constant 0 : i32
    %2 = arith.cmpi ne, %1, %c0_i32_0 : i32
    scf.if %2 {
      %c0_118 = arith.constant 0 : index
      %c0_119 = arith.constant 0 : index
      %c0_120 = arith.constant 0 : index
      %371 = vector.load %arg2[%c0_118, %c0_119, %c0_120] : memref<1x16x128xf32, #tpu.memory_space<vmem>>, vector<1x16x128xf32>
      %372 = vector.shape_cast %371 : vector<1x16x128xf32> to vector<16x128xf32>
      %c0_121 = arith.constant 0 : index
      %c0_122 = arith.constant 0 : index
      %c0_123 = arith.constant 0 : index
      %373 = vector.load %arg4[%c0_121, %c0_122, %c0_123] : memref<1x16x1xf32, #tpu.memory_space<vmem>>, vector<1x16x1xf32>
      %374 = vector.shape_cast %373 : vector<1x16x1xf32> to vector<16x1xf32>
      %cst_124 = arith.constant 1.000000e+00 : f32
      %375 = vector.broadcast %cst_124 : f32 to vector<16x1xf32>
      %376 = arith.subf %375, %374 : vector<16x1xf32>
      %c1_125 = arith.constant 1 : index
      %c0_126 = arith.constant 0 : index
      %c0_127 = arith.constant 0 : index
      %377 = vector.load %arg6[%c1_125, %c0_126, %c0_127] : memref<4x128x128xbf16, #tpu.memory_space<vmem>>, vector<1x128x128xbf16>
      %378 = vector.shape_cast %377 : vector<1x128x128xbf16> to vector<128x128xbf16>
      %379 = arith.truncf %372 : vector<16x128xf32> to vector<16x128xbf16>
      %cst_128 = arith.constant dense<0.000000e+00> : vector<16x128xf32>
      %380 = tpu.matmul %379, %378, %cst_128 {dimension_numbers = #tpu.dot_dimension_numbers<[1], [0], [0], [1], [0, 0, 1, 1], [], []>} : vector<16x128xbf16>, vector<128x128xbf16>, vector<16x128xf32> -> vector<16x128xf32>
      %c1_129 = arith.constant 1 : index
      %c0_130 = arith.constant 0 : index
      %381 = vector.load %arg7[%c1_129, %c0_130] : memref<4x128xf32, #tpu.memory_space<vmem>>, vector<1x128xf32>
      %382 = vector.shape_cast %381 : vector<1x128xf32> to vector<128xf32>
      %383 = vector.shape_cast %382 : vector<128xf32> to vector<1x128xf32>
      %384 = vector.broadcast %383 : vector<1x128xf32> to vector<16x128xf32>
      %385 = arith.addf %380, %384 : vector<16x128xf32>
      %386 = vector.broadcast %376 : vector<16x1xf32> to vector<16x128xf32>
      %387 = arith.mulf %385, %386 : vector<16x128xf32>
      %c2_131 = arith.constant 2 : index
      %c0_132 = arith.constant 0 : index
      %c0_133 = arith.constant 0 : index
      %388 = vector.load %arg6[%c2_131, %c0_132, %c0_133] : memref<4x128x128xbf16, #tpu.memory_space<vmem>>, vector<1x128x128xbf16>
      %389 = vector.shape_cast %388 : vector<1x128x128xbf16> to vector<128x128xbf16>
      %390 = arith.truncf %372 : vector<16x128xf32> to vector<16x128xbf16>
      %cst_134 = arith.constant dense<0.000000e+00> : vector<16x128xf32>
      %391 = tpu.matmul %390, %389, %cst_134 {dimension_numbers = #tpu.dot_dimension_numbers<[1], [0], [0], [1], [0, 0, 1, 1], [], []>} : vector<16x128xbf16>, vector<128x128xbf16>, vector<16x128xf32> -> vector<16x128xf32>
      %c2_135 = arith.constant 2 : index
      %c0_136 = arith.constant 0 : index
      %392 = vector.load %arg7[%c2_135, %c0_136] : memref<4x128xf32, #tpu.memory_space<vmem>>, vector<1x128xf32>
      %393 = vector.shape_cast %392 : vector<1x128xf32> to vector<128xf32>
      %394 = vector.shape_cast %393 : vector<128xf32> to vector<1x128xf32>
      %395 = vector.broadcast %394 : vector<1x128xf32> to vector<16x128xf32>
      %396 = arith.addf %391, %395 : vector<16x128xf32>
      %397 = vector.broadcast %376 : vector<16x1xf32> to vector<16x128xf32>
      %398 = arith.mulf %396, %397 : vector<16x128xf32>
      %c0_137 = arith.constant 0 : index
      %c0_138 = arith.constant 0 : index
      %c0_139 = arith.constant 0 : index
      %399 = vector.load %arg3[%c0_137, %c0_138, %c0_139] : memref<1x16x128xf32, #tpu.memory_space<vmem>>, vector<1x16x128xf32>
      %400 = vector.shape_cast %399 : vector<1x16x128xf32> to vector<16x128xf32>
      %c1_140 = arith.constant 1 : index
      %c0_141 = arith.constant 0 : index
      %c0_142 = arith.constant 0 : index
      %401 = vector.load %arg8[%c1_140, %c0_141, %c0_142] : memref<4x128x128xbf16, #tpu.memory_space<vmem>>, vector<1x128x128xbf16>
      %402 = vector.shape_cast %401 : vector<1x128x128xbf16> to vector<128x128xbf16>
      %403 = arith.truncf %400 : vector<16x128xf32> to vector<16x128xbf16>
      %cst_143 = arith.constant dense<0.000000e+00> : vector<16x128xf32>
      %404 = tpu.matmul %403, %402, %cst_143 {dimension_numbers = #tpu.dot_dimension_numbers<[1], [0], [0], [1], [0, 0, 1, 1], [], []>} : vector<16x128xbf16>, vector<128x128xbf16>, vector<16x128xf32> -> vector<16x128xf32>
      %c1_144 = arith.constant 1 : index
      %c0_145 = arith.constant 0 : index
      %405 = vector.load %arg9[%c1_144, %c0_145] : memref<4x128xf32, #tpu.memory_space<vmem>>, vector<1x128xf32>
      %406 = vector.shape_cast %405 : vector<1x128xf32> to vector<128xf32>
      %407 = vector.shape_cast %406 : vector<128xf32> to vector<1x128xf32>
      %408 = vector.broadcast %407 : vector<1x128xf32> to vector<16x128xf32>
      %409 = arith.addf %404, %408 : vector<16x128xf32>
      %c2_146 = arith.constant 2 : index
      %c0_147 = arith.constant 0 : index
      %c0_148 = arith.constant 0 : index
      %410 = vector.load %arg8[%c2_146, %c0_147, %c0_148] : memref<4x128x128xbf16, #tpu.memory_space<vmem>>, vector<1x128x128xbf16>
      %411 = vector.shape_cast %410 : vector<1x128x128xbf16> to vector<128x128xbf16>
      %412 = arith.truncf %400 : vector<16x128xf32> to vector<16x128xbf16>
      %cst_149 = arith.constant dense<0.000000e+00> : vector<16x128xf32>
      %413 = tpu.matmul %412, %411, %cst_149 {dimension_numbers = #tpu.dot_dimension_numbers<[1], [0], [0], [1], [0, 0, 1, 1], [], []>} : vector<16x128xbf16>, vector<128x128xbf16>, vector<16x128xf32> -> vector<16x128xf32>
      %c2_150 = arith.constant 2 : index
      %c0_151 = arith.constant 0 : index
      %414 = vector.load %arg9[%c2_150, %c0_151] : memref<4x128xf32, #tpu.memory_space<vmem>>, vector<1x128xf32>
      %415 = vector.shape_cast %414 : vector<1x128xf32> to vector<128xf32>
      %416 = vector.shape_cast %415 : vector<128xf32> to vector<1x128xf32>
      %417 = vector.broadcast %416 : vector<1x128xf32> to vector<16x128xf32>
      %418 = arith.addf %413, %417 : vector<16x128xf32>
      %419 = vector.extract_strided_slice %387 {offsets = [0, 0], sizes = [16, 32], strides = [1, 1]} : vector<16x128xf32> to vector<16x32xf32>
      %420 = arith.truncf %419 : vector<16x32xf32> to vector<16x32xbf16>
      %c0_152 = arith.constant 0 : index
      %c0_153 = arith.constant 0 : index
      %c0_154 = arith.constant 0 : index
      %421 = vector.load %arg19[%c0_152, %c0_153, %c0_154] : memref<4x16x32xbf16, #tpu.memory_space<vmem>>, vector<1x16x32xbf16>
      %422 = vector.shape_cast %421 : vector<1x16x32xbf16> to vector<16x32xbf16>
      %423 = vector.shape_cast %420 : vector<16x32xbf16> to vector<1x16x32xbf16>
      tpu.vector_store %arg19[%c0_152, %c0_153, %c0_154], %423 {strides = array<i32>} : memref<4x16x32xbf16, #tpu.memory_space<vmem>>, vector<1x16x32xbf16>,
      %424 = vector.extract_strided_slice %398 {offsets = [0, 0], sizes = [16, 32], strides = [1, 1]} : vector<16x128xf32> to vector<16x32xf32>
      %425 = arith.truncf %424 : vector<16x32xf32> to vector<16x32xbf16>
      %c0_155 = arith.constant 0 : index
      %c0_156 = arith.constant 0 : index
      %c0_157 = arith.constant 0 : index
      %426 = vector.load %arg20[%c0_155, %c0_156, %c0_157] : memref<4x16x32xbf16, #tpu.memory_space<vmem>>, vector<1x16x32xbf16>
      %427 = vector.shape_cast %426 : vector<1x16x32xbf16> to vector<16x32xbf16>
      %428 = vector.shape_cast %425 : vector<16x32xbf16> to vector<1x16x32xbf16>
      tpu.vector_store %arg20[%c0_155, %c0_156, %c0_157], %428 {strides = array<i32>} : memref<4x16x32xbf16, #tpu.memory_space<vmem>>, vector<1x16x32xbf16>,
      %429 = vector.extract_strided_slice %409 {offsets = [0, 0], sizes = [16, 32], strides = [1, 1]} : vector<16x128xf32> to vector<16x32xf32>
      %430 = arith.truncf %429 : vector<16x32xf32> to vector<16x32xbf16>
      %c0_158 = arith.constant 0 : index
      %c0_159 = arith.constant 0 : index
      %c0_160 = arith.constant 0 : index
      %431 = vector.load %arg21[%c0_158, %c0_159, %c0_160] : memref<4x16x32xbf16, #tpu.memory_space<vmem>>, vector<1x16x32xbf16>
      %432 = vector.shape_cast %431 : vector<1x16x32xbf16> to vector<16x32xbf16>
      %433 = vector.shape_cast %430 : vector<16x32xbf16> to vector<1x16x32xbf16>
      tpu.vector_store %arg21[%c0_158, %c0_159, %c0_160], %433 {strides = array<i32>} : memref<4x16x32xbf16, #tpu.memory_space<vmem>>, vector<1x16x32xbf16>,
      %434 = vector.extract_strided_slice %418 {offsets = [0, 0], sizes = [16, 32], strides = [1, 1]} : vector<16x128xf32> to vector<16x32xf32>
      %435 = arith.truncf %434 : vector<16x32xf32> to vector<16x32xbf16>
      %c0_161 = arith.constant 0 : index
      %c0_162 = arith.constant 0 : index
      %c0_163 = arith.constant 0 : index
      %436 = vector.load %arg22[%c0_161, %c0_162, %c0_163] : memref<4x16x32xbf16, #tpu.memory_space<vmem>>, vector<1x16x32xbf16>
      %437 = vector.shape_cast %436 : vector<1x16x32xbf16> to vector<16x32xbf16>
      %438 = vector.shape_cast %435 : vector<16x32xbf16> to vector<1x16x32xbf16>
      tpu.vector_store %arg22[%c0_161, %c0_162, %c0_163], %438 {strides = array<i32>} : memref<4x16x32xbf16, #tpu.memory_space<vmem>>, vector<1x16x32xbf16>,
      %439 = vector.extract_strided_slice %387 {offsets = [0, 32], sizes = [16, 32], strides = [1, 1]} : vector<16x128xf32> to vector<16x32xf32>
      %440 = arith.truncf %439 : vector<16x32xf32> to vector<16x32xbf16>
      %c1_164 = arith.constant 1 : index
      %c0_165 = arith.constant 0 : index
      %c0_166 = arith.constant 0 : index
      %441 = vector.load %arg19[%c1_164, %c0_165, %c0_166] : memref<4x16x32xbf16, #tpu.memory_space<vmem>>, vector<1x16x32xbf16>
      %442 = vector.shape_cast %441 : vector<1x16x32xbf16> to vector<16x32xbf16>
      %443 = vector.shape_cast %440 : vector<16x32xbf16> to vector<1x16x32xbf16>
      tpu.vector_store %arg19[%c1_164, %c0_165, %c0_166], %443 {strides = array<i32>} : memref<4x16x32xbf16, #tpu.memory_space<vmem>>, vector<1x16x32xbf16>,
      %444 = vector.extract_strided_slice %398 {offsets = [0, 32], sizes = [16, 32], strides = [1, 1]} : vector<16x128xf32> to vector<16x32xf32>
      %445 = arith.truncf %444 : vector<16x32xf32> to vector<16x32xbf16>
      %c1_167 = arith.constant 1 : index
      %c0_168 = arith.constant 0 : index
      %c0_169 = arith.constant 0 : index
      %446 = vector.load %arg20[%c1_167, %c0_168, %c0_169] : memref<4x16x32xbf16, #tpu.memory_space<vmem>>, vector<1x16x32xbf16>
      %447 = vector.shape_cast %446 : vector<1x16x32xbf16> to vector<16x32xbf16>
      %448 = vector.shape_cast %445 : vector<16x32xbf16> to vector<1x16x32xbf16>
      tpu.vector_store %arg20[%c1_167, %c0_168, %c0_169], %448 {strides = array<i32>} : memref<4x16x32xbf16, #tpu.memory_space<vmem>>, vector<1x16x32xbf16>,
      %449 = vector.extract_strided_slice %409 {offsets = [0, 32], sizes = [16, 32], strides = [1, 1]} : vector<16x128xf32> to vector<16x32xf32>
      %450 = arith.truncf %449 : vector<16x32xf32> to vector<16x32xbf16>
      %c1_170 = arith.constant 1 : index
      %c0_171 = arith.constant 0 : index
      %c0_172 = arith.constant 0 : index
      %451 = vector.load %arg21[%c1_170, %c0_171, %c0_172] : memref<4x16x32xbf16, #tpu.memory_space<vmem>>, vector<1x16x32xbf16>
      %452 = vector.shape_cast %451 : vector<1x16x32xbf16> to vector<16x32xbf16>
      %453 = vector.shape_cast %450 : vector<16x32xbf16> to vector<1x16x32xbf16>
      tpu.vector_store %arg21[%c1_170, %c0_171, %c0_172], %453 {strides = array<i32>} : memref<4x16x32xbf16, #tpu.memory_space<vmem>>, vector<1x16x32xbf16>,
      %454 = vector.extract_strided_slice %418 {offsets = [0, 32], sizes = [16, 32], strides = [1, 1]} : vector<16x128xf32> to vector<16x32xf32>
      %455 = arith.truncf %454 : vector<16x32xf32> to vector<16x32xbf16>
      %c1_173 = arith.constant 1 : index
      %c0_174 = arith.constant 0 : index
      %c0_175 = arith.constant 0 : index
      %456 = vector.load %arg22[%c1_173, %c0_174, %c0_175] : memref<4x16x32xbf16, #tpu.memory_space<vmem>>, vector<1x16x32xbf16>
      %457 = vector.shape_cast %456 : vector<1x16x32xbf16> to vector<16x32xbf16>
      %458 = vector.shape_cast %455 : vector<16x32xbf16> to vector<1x16x32xbf16>
      tpu.vector_store %arg22[%c1_173, %c0_174, %c0_175], %458 {strides = array<i32>} : memref<4x16x32xbf16, #tpu.memory_space<vmem>>, vector<1x16x32xbf16>,
      %459 = vector.extract_strided_slice %387 {offsets = [0, 64], sizes = [16, 32], strides = [1, 1]} : vector<16x128xf32> to vector<16x32xf32>
      %460 = arith.truncf %459 : vector<16x32xf32> to vector<16x32xbf16>
      %c2_176 = arith.constant 2 : index
      %c0_177 = arith.constant 0 : index
      %c0_178 = arith.constant 0 : index
      %461 = vector.load %arg19[%c2_176, %c0_177, %c0_178] : memref<4x16x32xbf16, #tpu.memory_space<vmem>>, vector<1x16x32xbf16>
      %462 = vector.shape_cast %461 : vector<1x16x32xbf16> to vector<16x32xbf16>
      %463 = vector.shape_cast %460 : vector<16x32xbf16> to vector<1x16x32xbf16>
      tpu.vector_store %arg19[%c2_176, %c0_177, %c0_178], %463 {strides = array<i32>} : memref<4x16x32xbf16, #tpu.memory_space<vmem>>, vector<1x16x32xbf16>,
      %464 = vector.extract_strided_slice %398 {offsets = [0, 64], sizes = [16, 32], strides = [1, 1]} : vector<16x128xf32> to vector<16x32xf32>
      %465 = arith.truncf %464 : vector<16x32xf32> to vector<16x32xbf16>
      %c2_179 = arith.constant 2 : index
      %c0_180 = arith.constant 0 : index
      %c0_181 = arith.constant 0 : index
      %466 = vector.load %arg20[%c2_179, %c0_180, %c0_181] : memref<4x16x32xbf16, #tpu.memory_space<vmem>>, vector<1x16x32xbf16>
      %467 = vector.shape_cast %466 : vector<1x16x32xbf16> to vector<16x32xbf16>
      %468 = vector.shape_cast %465 : vector<16x32xbf16> to vector<1x16x32xbf16>
      tpu.vector_store %arg20[%c2_179, %c0_180, %c0_181], %468 {strides = array<i32>} : memref<4x16x32xbf16, #tpu.memory_space<vmem>>, vector<1x16x32xbf16>,
      %469 = vector.extract_strided_slice %409 {offsets = [0, 64], sizes = [16, 32], strides = [1, 1]} : vector<16x128xf32> to vector<16x32xf32>
      %470 = arith.truncf %469 : vector<16x32xf32> to vector<16x32xbf16>
      %c2_182 = arith.constant 2 : index
      %c0_183 = arith.constant 0 : index
      %c0_184 = arith.constant 0 : index
      %471 = vector.load %arg21[%c2_182, %c0_183, %c0_184] : memref<4x16x32xbf16, #tpu.memory_space<vmem>>, vector<1x16x32xbf16>
      %472 = vector.shape_cast %471 : vector<1x16x32xbf16> to vector<16x32xbf16>
      %473 = vector.shape_cast %470 : vector<16x32xbf16> to vector<1x16x32xbf16>
      tpu.vector_store %arg21[%c2_182, %c0_183, %c0_184], %473 {strides = array<i32>} : memref<4x16x32xbf16, #tpu.memory_space<vmem>>, vector<1x16x32xbf16>,
      %474 = vector.extract_strided_slice %418 {offsets = [0, 64], sizes = [16, 32], strides = [1, 1]} : vector<16x128xf32> to vector<16x32xf32>
      %475 = arith.truncf %474 : vector<16x32xf32> to vector<16x32xbf16>
      %c2_185 = arith.constant 2 : index
      %c0_186 = arith.constant 0 : index
      %c0_187 = arith.constant 0 : index
      %476 = vector.load %arg22[%c2_185, %c0_186, %c0_187] : memref<4x16x32xbf16, #tpu.memory_space<vmem>>, vector<1x16x32xbf16>
      %477 = vector.shape_cast %476 : vector<1x16x32xbf16> to vector<16x32xbf16>
      %478 = vector.shape_cast %475 : vector<16x32xbf16> to vector<1x16x32xbf16>
      tpu.vector_store %arg22[%c2_185, %c0_186, %c0_187], %478 {strides = array<i32>} : memref<4x16x32xbf16, #tpu.memory_space<vmem>>, vector<1x16x32xbf16>,
      %479 = vector.extract_strided_slice %387 {offsets = [0, 96], sizes = [16, 32], strides = [1, 1]} : vector<16x128xf32> to vector<16x32xf32>
      %480 = arith.truncf %479 : vector<16x32xf32> to vector<16x32xbf16>
      %c3_188 = arith.constant 3 : index
      %c0_189 = arith.constant 0 : index
      %c0_190 = arith.constant 0 : index
      %481 = vector.load %arg19[%c3_188, %c0_189, %c0_190] : memref<4x16x32xbf16, #tpu.memory_space<vmem>>, vector<1x16x32xbf16>
      %482 = vector.shape_cast %481 : vector<1x16x32xbf16> to vector<16x32xbf16>
      %483 = vector.shape_cast %480 : vector<16x32xbf16> to vector<1x16x32xbf16>
      tpu.vector_store %arg19[%c3_188, %c0_189, %c0_190], %483 {strides = array<i32>} : memref<4x16x32xbf16, #tpu.memory_space<vmem>>, vector<1x16x32xbf16>,
      %484 = vector.extract_strided_slice %398 {offsets = [0, 96], sizes = [16, 32], strides = [1, 1]} : vector<16x128xf32> to vector<16x32xf32>
      %485 = arith.truncf %484 : vector<16x32xf32> to vector<16x32xbf16>
      %c3_191 = arith.constant 3 : index
      %c0_192 = arith.constant 0 : index
      %c0_193 = arith.constant 0 : index
      %486 = vector.load %arg20[%c3_191, %c0_192, %c0_193] : memref<4x16x32xbf16, #tpu.memory_space<vmem>>, vector<1x16x32xbf16>
      %487 = vector.shape_cast %486 : vector<1x16x32xbf16> to vector<16x32xbf16>
      %488 = vector.shape_cast %485 : vector<16x32xbf16> to vector<1x16x32xbf16>
      tpu.vector_store %arg20[%c3_191, %c0_192, %c0_193], %488 {strides = array<i32>} : memref<4x16x32xbf16, #tpu.memory_space<vmem>>, vector<1x16x32xbf16>,
      %489 = vector.extract_strided_slice %409 {offsets = [0, 96], sizes = [16, 32], strides = [1, 1]} : vector<16x128xf32> to vector<16x32xf32>
      %490 = arith.truncf %489 : vector<16x32xf32> to vector<16x32xbf16>
      %c3_194 = arith.constant 3 : index
      %c0_195 = arith.constant 0 : index
      %c0_196 = arith.constant 0 : index
      %491 = vector.load %arg21[%c3_194, %c0_195, %c0_196] : memref<4x16x32xbf16, #tpu.memory_space<vmem>>, vector<1x16x32xbf16>
      %492 = vector.shape_cast %491 : vector<1x16x32xbf16> to vector<16x32xbf16>
      %493 = vector.shape_cast %490 : vector<16x32xbf16> to vector<1x16x32xbf16>
      tpu.vector_store %arg21[%c3_194, %c0_195, %c0_196], %493 {strides = array<i32>} : memref<4x16x32xbf16, #tpu.memory_space<vmem>>, vector<1x16x32xbf16>,
      %494 = vector.extract_strided_slice %418 {offsets = [0, 96], sizes = [16, 32], strides = [1, 1]} : vector<16x128xf32> to vector<16x32xf32>
      %495 = arith.truncf %494 : vector<16x32xf32> to vector<16x32xbf16>
      %c3_197 = arith.constant 3 : index
      %c0_198 = arith.constant 0 : index
      %c0_199 = arith.constant 0 : index
      %496 = vector.load %arg22[%c3_197, %c0_198, %c0_199] : memref<4x16x32xbf16, #tpu.memory_space<vmem>>, vector<1x16x32xbf16>
      %497 = vector.shape_cast %496 : vector<1x16x32xbf16> to vector<16x32xbf16>
      %498 = vector.shape_cast %495 : vector<16x32xbf16> to vector<1x16x32xbf16>
      tpu.vector_store %arg22[%c3_197, %c0_198, %c0_199], %498 {strides = array<i32>} : memref<4x16x32xbf16, #tpu.memory_space<vmem>>, vector<1x16x32xbf16>,
    } else {
    }
    %c8_i32 = arith.constant 8 : i32
    %3 = arith.muli %arg1, %c8_i32 : i32
    %4 = tpu.assume_multiple %3, 8 : i32
    %c0 = arith.constant 0 : index
    %5 = arith.index_cast %4 : i32 to index
    %c0_1 = arith.constant 0 : index
    %6 = vector.load %arg2[%c0, %5, %c0_1] : memref<1x16x128xf32, #tpu.memory_space<vmem>>, vector<1x8x128xf32>
    %7 = vector.shape_cast %6 : vector<1x8x128xf32> to vector<8x128xf32>
    %c0_2 = arith.constant 0 : index
    %8 = arith.index_cast %4 : i32 to index
    %c0_3 = arith.constant 0 : index
    %9 = vector.load %arg4[%c0_2, %8, %c0_3] : memref<1x16x1xf32, #tpu.memory_space<vmem>>, vector<1x8x1xf32>
    %10 = vector.shape_cast %9 : vector<1x8x1xf32> to vector<8x1xf32>
    %cst = arith.constant 1.000000e+00 : f32
    %11 = vector.broadcast %cst : f32 to vector<8x1xf32>
    %12 = arith.subf %11, %10 : vector<8x1xf32>
    %c0_4 = arith.constant 0 : index
    %c0_5 = arith.constant 0 : index
    %c0_6 = arith.constant 0 : index
    %13 = vector.load %arg5[%c0_4, %c0_5, %c0_6] : memref<1x1x16xf32, #tpu.memory_space<vmem>>, vector<1x1x16xf32>
    %14 = vector.shape_cast %13 : vector<1x1x16xf32> to vector<1x16xf32>
    %15 = vector.shape_cast %14 : vector<1x16xf32> to vector<1x1x16xf32>
    %cst_7 = arith.constant 5.000000e-01 : f32
    %16 = vector.broadcast %cst_7 : f32 to vector<1x1x16xf32>
    %17 = arith.cmpf ogt, %15, %16 : vector<1x1x16xf32>
    %c0_8 = arith.constant 0 : index
    %c0_9 = arith.constant 0 : index
    %c0_10 = arith.constant 0 : index
    %18 = vector.load %arg6[%c0_8, %c0_9, %c0_10] : memref<4x128x128xbf16, #tpu.memory_space<vmem>>, vector<1x128x128xbf16>
    %19 = vector.shape_cast %18 : vector<1x128x128xbf16> to vector<128x128xbf16>
    %20 = arith.truncf %7 : vector<8x128xf32> to vector<8x128xbf16>
    %cst_11 = arith.constant dense<0.000000e+00> : vector<8x128xf32>
    %21 = tpu.matmul %20, %19, %cst_11 {dimension_numbers = #tpu.dot_dimension_numbers<[1], [0], [0], [1], [0, 0, 1, 1], [], []>} : vector<8x128xbf16>, vector<128x128xbf16>, vector<8x128xf32> -> vector<8x128xf32>
    %c0_12 = arith.constant 0 : index
    %c0_13 = arith.constant 0 : index
    %22 = vector.load %arg7[%c0_12, %c0_13] : memref<4x128xf32, #tpu.memory_space<vmem>>, vector<1x128xf32>
    %23 = vector.shape_cast %22 : vector<1x128xf32> to vector<128xf32>
    %24 = vector.shape_cast %23 : vector<128xf32> to vector<1x128xf32>
    %25 = vector.broadcast %24 : vector<1x128xf32> to vector<8x128xf32>
    %26 = arith.addf %21, %25 : vector<8x128xf32>
    %cst_14 = arith.constant 0.176776692 : f32
    %27 = vector.broadcast %cst_14 : f32 to vector<8x128xf32>
    %28 = arith.mulf %26, %27 : vector<8x128xf32>
    %29 = vector.extract_strided_slice %28 {offsets = [0, 0], sizes = [8, 32], strides = [1, 1]} : vector<8x128xf32> to vector<8x32xf32>
    %30 = vector.extract_strided_slice %28 {offsets = [0, 32], sizes = [8, 32], strides = [1, 1]} : vector<8x128xf32> to vector<8x32xf32>
    %31 = vector.extract_strided_slice %28 {offsets = [0, 64], sizes = [8, 32], strides = [1, 1]} : vector<8x128xf32> to vector<8x32xf32>
    %32 = vector.extract_strided_slice %28 {offsets = [0, 96], sizes = [8, 32], strides = [1, 1]} : vector<8x128xf32> to vector<8x32xf32>
    %33 = vector.shape_cast %29 : vector<8x32xf32> to vector<1x8x32xf32>
    %34 = vector.shape_cast %30 : vector<8x32xf32> to vector<1x8x32xf32>
    %35 = vector.shape_cast %31 : vector<8x32xf32> to vector<1x8x32xf32>
    %36 = vector.shape_cast %32 : vector<8x32xf32> to vector<1x8x32xf32>
    %37 = tpu.concatenate %33, %34, %35, %36 in 0 : vector<1x8x32xf32>, vector<1x8x32xf32>, vector<1x8x32xf32>, vector<1x8x32xf32> -> vector<4x8x32xf32>
    %38 = arith.truncf %37 : vector<4x8x32xf32> to vector<4x8x32xbf16>
    %c0_15 = arith.constant 0 : index
    %c0_16 = arith.constant 0 : index
    %c0_17 = arith.constant 0 : index
    %39 = vector.load %arg19[%c0_15, %c0_16, %c0_17] : memref<4x16x32xbf16, #tpu.memory_space<vmem>>, vector<4x16x32xbf16>
    "tpu.trace_start"() <{level = 10 : i32, message = "hqd,hkd->hqk"}> : () -> ()
    %cst_18 = arith.constant dense<0.000000e+00> : vector<4x8x16xf32>
    %40 = tpu.matmul %38, %39, %cst_18 {dimension_numbers = #tpu.dot_dimension_numbers<[2], [2], [1], [1], [0, 0, 0, 1, 1, 1], [0], [0]>} : vector<4x8x32xbf16>, vector<4x16x32xbf16>, vector<4x8x16xf32> -> vector<4x8x16xf32>
    "tpu.trace_stop"() : () -> ()
    %c0_19 = arith.constant 0 : index
    %c0_20 = arith.constant 0 : index
    %41 = vector.load %arg12[%c0_19, %c0_20] : memref<9x32xf32, #tpu.memory_space<vmem>>, vector<9x32xf32>
    %42 = vector.extract_strided_slice %41 {offsets = [0, 0], sizes = [5, 32], strides = [1, 1]} : vector<9x32xf32> to vector<5x32xf32>
    %43 = arith.truncf %42 : vector<5x32xf32> to vector<5x32xbf16>
    %44 = vector.shape_cast %38 : vector<4x8x32xbf16> to vector<32x32xbf16>
    %cst_21 = arith.constant dense<0.000000e+00> : vector<32x5xf32>
    %45 = tpu.matmul %44, %43, %cst_21 {dimension_numbers = #tpu.dot_dimension_numbers<[1], [1], [0], [0], [0, 0, 1, 0], [], []>} : vector<32x32xbf16>, vector<5x32xbf16>, vector<32x5xf32> -> vector<32x5xf32>
    %46 = vector.shape_cast %45 : vector<32x5xf32> to vector<4x8x5xf32>
    %47 = tpu.iota {dimensions = array<i32: 0>} : vector<8x16xi32>
    %48 = vector.broadcast %4 : i32 to vector<8x16xi32>
    %49 = arith.addi %48, %47 : vector<8x16xi32>
    %50 = tpu.iota {dimensions = array<i32: 1>} : vector<8x16xi32>
    %51 = arith.subi %50, %49 : vector<8x16xi32>
    %c-4_i32 = arith.constant -4 : i32
    %c4_i32 = arith.constant 4 : i32
    %52 = vector.broadcast %c-4_i32 : i32 to vector<8x16xi32>
    %53 = arith.maxsi %52, %51 : vector<8x16xi32>
    %54 = vector.broadcast %c4_i32 : i32 to vector<8x16xi32>
    %55 = arith.minsi %54, %53 : vector<8x16xi32>
    %c4_i32_22 = arith.constant 4 : i32
    %56 = vector.broadcast %c4_i32_22 : i32 to vector<8x16xi32>
    %57 = arith.addi %55, %56 : vector<8x16xi32>
    %58 = arith.cmpi sgt, %50, %49 : vector<8x16xi32>
    %59 = vector.shape_cast %58 : vector<8x16xi1> to vector<1x8x16xi1>
    %60 = vector.extract_strided_slice %46 {offsets = [0, 0, 0], sizes = [4, 8, 1], strides = [1, 1, 1]} : vector<4x8x5xf32> to vector<4x8x1xf32>
    %c0_i32_23 = arith.constant 0 : i32
    %61 = vector.broadcast %c0_i32_23 : i32 to vector<8x16xi32>
    %62 = arith.cmpi eq, %57, %61 : vector<8x16xi32>
    %63 = arith.extui %62 : vector<8x16xi1> to vector<8x16xi32>
    %64 = arith.sitofp %63 : vector<8x16xi32> to vector<8x16xf32>
    %65 = vector.shape_cast %64 : vector<8x16xf32> to vector<1x8x16xf32>
    %66 = vector.broadcast %60 : vector<4x8x1xf32> to vector<4x8x16xf32>
    %67 = vector.broadcast %65 : vector<1x8x16xf32> to vector<4x8x16xf32>
    %68 = arith.mulf %66, %67 : vector<4x8x16xf32>
    %69 = arith.addf %40, %68 : vector<4x8x16xf32>
    %70 = vector.extract_strided_slice %46 {offsets = [0, 0, 1], sizes = [4, 8, 1], strides = [1, 1, 1]} : vector<4x8x5xf32> to vector<4x8x1xf32>
    %c1_i32 = arith.constant 1 : i32
    %71 = vector.broadcast %c1_i32 : i32 to vector<8x16xi32>
    %72 = arith.cmpi eq, %57, %71 : vector<8x16xi32>
    %73 = arith.extui %72 : vector<8x16xi1> to vector<8x16xi32>
    %74 = arith.sitofp %73 : vector<8x16xi32> to vector<8x16xf32>
    %75 = vector.shape_cast %74 : vector<8x16xf32> to vector<1x8x16xf32>
    %76 = vector.broadcast %70 : vector<4x8x1xf32> to vector<4x8x16xf32>
    %77 = vector.broadcast %75 : vector<1x8x16xf32> to vector<4x8x16xf32>
    %78 = arith.mulf %76, %77 : vector<4x8x16xf32>
    %79 = arith.addf %69, %78 : vector<4x8x16xf32>
    %80 = vector.extract_strided_slice %46 {offsets = [0, 0, 2], sizes = [4, 8, 1], strides = [1, 1, 1]} : vector<4x8x5xf32> to vector<4x8x1xf32>
    %c2_i32 = arith.constant 2 : i32
    %81 = vector.broadcast %c2_i32 : i32 to vector<8x16xi32>
    %82 = arith.cmpi eq, %57, %81 : vector<8x16xi32>
    %83 = arith.extui %82 : vector<8x16xi1> to vector<8x16xi32>
    %84 = arith.sitofp %83 : vector<8x16xi32> to vector<8x16xf32>
    %85 = vector.shape_cast %84 : vector<8x16xf32> to vector<1x8x16xf32>
    %86 = vector.broadcast %80 : vector<4x8x1xf32> to vector<4x8x16xf32>
    %87 = vector.broadcast %85 : vector<1x8x16xf32> to vector<4x8x16xf32>
    %88 = arith.mulf %86, %87 : vector<4x8x16xf32>
    %89 = arith.addf %79, %88 : vector<4x8x16xf32>
    %90 = vector.extract_strided_slice %46 {offsets = [0, 0, 3], sizes = [4, 8, 1], strides = [1, 1, 1]} : vector<4x8x5xf32> to vector<4x8x1xf32>
    %c3_i32 = arith.constant 3 : i32
    %91 = vector.broadcast %c3_i32 : i32 to vector<8x16xi32>
    %92 = arith.cmpi eq, %57, %91 : vector<8x16xi32>
    %93 = arith.extui %92 : vector<8x16xi1> to vector<8x16xi32>
    %94 = arith.sitofp %93 : vector<8x16xi32> to vector<8x16xf32>
    %95 = vector.shape_cast %94 : vector<8x16xf32> to vector<1x8x16xf32>
    %96 = vector.broadcast %90 : vector<4x8x1xf32> to vector<4x8x16xf32>
    %97 = vector.broadcast %95 : vector<1x8x16xf32> to vector<4x8x16xf32>
    %98 = arith.mulf %96, %97 : vector<4x8x16xf32>
    %99 = arith.addf %89, %98 : vector<4x8x16xf32>
    %100 = vector.extract_strided_slice %46 {offsets = [0, 0, 4], sizes = [4, 8, 1], strides = [1, 1, 1]} : vector<4x8x5xf32> to vector<4x8x1xf32>
    %c4_i32_24 = arith.constant 4 : i32
    %101 = vector.broadcast %c4_i32_24 : i32 to vector<8x16xi32>
    %102 = arith.cmpi eq, %57, %101 : vector<8x16xi32>
    %103 = arith.extui %102 : vector<8x16xi1> to vector<8x16xi32>
    %104 = arith.sitofp %103 : vector<8x16xi32> to vector<8x16xf32>
    %105 = vector.shape_cast %104 : vector<8x16xf32> to vector<1x8x16xf32>
    %106 = vector.broadcast %100 : vector<4x8x1xf32> to vector<4x8x16xf32>
    %107 = vector.broadcast %105 : vector<1x8x16xf32> to vector<4x8x16xf32>
    %108 = arith.mulf %106, %107 : vector<4x8x16xf32>
    %109 = arith.addf %99, %108 : vector<4x8x16xf32>
    %cst_25 = arith.constant -1.000000e+30 : f32
    %110 = vector.shape_cast %59 : vector<1x8x16xi1> to vector<1x8x16xi1>
    %111 = vector.broadcast %110 : vector<1x8x16xi1> to vector<4x8x16xi1>
    %112 = vector.broadcast %cst_25 : f32 to vector<4x8x16xf32>
    %113 = arith.select %111, %112, %109 : vector<4x8x16xi1>, vector<4x8x16xf32>
    %cst_26 = arith.constant dense<0xFF800000> : vector<4x8xf32>
    %114 = vector.multi_reduction <maximumf>, %113, %cst_26 [2] : vector<4x8x16xf32> to vector<4x8xf32>
    %115 = vector.shape_cast %114 : vector<4x8xf32> to vector<4x8x1xf32>
    %116 = vector.broadcast %115 : vector<4x8x1xf32> to vector<4x8x16xf32>
    %117 = arith.subf %113, %116 : vector<4x8x16xf32>
    %118 = math.exp %117 : vector<4x8x16xf32>
    %cst_27 = arith.constant dense<0.000000e+00> : vector<4x8xf32>
    %119 = vector.multi_reduction <add>, %118, %cst_27 [2] : vector<4x8x16xf32> to vector<4x8xf32>
    %120 = vector.shape_cast %119 : vector<4x8xf32> to vector<4x8x1xf32>
    %121 = tpu.reciprocal %120 {approx = true} : vector<4x8x1xf32> -> vector<4x8x1xf32>
    %122 = vector.broadcast %121 : vector<4x8x1xf32> to vector<4x8x16xf32>
    %123 = arith.mulf %118, %122 : vector<4x8x16xf32>
    %124 = arith.truncf %123 : vector<4x8x16xf32> to vector<4x8x16xbf16>
    %c0_28 = arith.constant 0 : index
    %c0_29 = arith.constant 0 : index
    %c0_30 = arith.constant 0 : index
    %125 = vector.load %arg20[%c0_28, %c0_29, %c0_30] : memref<4x16x32xbf16, #tpu.memory_space<vmem>>, vector<4x16x32xbf16>
    "tpu.trace_start"() <{level = 10 : i32, message = "hqk,hkd->hqd"}> : () -> ()
    %cst_31 = arith.constant dense<0.000000e+00> : vector<4x8x32xf32>
    %126 = tpu.matmul %124, %125, %cst_31 {dimension_numbers = #tpu.dot_dimension_numbers<[2], [1], [1], [2], [0, 0, 0, 1, 1, 2], [0], [0]>} : vector<4x8x16xbf16>, vector<4x16x32xbf16>, vector<4x8x32xf32> -> vector<4x8x32xf32>
    "tpu.trace_stop"() : () -> ()
    %127 = vector.shape_cast %57 : vector<8x16xi32> to vector<1x8x16xi32>
    %c0_i32_32 = arith.constant 0 : i32
    %128 = vector.broadcast %c0_i32_32 : i32 to vector<1x8x16xi32>
    %129 = arith.cmpi eq, %127, %128 : vector<1x8x16xi32>
    %cst_33 = arith.constant 0.000000e+00 : f32
    %130 = vector.shape_cast %129 : vector<1x8x16xi1> to vector<1x8x16xi1>
    %131 = vector.broadcast %130 : vector<1x8x16xi1> to vector<4x8x16xi1>
    %132 = vector.broadcast %cst_33 : f32 to vector<4x8x16xf32>
    %133 = arith.select %131, %123, %132 : vector<4x8x16xi1>, vector<4x8x16xf32>
    %cst_34 = arith.constant dense<0.000000e+00> : vector<4x8xf32>
    %134 = vector.multi_reduction <add>, %133, %cst_34 [2] : vector<4x8x16xf32> to vector<4x8xf32>
    %135 = vector.shape_cast %134 : vector<4x8xf32> to vector<4x8x1xf32>
    %136 = vector.shape_cast %57 : vector<8x16xi32> to vector<1x8x16xi32>
    %c1_i32_35 = arith.constant 1 : i32
    %137 = vector.broadcast %c1_i32_35 : i32 to vector<1x8x16xi32>
    %138 = arith.cmpi eq, %136, %137 : vector<1x8x16xi32>
    %cst_36 = arith.constant 0.000000e+00 : f32
    %139 = vector.shape_cast %138 : vector<1x8x16xi1> to vector<1x8x16xi1>
    %140 = vector.broadcast %139 : vector<1x8x16xi1> to vector<4x8x16xi1>
    %141 = vector.broadcast %cst_36 : f32 to vector<4x8x16xf32>
    %142 = arith.select %140, %123, %141 : vector<4x8x16xi1>, vector<4x8x16xf32>
    %cst_37 = arith.constant dense<0.000000e+00> : vector<4x8xf32>
    %143 = vector.multi_reduction <add>, %142, %cst_37 [2] : vector<4x8x16xf32> to vector<4x8xf32>
    %144 = vector.shape_cast %143 : vector<4x8xf32> to vector<4x8x1xf32>
    %145 = vector.shape_cast %57 : vector<8x16xi32> to vector<1x8x16xi32>
    %c2_i32_38 = arith.constant 2 : i32
    %146 = vector.broadcast %c2_i32_38 : i32 to vector<1x8x16xi32>
    %147 = arith.cmpi eq, %145, %146 : vector<1x8x16xi32>
    %cst_39 = arith.constant 0.000000e+00 : f32
    %148 = vector.shape_cast %147 : vector<1x8x16xi1> to vector<1x8x16xi1>
    %149 = vector.broadcast %148 : vector<1x8x16xi1> to vector<4x8x16xi1>
    %150 = vector.broadcast %cst_39 : f32 to vector<4x8x16xf32>
    %151 = arith.select %149, %123, %150 : vector<4x8x16xi1>, vector<4x8x16xf32>
    %cst_40 = arith.constant dense<0.000000e+00> : vector<4x8xf32>
    %152 = vector.multi_reduction <add>, %151, %cst_40 [2] : vector<4x8x16xf32> to vector<4x8xf32>
    %153 = vector.shape_cast %152 : vector<4x8xf32> to vector<4x8x1xf32>
    %154 = vector.shape_cast %57 : vector<8x16xi32> to vector<1x8x16xi32>
    %c3_i32_41 = arith.constant 3 : i32
    %155 = vector.broadcast %c3_i32_41 : i32 to vector<1x8x16xi32>
    %156 = arith.cmpi eq, %154, %155 : vector<1x8x16xi32>
    %cst_42 = arith.constant 0.000000e+00 : f32
    %157 = vector.shape_cast %156 : vector<1x8x16xi1> to vector<1x8x16xi1>
    %158 = vector.broadcast %157 : vector<1x8x16xi1> to vector<4x8x16xi1>
    %159 = vector.broadcast %cst_42 : f32 to vector<4x8x16xf32>
    %160 = arith.select %158, %123, %159 : vector<4x8x16xi1>, vector<4x8x16xf32>
    %cst_43 = arith.constant dense<0.000000e+00> : vector<4x8xf32>
    %161 = vector.multi_reduction <add>, %160, %cst_43 [2] : vector<4x8x16xf32> to vector<4x8xf32>
    %162 = vector.shape_cast %161 : vector<4x8xf32> to vector<4x8x1xf32>
    %163 = vector.shape_cast %57 : vector<8x16xi32> to vector<1x8x16xi32>
    %c4_i32_44 = arith.constant 4 : i32
    %164 = vector.broadcast %c4_i32_44 : i32 to vector<1x8x16xi32>
    %165 = arith.cmpi eq, %163, %164 : vector<1x8x16xi32>
    %cst_45 = arith.constant 0.000000e+00 : f32
    %166 = vector.shape_cast %165 : vector<1x8x16xi1> to vector<1x8x16xi1>
    %167 = vector.broadcast %166 : vector<1x8x16xi1> to vector<4x8x16xi1>
    %168 = vector.broadcast %cst_45 : f32 to vector<4x8x16xf32>
    %169 = arith.select %167, %123, %168 : vector<4x8x16xi1>, vector<4x8x16xf32>
    %cst_46 = arith.constant dense<0.000000e+00> : vector<4x8xf32>
    %170 = vector.multi_reduction <add>, %169, %cst_46 [2] : vector<4x8x16xf32> to vector<4x8xf32>
    %171 = vector.shape_cast %170 : vector<4x8xf32> to vector<4x8x1xf32>
    %172 = tpu.concatenate %135, %144, %153, %162, %171 in 2 : vector<4x8x1xf32>, vector<4x8x1xf32>, vector<4x8x1xf32>, vector<4x8x1xf32>, vector<4x8x1xf32> -> vector<4x8x5xf32>
    %c0_47 = arith.constant 0 : index
    %c0_48 = arith.constant 0 : index
    %173 = vector.load %arg13[%c0_47, %c0_48] : memref<9x32xf32, #tpu.memory_space<vmem>>, vector<9x32xf32>
    %174 = vector.extract_strided_slice %173 {offsets = [0, 0], sizes = [5, 32], strides = [1, 1]} : vector<9x32xf32> to vector<5x32xf32>
    %175 = arith.truncf %174 : vector<5x32xf32> to vector<5x32xbf16>
    %176 = vector.shape_cast %172 : vector<4x8x5xf32> to vector<32x5xf32>
    %177 = arith.truncf %176 : vector<32x5xf32> to vector<32x5xbf16>
    %cst_49 = arith.constant dense<0.000000e+00> : vector<32x32xf32>
    %178 = tpu.matmul %177, %175, %cst_49 {dimension_numbers = #tpu.dot_dimension_numbers<[1], [0], [0], [1], [0, 0, 1, 1], [], []>} : vector<32x5xbf16>, vector<5x32xbf16>, vector<32x32xf32> -> vector<32x32xf32>
    %179 = vector.shape_cast %178 : vector<32x32xf32> to vector<4x8x32xf32>
    %180 = arith.addf %126, %179 : vector<4x8x32xf32>
    %181 = vector.extract_strided_slice %180 {offsets = [0, 0, 0], sizes = [1, 8, 32], strides = [1, 1, 1]} : vector<4x8x32xf32> to vector<1x8x32xf32>
    %182 = vector.shape_cast %181 : vector<1x8x32xf32> to vector<8x32xf32>
    %183 = vector.extract_strided_slice %180 {offsets = [1, 0, 0], sizes = [1, 8, 32], strides = [1, 1, 1]} : vector<4x8x32xf32> to vector<1x8x32xf32>
    %184 = vector.shape_cast %183 : vector<1x8x32xf32> to vector<8x32xf32>
    %185 = vector.extract_strided_slice %180 {offsets = [2, 0, 0], sizes = [1, 8, 32], strides = [1, 1, 1]} : vector<4x8x32xf32> to vector<1x8x32xf32>
    %186 = vector.shape_cast %185 : vector<1x8x32xf32> to vector<8x32xf32>
    %187 = vector.extract_strided_slice %180 {offsets = [3, 0, 0], sizes = [1, 8, 32], strides = [1, 1, 1]} : vector<4x8x32xf32> to vector<1x8x32xf32>
    %188 = vector.shape_cast %187 : vector<1x8x32xf32> to vector<8x32xf32>
    %189 = tpu.concatenate %182, %184, %186, %188 in 1 : vector<8x32xf32>, vector<8x32xf32>, vector<8x32xf32>, vector<8x32xf32> -> vector<8x128xf32>
    %c3 = arith.constant 3 : index
    %c0_50 = arith.constant 0 : index
    %c0_51 = arith.constant 0 : index
    %190 = vector.load %arg6[%c3, %c0_50, %c0_51] : memref<4x128x128xbf16, #tpu.memory_space<vmem>>, vector<1x128x128xbf16>
    %191 = vector.shape_cast %190 : vector<1x128x128xbf16> to vector<128x128xbf16>
    %192 = arith.truncf %189 : vector<8x128xf32> to vector<8x128xbf16>
    %cst_52 = arith.constant dense<0.000000e+00> : vector<8x128xf32>
    %193 = tpu.matmul %192, %191, %cst_52 {dimension_numbers = #tpu.dot_dimension_numbers<[1], [0], [0], [1], [0, 0, 1, 1], [], []>} : vector<8x128xbf16>, vector<128x128xbf16>, vector<8x128xf32> -> vector<8x128xf32>
    %c3_53 = arith.constant 3 : index
    %c0_54 = arith.constant 0 : index
    %194 = vector.load %arg7[%c3_53, %c0_54] : memref<4x128xf32, #tpu.memory_space<vmem>>, vector<1x128xf32>
    %195 = vector.shape_cast %194 : vector<1x128xf32> to vector<128xf32>
    %196 = vector.shape_cast %195 : vector<128xf32> to vector<1x128xf32>
    %197 = vector.broadcast %196 : vector<1x128xf32> to vector<8x128xf32>
    %198 = arith.addf %193, %197 : vector<8x128xf32>
    %199 = vector.broadcast %12 : vector<8x1xf32> to vector<8x128xf32>
    %200 = arith.mulf %198, %199 : vector<8x128xf32>
    %201 = arith.addf %200, %7 : vector<8x128xf32>
    %c0_55 = arith.constant 0 : index
    %c0_56 = arith.constant 0 : index
    %202 = vector.load %arg10[%c0_55, %c0_56] : memref<3x128xf32, #tpu.memory_space<vmem>>, vector<1x128xf32>
    %203 = vector.shape_cast %202 : vector<1x128xf32> to vector<128xf32>
    %c0_57 = arith.constant 0 : index
    %c0_58 = arith.constant 0 : index
    %204 = vector.load %arg11[%c0_57, %c0_58] : memref<3x128xf32, #tpu.memory_space<vmem>>, vector<1x128xf32>
    %205 = vector.shape_cast %204 : vector<1x128xf32> to vector<128xf32>
    %cst_59 = arith.constant dense<0.000000e+00> : vector<8xf32>
    %206 = vector.multi_reduction <add>, %201, %cst_59 [1] : vector<8x128xf32> to vector<8xf32>
    %207 = vector.shape_cast %206 : vector<8xf32> to vector<8x1xf32>
    %cst_60 = arith.constant 1.280000e+02 : f32
    %208 = vector.broadcast %cst_60 : f32 to vector<8x1xf32>
    %209 = arith.divf %207, %208 : vector<8x1xf32>
    %210 = vector.broadcast %209 : vector<8x1xf32> to vector<8x128xf32>
    %211 = arith.subf %201, %210 : vector<8x128xf32>
    %212 = arith.mulf %211, %211 : vector<8x128xf32>
    %cst_61 = arith.constant dense<0.000000e+00> : vector<8xf32>
    %213 = vector.multi_reduction <add>, %212, %cst_61 [1] : vector<8x128xf32> to vector<8xf32>
    %214 = vector.shape_cast %213 : vector<8xf32> to vector<8x1xf32>
    %cst_62 = arith.constant 1.280000e+02 : f32
    %215 = vector.broadcast %cst_62 : f32 to vector<8x1xf32>
    %216 = arith.divf %214, %215 : vector<8x1xf32>
    %217 = vector.broadcast %209 : vector<8x1xf32> to vector<8x128xf32>
    %218 = arith.subf %201, %217 : vector<8x128xf32>
    %cst_63 = arith.constant 9.99999997E-7 : f32
    %219 = vector.broadcast %cst_63 : f32 to vector<8x1xf32>
    %220 = arith.addf %216, %219 : vector<8x1xf32>
    %221 = math.rsqrt %220 : vector<8x1xf32>
    %222 = vector.broadcast %221 : vector<8x1xf32> to vector<8x128xf32>
    %223 = arith.mulf %218, %222 : vector<8x128xf32>
    %224 = vector.shape_cast %203 : vector<128xf32> to vector<1x128xf32>
    %225 = vector.broadcast %224 : vector<1x128xf32> to vector<8x128xf32>
    %226 = arith.mulf %223, %225 : vector<8x128xf32>
    %227 = vector.shape_cast %205 : vector<128xf32> to vector<1x128xf32>
    %228 = vector.broadcast %227 : vector<1x128xf32> to vector<8x128xf32>
    %229 = arith.addf %226, %228 : vector<8x128xf32>
    %c0_64 = arith.constant 0 : index
    %c0_65 = arith.constant 0 : index
    %c0_66 = arith.constant 0 : index
    %230 = vector.load %arg8[%c0_64, %c0_65, %c0_66] : memref<4x128x128xbf16, #tpu.memory_space<vmem>>, vector<1x128x128xbf16>
    %231 = vector.shape_cast %230 : vector<1x128x128xbf16> to vector<128x128xbf16>
    %232 = arith.truncf %229 : vector<8x128xf32> to vector<8x128xbf16>
    %cst_67 = arith.constant dense<0.000000e+00> : vector<8x128xf32>
    %233 = tpu.matmul %232, %231, %cst_67 {dimension_numbers = #tpu.dot_dimension_numbers<[1], [0], [0], [1], [0, 0, 1, 1], [], []>} : vector<8x128xbf16>, vector<128x128xbf16>, vector<8x128xf32> -> vector<8x128xf32>
    %c0_68 = arith.constant 0 : index
    %c0_69 = arith.constant 0 : index
    %234 = vector.load %arg9[%c0_68, %c0_69] : memref<4x128xf32, #tpu.memory_space<vmem>>, vector<1x128xf32>
    %235 = vector.shape_cast %234 : vector<1x128xf32> to vector<128xf32>
    %236 = vector.shape_cast %235 : vector<128xf32> to vector<1x128xf32>
    %237 = vector.broadcast %236 : vector<1x128xf32> to vector<8x128xf32>
    %238 = arith.addf %233, %237 : vector<8x128xf32>
    %cst_70 = arith.constant 0.176776692 : f32
    %239 = vector.broadcast %cst_70 : f32 to vector<8x128xf32>
    %240 = arith.mulf %238, %239 : vector<8x128xf32>
    %241 = vector.extract_strided_slice %240 {offsets = [0, 0], sizes = [8, 32], strides = [1, 1]} : vector<8x128xf32> to vector<8x32xf32>
    %242 = vector.extract_strided_slice %240 {offsets = [0, 32], sizes = [8, 32], strides = [1, 1]} : vector<8x128xf32> to vector<8x32xf32>
    %243 = vector.extract_strided_slice %240 {offsets = [0, 64], sizes = [8, 32], strides = [1, 1]} : vector<8x128xf32> to vector<8x32xf32>
    %244 = vector.extract_strided_slice %240 {offsets = [0, 96], sizes = [8, 32], strides = [1, 1]} : vector<8x128xf32> to vector<8x32xf32>
    %245 = vector.shape_cast %241 : vector<8x32xf32> to vector<1x8x32xf32>
    %246 = vector.shape_cast %242 : vector<8x32xf32> to vector<1x8x32xf32>
    %247 = vector.shape_cast %243 : vector<8x32xf32> to vector<1x8x32xf32>
    %248 = vector.shape_cast %244 : vector<8x32xf32> to vector<1x8x32xf32>
    %249 = tpu.concatenate %245, %246, %247, %248 in 0 : vector<1x8x32xf32>, vector<1x8x32xf32>, vector<1x8x32xf32>, vector<1x8x32xf32> -> vector<4x8x32xf32>
    %250 = arith.truncf %249 : vector<4x8x32xf32> to vector<4x8x32xbf16>
    %c0_71 = arith.constant 0 : index
    %c0_72 = arith.constant 0 : index
    %c0_73 = arith.constant 0 : index
    %251 = vector.load %arg21[%c0_71, %c0_72, %c0_73] : memref<4x16x32xbf16, #tpu.memory_space<vmem>>, vector<4x16x32xbf16>
    "tpu.trace_start"() <{level = 10 : i32, message = "hqd,hkd->hqk"}> : () -> ()
    %cst_74 = arith.constant dense<0.000000e+00> : vector<4x8x16xf32>
    %252 = tpu.matmul %250, %251, %cst_74 {dimension_numbers = #tpu.dot_dimension_numbers<[2], [2], [1], [1], [0, 0, 0, 1, 1, 1], [0], [0]>} : vector<4x8x32xbf16>, vector<4x16x32xbf16>, vector<4x8x16xf32> -> vector<4x8x16xf32>
    %cst_75 = arith.constant -1.000000e+30 : f32
    "tpu.trace_stop"() : () -> ()
    %253 = vector.shape_cast %17 : vector<1x1x16xi1> to vector<1x1x16xi1>
    %254 = vector.broadcast %253 : vector<1x1x16xi1> to vector<4x8x16xi1>
    %255 = vector.broadcast %cst_75 : f32 to vector<4x8x16xf32>
    %256 = arith.select %254, %255, %252 : vector<4x8x16xi1>, vector<4x8x16xf32>
    %cst_76 = arith.constant dense<0xFF800000> : vector<4x8xf32>
    %257 = vector.multi_reduction <maximumf>, %256, %cst_76 [2] : vector<4x8x16xf32> to vector<4x8xf32>
    %258 = vector.shape_cast %257 : vector<4x8xf32> to vector<4x8x1xf32>
    %259 = vector.broadcast %258 : vector<4x8x1xf32> to vector<4x8x16xf32>
    %260 = arith.subf %256, %259 : vector<4x8x16xf32>
    %261 = math.exp %260 : vector<4x8x16xf32>
    %cst_77 = arith.constant dense<0.000000e+00> : vector<4x8xf32>
    %262 = vector.multi_reduction <add>, %261, %cst_77 [2] : vector<4x8x16xf32> to vector<4x8xf32>
    %263 = vector.shape_cast %262 : vector<4x8xf32> to vector<4x8x1xf32>
    %264 = tpu.reciprocal %263 {approx = true} : vector<4x8x1xf32> -> vector<4x8x1xf32>
    %265 = vector.broadcast %264 : vector<4x8x1xf32> to vector<4x8x16xf32>
    %266 = arith.mulf %261, %265 : vector<4x8x16xf32>
    %267 = arith.truncf %266 : vector<4x8x16xf32> to vector<4x8x16xbf16>
    %c0_78 = arith.constant 0 : index
    %c0_79 = arith.constant 0 : index
    %c0_80 = arith.constant 0 : index
    %268 = vector.load %arg22[%c0_78, %c0_79, %c0_80] : memref<4x16x32xbf16, #tpu.memory_space<vmem>>, vector<4x16x32xbf16>
    "tpu.trace_start"() <{level = 10 : i32, message = "hqk,hkd->hqd"}> : () -> ()
    %cst_81 = arith.constant dense<0.000000e+00> : vector<4x8x32xf32>
    %269 = tpu.matmul %267, %268, %cst_81 {dimension_numbers = #tpu.dot_dimension_numbers<[2], [1], [1], [2], [0, 0, 0, 1, 1, 2], [0], [0]>} : vector<4x8x16xbf16>, vector<4x16x32xbf16>, vector<4x8x32xf32> -> vector<4x8x32xf32>
    "tpu.trace_stop"() : () -> ()
    %270 = vector.extract_strided_slice %269 {offsets = [0, 0, 0], sizes = [1, 8, 32], strides = [1, 1, 1]} : vector<4x8x32xf32> to vector<1x8x32xf32>
    %271 = vector.shape_cast %270 : vector<1x8x32xf32> to vector<8x32xf32>
    %272 = vector.extract_strided_slice %269 {offsets = [1, 0, 0], sizes = [1, 8, 32], strides = [1, 1, 1]} : vector<4x8x32xf32> to vector<1x8x32xf32>
    %273 = vector.shape_cast %272 : vector<1x8x32xf32> to vector<8x32xf32>
    %274 = vector.extract_strided_slice %269 {offsets = [2, 0, 0], sizes = [1, 8, 32], strides = [1, 1, 1]} : vector<4x8x32xf32> to vector<1x8x32xf32>
    %275 = vector.shape_cast %274 : vector<1x8x32xf32> to vector<8x32xf32>
    %276 = vector.extract_strided_slice %269 {offsets = [3, 0, 0], sizes = [1, 8, 32], strides = [1, 1, 1]} : vector<4x8x32xf32> to vector<1x8x32xf32>
    %277 = vector.shape_cast %276 : vector<1x8x32xf32> to vector<8x32xf32>
    %278 = tpu.concatenate %271, %273, %275, %277 in 1 : vector<8x32xf32>, vector<8x32xf32>, vector<8x32xf32>, vector<8x32xf32> -> vector<8x128xf32>
    %c3_82 = arith.constant 3 : index
    %c0_83 = arith.constant 0 : index
    %c0_84 = arith.constant 0 : index
    %279 = vector.load %arg8[%c3_82, %c0_83, %c0_84] : memref<4x128x128xbf16, #tpu.memory_space<vmem>>, vector<1x128x128xbf16>
    %280 = vector.shape_cast %279 : vector<1x128x128xbf16> to vector<128x128xbf16>
    %281 = arith.truncf %278 : vector<8x128xf32> to vector<8x128xbf16>
    %cst_85 = arith.constant dense<0.000000e+00> : vector<8x128xf32>
    %282 = tpu.matmul %281, %280, %cst_85 {dimension_numbers = #tpu.dot_dimension_numbers<[1], [0], [0], [1], [0, 0, 1, 1], [], []>} : vector<8x128xbf16>, vector<128x128xbf16>, vector<8x128xf32> -> vector<8x128xf32>
    %c3_86 = arith.constant 3 : index
    %c0_87 = arith.constant 0 : index
    %283 = vector.load %arg9[%c3_86, %c0_87] : memref<4x128xf32, #tpu.memory_space<vmem>>, vector<1x128xf32>
    %284 = vector.shape_cast %283 : vector<1x128xf32> to vector<128xf32>
    %285 = vector.shape_cast %284 : vector<128xf32> to vector<1x128xf32>
    %286 = vector.broadcast %285 : vector<1x128xf32> to vector<8x128xf32>
    %287 = arith.addf %282, %286 : vector<8x128xf32>
    %288 = vector.broadcast %12 : vector<8x1xf32> to vector<8x128xf32>
    %289 = arith.mulf %287, %288 : vector<8x128xf32>
    %290 = arith.addf %289, %229 : vector<8x128xf32>
    %c1 = arith.constant 1 : index
    %c0_88 = arith.constant 0 : index
    %291 = vector.load %arg10[%c1, %c0_88] : memref<3x128xf32, #tpu.memory_space<vmem>>, vector<1x128xf32>
    %292 = vector.shape_cast %291 : vector<1x128xf32> to vector<128xf32>
    %c1_89 = arith.constant 1 : index
    %c0_90 = arith.constant 0 : index
    %293 = vector.load %arg11[%c1_89, %c0_90] : memref<3x128xf32, #tpu.memory_space<vmem>>, vector<1x128xf32>
    %294 = vector.shape_cast %293 : vector<1x128xf32> to vector<128xf32>
    %cst_91 = arith.constant dense<0.000000e+00> : vector<8xf32>
    %295 = vector.multi_reduction <add>, %290, %cst_91 [1] : vector<8x128xf32> to vector<8xf32>
    %296 = vector.shape_cast %295 : vector<8xf32> to vector<8x1xf32>
    %cst_92 = arith.constant 1.280000e+02 : f32
    %297 = vector.broadcast %cst_92 : f32 to vector<8x1xf32>
    %298 = arith.divf %296, %297 : vector<8x1xf32>
    %299 = vector.broadcast %298 : vector<8x1xf32> to vector<8x128xf32>
    %300 = arith.subf %290, %299 : vector<8x128xf32>
    %301 = arith.mulf %300, %300 : vector<8x128xf32>
    %cst_93 = arith.constant dense<0.000000e+00> : vector<8xf32>
    %302 = vector.multi_reduction <add>, %301, %cst_93 [1] : vector<8x128xf32> to vector<8xf32>
    %303 = vector.shape_cast %302 : vector<8xf32> to vector<8x1xf32>
    %cst_94 = arith.constant 1.280000e+02 : f32
    %304 = vector.broadcast %cst_94 : f32 to vector<8x1xf32>
    %305 = arith.divf %303, %304 : vector<8x1xf32>
    %306 = vector.broadcast %298 : vector<8x1xf32> to vector<8x128xf32>
    %307 = arith.subf %290, %306 : vector<8x128xf32>
    %cst_95 = arith.constant 9.99999997E-7 : f32
    %308 = vector.broadcast %cst_95 : f32 to vector<8x1xf32>
    %309 = arith.addf %305, %308 : vector<8x1xf32>
    %310 = math.rsqrt %309 : vector<8x1xf32>
    %311 = vector.broadcast %310 : vector<8x1xf32> to vector<8x128xf32>
    %312 = arith.mulf %307, %311 : vector<8x128xf32>
    %313 = vector.shape_cast %292 : vector<128xf32> to vector<1x128xf32>
    %314 = vector.broadcast %313 : vector<1x128xf32> to vector<8x128xf32>
    %315 = arith.mulf %312, %314 : vector<8x128xf32>
    %316 = vector.shape_cast %294 : vector<128xf32> to vector<1x128xf32>
    %317 = vector.broadcast %316 : vector<1x128xf32> to vector<8x128xf32>
    %318 = arith.addf %315, %317 : vector<8x128xf32>
    %c0_96 = arith.constant 0 : index
    %c0_97 = arith.constant 0 : index
    %319 = vector.load %arg14[%c0_96, %c0_97] : memref<128x256xbf16, #tpu.memory_space<vmem>>, vector<128x256xbf16>
    %320 = arith.truncf %318 : vector<8x128xf32> to vector<8x128xbf16>
    %cst_98 = arith.constant dense<0.000000e+00> : vector<8x256xf32>
    %321 = tpu.matmul %320, %319, %cst_98 {dimension_numbers = #tpu.dot_dimension_numbers<[1], [0], [0], [1], [0, 0, 1, 1], [], []>} : vector<8x128xbf16>, vector<128x256xbf16>, vector<8x256xf32> -> vector<8x256xf32>
    %c0_99 = arith.constant 0 : index
    %c0_100 = arith.constant 0 : index
    %322 = vector.load %arg15[%c0_99, %c0_100] : memref<1x256xf32, #tpu.memory_space<vmem>>, vector<1x256xf32>
    %323 = vector.shape_cast %322 : vector<1x256xf32> to vector<256xf32>
    %324 = vector.shape_cast %323 : vector<256xf32> to vector<1x256xf32>
    %325 = vector.broadcast %324 : vector<1x256xf32> to vector<8x256xf32>
    %326 = arith.addf %321, %325 : vector<8x256xf32>
    %cst_101 = arith.constant 0.000000e+00 : f32
    %327 = vector.broadcast %cst_101 : f32 to vector<8x256xf32>
    %328 = arith.maximumf %326, %327 : vector<8x256xf32>
    %c0_102 = arith.constant 0 : index
    %c0_103 = arith.constant 0 : index
    %329 = vector.load %arg16[%c0_102, %c0_103] : memref<256x128xbf16, #tpu.memory_space<vmem>>, vector<256x128xbf16>
    %330 = arith.truncf %328 : vector<8x256xf32> to vector<8x256xbf16>
    %cst_104 = arith.constant dense<0.000000e+00> : vector<8x128xf32>
    %331 = tpu.matmul %330, %329, %cst_104 {dimension_numbers = #tpu.dot_dimension_numbers<[1], [0], [0], [1], [0, 0, 1, 1], [], []>} : vector<8x256xbf16>, vector<256x128xbf16>, vector<8x128xf32> -> vector<8x128xf32>
    %c0_105 = arith.constant 0 : index
    %c0_106 = arith.constant 0 : index
    %332 = vector.load %arg17[%c0_105, %c0_106] : memref<1x128xf32, #tpu.memory_space<vmem>>, vector<1x128xf32>
    %333 = vector.shape_cast %332 : vector<1x128xf32> to vector<128xf32>
    %334 = vector.shape_cast %333 : vector<128xf32> to vector<1x128xf32>
    %335 = vector.broadcast %334 : vector<1x128xf32> to vector<8x128xf32>
    %336 = arith.addf %331, %335 : vector<8x128xf32>
    %337 = vector.broadcast %12 : vector<8x1xf32> to vector<8x128xf32>
    %338 = arith.mulf %336, %337 : vector<8x128xf32>
    %339 = arith.addf %338, %318 : vector<8x128xf32>
    %c2 = arith.constant 2 : index
    %c0_107 = arith.constant 0 : index
    %340 = vector.load %arg10[%c2, %c0_107] : memref<3x128xf32, #tpu.memory_space<vmem>>, vector<1x128xf32>
    %341 = vector.shape_cast %340 : vector<1x128xf32> to vector<128xf32>
    %c2_108 = arith.constant 2 : index
    %c0_109 = arith.constant 0 : index
    %342 = vector.load %arg11[%c2_108, %c0_109] : memref<3x128xf32, #tpu.memory_space<vmem>>, vector<1x128xf32>
    %343 = vector.shape_cast %342 : vector<1x128xf32> to vector<128xf32>
    %cst_110 = arith.constant dense<0.000000e+00> : vector<8xf32>
    %344 = vector.multi_reduction <add>, %339, %cst_110 [1] : vector<8x128xf32> to vector<8xf32>
    %345 = vector.shape_cast %344 : vector<8xf32> to vector<8x1xf32>
    %cst_111 = arith.constant 1.280000e+02 : f32
    %346 = vector.broadcast %cst_111 : f32 to vector<8x1xf32>
    %347 = arith.divf %345, %346 : vector<8x1xf32>
    %348 = vector.broadcast %347 : vector<8x1xf32> to vector<8x128xf32>
    %349 = arith.subf %339, %348 : vector<8x128xf32>
    %350 = arith.mulf %349, %349 : vector<8x128xf32>
    %cst_112 = arith.constant dense<0.000000e+00> : vector<8xf32>
    %351 = vector.multi_reduction <add>, %350, %cst_112 [1] : vector<8x128xf32> to vector<8xf32>
    %352 = vector.shape_cast %351 : vector<8xf32> to vector<8x1xf32>
    %cst_113 = arith.constant 1.280000e+02 : f32
    %353 = vector.broadcast %cst_113 : f32 to vector<8x1xf32>
    %354 = arith.divf %352, %353 : vector<8x1xf32>
    %355 = vector.broadcast %347 : vector<8x1xf32> to vector<8x128xf32>
    %356 = arith.subf %339, %355 : vector<8x128xf32>
    %cst_114 = arith.constant 9.99999997E-7 : f32
    %357 = vector.broadcast %cst_114 : f32 to vector<8x1xf32>
    %358 = arith.addf %354, %357 : vector<8x1xf32>
    %359 = math.rsqrt %358 : vector<8x1xf32>
    %360 = vector.broadcast %359 : vector<8x1xf32> to vector<8x128xf32>
    %361 = arith.mulf %356, %360 : vector<8x128xf32>
    %362 = vector.shape_cast %341 : vector<128xf32> to vector<1x128xf32>
    %363 = vector.broadcast %362 : vector<1x128xf32> to vector<8x128xf32>
    %364 = arith.mulf %361, %363 : vector<8x128xf32>
    %365 = vector.shape_cast %343 : vector<128xf32> to vector<1x128xf32>
    %366 = vector.broadcast %365 : vector<1x128xf32> to vector<8x128xf32>
    %367 = arith.addf %364, %366 : vector<8x128xf32>
    %c0_115 = arith.constant 0 : index
    %c0_116 = arith.constant 0 : index
    %c0_117 = arith.constant 0 : index
    %368 = vector.load %arg18[%c0_115, %c0_116, %c0_117] : memref<1x8x128xf32, #tpu.memory_space<vmem>>, vector<1x8x128xf32>
    %369 = vector.shape_cast %368 : vector<1x8x128xf32> to vector<8x128xf32>
    %370 = vector.shape_cast %367 : vector<8x128xf32> to vector<1x8x128xf32>
    tpu.vector_store %arg18[%c0_115, %c0_116, %c0_117], %370 {strides = array<i32>} : memref<1x8x128xf32, #tpu.memory_space<vmem>>, vector<1x8x128xf32>,
    return
  }
  func.func @transform_0(%arg0: i32, %arg1: i32) -> (i32, i32, i32) {
    %c0_i32 = arith.constant 0 : i32
    %c0_i32_0 = arith.constant 0 : i32
    %c0_i32_1 = arith.constant 0 : i32
    return %arg0, %c0_i32, %c0_i32_0 : i32, i32, i32
  }
  func.func @transform_1(%arg0: i32, %arg1: i32) -> (i32, i32, i32) {
    %c0_i32 = arith.constant 0 : i32
    %c0_i32_0 = arith.constant 0 : i32
    %c0_i32_1 = arith.constant 0 : i32
    return %arg0, %c0_i32, %c0_i32_0 : i32, i32, i32
  }
  func.func @transform_2(%arg0: i32, %arg1: i32) -> (i32, i32, i32) {
    %c0_i32 = arith.constant 0 : i32
    %c0_i32_0 = arith.constant 0 : i32
    %c0_i32_1 = arith.constant 0 : i32
    return %arg0, %c0_i32, %c0_i32_0 : i32, i32, i32
  }
  func.func @transform_3(%arg0: i32, %arg1: i32) -> (i32, i32, i32) {
    %c0_i32 = arith.constant 0 : i32
    %c0_i32_0 = arith.constant 0 : i32
    %c0_i32_1 = arith.constant 0 : i32
    return %arg0, %c0_i32, %c0_i32_0 : i32, i32, i32
  }
  func.func @transform_4(%arg0: i32, %arg1: i32) -> (i32, i32, i32) {
    %c0_i32 = arith.constant 0 : i32
    %c0_i32_0 = arith.constant 0 : i32
    %c0_i32_1 = arith.constant 0 : i32
    %c0_i32_2 = arith.constant 0 : i32
    return %c0_i32, %c0_i32_0, %c0_i32_1 : i32, i32, i32
  }
  func.func @transform_5(%arg0: i32, %arg1: i32) -> (i32, i32) {
    %c0_i32 = arith.constant 0 : i32
    %c0_i32_0 = arith.constant 0 : i32
    %c0_i32_1 = arith.constant 0 : i32
    return %c0_i32, %c0_i32_0 : i32, i32
  }
  func.func @transform_6(%arg0: i32, %arg1: i32) -> (i32, i32, i32) {
    %c0_i32 = arith.constant 0 : i32
    %c0_i32_0 = arith.constant 0 : i32
    %c0_i32_1 = arith.constant 0 : i32
    %c0_i32_2 = arith.constant 0 : i32
    return %c0_i32, %c0_i32_0, %c0_i32_1 : i32, i32, i32
  }
  func.func @transform_7(%arg0: i32, %arg1: i32) -> (i32, i32) {
    %c0_i32 = arith.constant 0 : i32
    %c0_i32_0 = arith.constant 0 : i32
    %c0_i32_1 = arith.constant 0 : i32
    return %c0_i32, %c0_i32_0 : i32, i32
  }
  func.func @transform_8(%arg0: i32, %arg1: i32) -> (i32, i32) {
    %c0_i32 = arith.constant 0 : i32
    %c0_i32_0 = arith.constant 0 : i32
    %c0_i32_1 = arith.constant 0 : i32
    return %c0_i32, %c0_i32_0 : i32, i32
  }
  func.func @transform_9(%arg0: i32, %arg1: i32) -> (i32, i32) {
    %c0_i32 = arith.constant 0 : i32
    %c0_i32_0 = arith.constant 0 : i32
    %c0_i32_1 = arith.constant 0 : i32
    return %c0_i32, %c0_i32_0 : i32, i32
  }
  func.func @transform_10(%arg0: i32, %arg1: i32) -> (i32, i32) {
    %c0_i32 = arith.constant 0 : i32
    %c0_i32_0 = arith.constant 0 : i32
    %c0_i32_1 = arith.constant 0 : i32
    return %c0_i32, %c0_i32_0 : i32, i32
  }
  func.func @transform_11(%arg0: i32, %arg1: i32) -> (i32, i32) {
    %c0_i32 = arith.constant 0 : i32
    %c0_i32_0 = arith.constant 0 : i32
    %c0_i32_1 = arith.constant 0 : i32
    return %c0_i32, %c0_i32_0 : i32, i32
  }
  func.func @transform_12(%arg0: i32, %arg1: i32) -> (i32, i32) {
    %c0_i32 = arith.constant 0 : i32
    %c0_i32_0 = arith.constant 0 : i32
    %c0_i32_1 = arith.constant 0 : i32
    return %c0_i32, %c0_i32_0 : i32, i32
  }
  func.func @transform_13(%arg0: i32, %arg1: i32) -> (i32, i32) {
    %c0_i32 = arith.constant 0 : i32
    %c0_i32_0 = arith.constant 0 : i32
    %c0_i32_1 = arith.constant 0 : i32
    return %c0_i32, %c0_i32_0 : i32, i32
  }
  func.func @transform_14(%arg0: i32, %arg1: i32) -> (i32, i32) {
    %c0_i32 = arith.constant 0 : i32
    %c0_i32_0 = arith.constant 0 : i32
    %c0_i32_1 = arith.constant 0 : i32
    return %c0_i32, %c0_i32_0 : i32, i32
  }
  func.func @transform_15(%arg0: i32, %arg1: i32) -> (i32, i32) {
    %c0_i32 = arith.constant 0 : i32
    %c0_i32_0 = arith.constant 0 : i32
    %c0_i32_1 = arith.constant 0 : i32
    return %c0_i32, %c0_i32_0 : i32, i32
  }
  func.func @transform_16(%arg0: i32, %arg1: i32) -> (i32, i32, i32) {
    %c0_i32 = arith.constant 0 : i32
    %c0_i32_0 = arith.constant 0 : i32
    return %arg0, %arg1, %c0_i32 : i32, i32, i32
  }
}

</mosaic_0001>

<llo_original>
// kernel: tpu_custom_call.1
$region0: #{tpu_custom_call.1}
  #allocation0 [shape = 'u32[]', space=smem, size = 0x4, offset = 0x4, fixed_abs, tag = 'smem constant byte address 0x4 - core index']
  #allocation1 [shape = 'u32[72,128]{1,0:T(1,128)}', space=vmem, size = 0x9000, scoped, tag = 'internal scratch']
  #allocation2 [shape = 'bf16[4,16,32]{2,1,0:T(8,128)(2,1)}', space=vmem, size = 0x4000, scoped, tag = 'scratch operand']
  #allocation3 [shape = 'bf16[4,16,32]{2,1,0:T(8,128)(2,1)}', space=vmem, size = 0x4000, scoped, tag = 'scratch operand']
  #allocation4 [shape = 'bf16[4,16,32]{2,1,0:T(8,128)(2,1)}', space=vmem, size = 0x4000, scoped, tag = 'scratch operand']
  #allocation5 [shape = 'bf16[4,16,32]{2,1,0:T(8,128)(2,1)}', space=vmem, size = 0x4000, scoped, tag = 'scratch operand']
  %s0 = inlined_call_operand.vmem [shape: f32[2,16,128], index: 0, kind: input, shape index: {}]
  %s1 = inlined_call_operand.hbm [shape: f32[2,16,128], index: 1, kind: input, shape index: {}]
  %s2 = inlined_call_operand.vmem [shape: f32[2,16,1], index: 2, kind: input, shape index: {}]
  %s3 = inlined_call_operand.hbm [shape: f32[2,1,16], index: 3, kind: input, shape index: {}]
  %s4 = inlined_call_operand.hbm [shape: bf16[4,128,128], index: 4, kind: input, shape index: {}]
  %s5 = inlined_call_operand.vmem [shape: f32[4,128], index: 5, kind: input, shape index: {}]
  %s6 = inlined_call_operand.hbm [shape: bf16[4,128,128], index: 6, kind: input, shape index: {}]
  %s7 = inlined_call_operand.vmem [shape: f32[4,128], index: 7, kind: input, shape index: {}]
  %s8 = inlined_call_operand.hbm [shape: f32[3,128], index: 8, kind: input, shape index: {}]
  %s9 = inlined_call_operand.hbm [shape: f32[3,128], index: 9, kind: input, shape index: {}]
  %s10 = inlined_call_operand.hbm [shape: f32[9,32], index: 10, kind: input, shape index: {}]
  %s11 = inlined_call_operand.hbm [shape: f32[9,32], index: 11, kind: input, shape index: {}]
  %s12 = inlined_call_operand.hbm [shape: bf16[128,256], index: 12, kind: input, shape index: {}]
  %s13 = inlined_call_operand.vmem [shape: f32[1,256], index: 13, kind: input, shape index: {}]
  %s14 = inlined_call_operand.hbm [shape: bf16[256,128], index: 14, kind: input, shape index: {}]
  %s15 = inlined_call_operand.vmem [shape: f32[1,128], index: 15, kind: input, shape index: {}]
  %s16 = inlined_call_operand.hbm [shape: f32[2,16,128], index: 16, kind: output, shape index: {}]
  %s17 = sld [smem:[#allocation0]]
  $region141: #{tpu_custom_call.1} parent=0
    _
  %s19 = ssub.s32 1, %s17
  %s20 = scalar_select 0, %s19, %s17
  $region1: #{tpu_custom_call.1} parent=0
    #allocation6 [shape = 'u8[16384]{0}', space=vmem, size = 0x4000, scoped, tag = 'input window, operand 1']
    #allocation7 [shape = 's32[2]{0}', space=sflag, size = 0x8, scoped, tag = 'scoped memory for tpu_custom_call.1']
    #allocation8 [shape = 's32[2]{0}', space=sflag, size = 0x8, scoped, tag = 'scoped memory for tpu_custom_call.1']
    #allocation9 [shape = 'u8[1024]{0}', space=vmem, size = 0x400, scoped, tag = 'input window, operand 3']
    #allocation10 [shape = 's32[2]{0}', space=sflag, size = 0x8, scoped, tag = 'scoped memory for tpu_custom_call.1']
    #allocation11 [shape = 'u8[131072]{0}', space=vmem, size = 0x20000, scoped, tag = 'input window, operand 4, single buffered']
    #allocation12 [shape = 'u8[131072]{0}', space=vmem, size = 0x20000, scoped, tag = 'input window, operand 6, single buffered']
    #allocation13 [shape = 's32[1]{0}', space=sflag, size = 0x4, scoped, tag = 'scoped memory for tpu_custom_call.1']
    #allocation14 [shape = 'u8[2048]{0}', space=vmem, size = 0x800, scoped, tag = 'input window, operand 8, single buffered']
    #allocation15 [shape = 'u8[2048]{0}', space=vmem, size = 0x800, scoped, tag = 'input window, operand 9, single buffered']
    #allocation16 [shape = 's32[1]{0}', space=sflag, size = 0x4, scoped, tag = 'scoped memory for tpu_custom_call.1']
    #allocation17 [shape = 'u8[8192]{0}', space=vmem, size = 0x2000, scoped, tag = 'input window, operand 10, single buffered']
    #allocation18 [shape = 'u8[8192]{0}', space=vmem, size = 0x2000, scoped, tag = 'input window, operand 11, single buffered']
    #allocation19 [shape = 's32[1]{0}', space=sflag, size = 0x4, scoped, tag = 'scoped memory for tpu_custom_call.1']
    #allocation20 [shape = 'u8[65536]{0}', space=vmem, size = 0x10000, scoped, tag = 'input window, operand 12, single buffered']
    #allocation21 [shape = 'u8[65536]{0}', space=vmem, size = 0x10000, scoped, tag = 'input window, operand 14, single buffered']
    #allocation22 [shape = 's32[1]{0}', space=sflag, size = 0x4, scoped, tag = 'scoped memory for tpu_custom_call.1']
    #allocation23 [shape = 'u8[8192]{0}', space=vmem, size = 0x2000, scoped, tag = 'output window, operand 0']
    %21 = vsyncpa [#allocation7], 0
    %s22 = scalar_lea.sflag [#allocation7], 1
    %23 = vsyncpa %s22, 0
    %24 = vsyncpa [#allocation10], 0
    %s25 = scalar_lea.sflag [#allocation10], 1
    %26 = vsyncpa %s25, 0
    %27 = vsyncpa [#allocation13], 0
    %28 = vsyncpa [#allocation16], 0
    %29 = vsyncpa [#allocation19], 0
    %30 = vsyncpa [#allocation22], 0
    %31 = vsyncpa [#allocation8], 0
    %s32 = scalar_lea.sflag [#allocation8], 1
    %33 = vsyncpa %s32, 0
    loop: start=0, step=1, limit=6
    $region2: #{tpu_custom_call.1} parent=1 // loop_pre_header
      _
    $region3: #{tpu_custom_call.1} parent=1 // loop_header
      %s35 = sphi 0, %s39
      %p36 = scmp.ge.s32.totalorder %s35, 6
      %s42 = sphi 0, %s54
      %s43 = sphi 0, %s50
      %s44 = sphi 0, %s42
      %s45 = sphi 0, %s43
      %s46 = sphi 0, %s44
      %s47 = sphi 0, %s45
      %s57 = sphi 0, %s59
      %s60 = sphi 0, %s57
      %s61 = sphi 0, %s60
      %s77 = sphi 0, %s61
      %s83 = sphi 0, %s85
      %s86 = sphi 0, %s83
      %s87 = sphi 0, %s86
      %s103 = sphi 0, %s87
      %s109 = sphi 0, %s111
      %s112 = sphi 0, %s109
      %s113 = sphi 0, %s112
      %s129 = sphi 0, %s113
      %s135 = sphi 0, %s137
      %s138 = sphi 0, %s135
      %s139 = sphi 0, %s138
      %s155 = sphi 0, %s139
      %s159 = sphi 0, %s159
      %s161 = sphi 0, %s159
      %s162 = sphi 0, %s161
      %s176 = sphi 0, %s162
      %s180 = sphi 0, %s180
      %s182 = sphi 0, %s180
      %s183 = sphi 0, %s182
      %s197 = sphi 0, %s183
      %s201 = sphi 0, %s201
      %s203 = sphi 0, %s201
      %s204 = sphi 0, %s203
      %s218 = sphi 0, %s204
      %s222 = sphi 0, %s222
      %s224 = sphi 0, %s222
      %s225 = sphi 0, %s224
      %s239 = sphi 0, %s225
      %s243 = sphi 0, %s243
      %s245 = sphi 0, %s243
      %s246 = sphi 0, %s245
      %s260 = sphi 0, %s246
      %s264 = sphi 0, %s264
      %s266 = sphi 0, %s264
      %s267 = sphi 0, %s266
      %s281 = sphi 0, %s267
      %s285 = sphi 0, %s285
      %s287 = sphi 0, %s285
      %s288 = sphi 0, %s287
      %s302 = sphi 0, %s288
      %s306 = sphi 0, %s306
      %s308 = sphi 0, %s306
      %s309 = sphi 0, %s308
      %s323 = sphi 0, %s309
      %s327 = sphi 0, %s327
      %s329 = sphi 0, %s327
      %s330 = sphi 0, %s329
      %s344 = sphi 0, %s330
      %s348 = sphi 0, %s348
      %s350 = sphi 0, %s348
      %s351 = sphi 0, %s350
      %s365 = sphi 0, %s351
      %s369 = sphi 0, %s369
      %s371 = sphi 0, %s369
      %s372 = sphi 0, %s371
      %s386 = sphi 0, %s372
      %s390 = sphi 0, %s390
      %s392 = sphi 0, %s390
      %s393 = sphi 0, %s392
      %s407 = sphi 0, %s393
      %s415 = sphi 0, %s417
      %s418 = sphi 0, %s415
      %s419 = sphi 0, %s418
      %s435 = sphi 0, %s419
    $region4: #{tpu_custom_call.1} parent=1 // loop_header_branch
      %38 = sbr.rel (%p36) target = $region8
    $region5: #{tpu_custom_call.1} parent=1 // loop_body
      %s40 = ssub.s32 %s35, 1
      %s41 = ssub.s32 %s35, 2
      %s48 = sadd.s32 1, %s43
      %p49 = scmp.ge.s32.totalorder %s48, 2
      %s50 = scalar_select %p49, 0, %s48
      %s51 = sadd.s32 1, %s42
      %s52 = scalar_select %p49, %s51, %s42
      %p53 = scmp.ge.s32.totalorder %s52, 2
      %s54 = scalar_select %p53, 0, %s52
      %s55 = ssub.s32 %s42, %s54
      %p56 = scmp.eq.s32.totalorder %s55, 0
      %s58 = sadd.s32 %s57, 1
      %s59 = scalar_select %p56, %s57, %s58
      %p62 = pneg %p56
      %p63 = scmp.eq.s32.totalorder %s35, 3
      %p64 = por %p62, %p63
      %p65 = scmp.ne.s32.totalorder %s57, %s60
      %p66 = scmp.eq.s32.totalorder %s35, 0
      %p67 = por %p65, %p66
      %p68 = scmp.ne.s32.totalorder %s57, %s60
      %p69 = scmp.eq.s32.totalorder %s40, 3
      %p70 = por %p68, %p69
      %p71 = scmp.ne.s32.totalorder %s60, %s61
      %p72 = scmp.eq.s32.totalorder %s40, 0
      %p73 = por %p71, %p72
      %p74 = scmp.ne.s32.totalorder %s60, %s61
      %p75 = scmp.eq.s32.totalorder %s41, 3
      %p76 = por %p74, %p75
      %p78 = scmp.ne.s32.totalorder %s61, %s77
      %p79 = scmp.eq.s32.totalorder %s41, 0
      %p80 = por %p78, %p79
      %s81 = ssub.s32 %s42, %s54
      %p82 = scmp.eq.s32.totalorder %s81, 0
      %s84 = sadd.s32 %s83, 1
      %s85 = scalar_select %p82, %s83, %s84
      %p88 = pneg %p82
      %p89 = scmp.eq.s32.totalorder %s35, 3
      %p90 = por %p88, %p89
      %p91 = scmp.ne.s32.totalorder %s83, %s86
      %p92 = scmp.eq.s32.totalorder %s35, 0
      %p93 = por %p91, %p92
      %p94 = scmp.ne.s32.totalorder %s83, %s86
      %p95 = scmp.eq.s32.totalorder %s40, 3
      %p96 = por %p94, %p95
      %p97 = scmp.ne.s32.totalorder %s86, %s87
      %p98 = scmp.eq.s32.totalorder %s40, 0
      %p99 = por %p97, %p98
      %p100 = scmp.ne.s32.totalorder %s86, %s87
      %p101 = scmp.eq.s32.totalorder %s41, 3
      %p102 = por %p100, %p101
      %p104 = scmp.ne.s32.totalorder %s87, %s103
      %p105 = scmp.eq.s32.totalorder %s41, 0
      %p106 = por %p104, %p105
      %s107 = ssub.s32 %s42, %s54
      %p108 = scmp.eq.s32.totalorder %s107, 0
      %s110 = sadd.s32 %s109, 1
      %s111 = scalar_select %p108, %s109, %s110
      %p114 = pneg %p108
      %p115 = scmp.eq.s32.totalorder %s35, 3
      %p116 = por %p114, %p115
      %p117 = scmp.ne.s32.totalorder %s109, %s112
      %p118 = scmp.eq.s32.totalorder %s35, 0
      %p119 = por %p117, %p118
      %p120 = scmp.ne.s32.totalorder %s109, %s112
      %p121 = scmp.eq.s32.totalorder %s40, 3
      %p122 = por %p120, %p121
      %p123 = scmp.ne.s32.totalorder %s112, %s113
      %p124 = scmp.eq.s32.totalorder %s40, 0
      %p125 = por %p123, %p124
      %p126 = scmp.ne.s32.totalorder %s112, %s113
      %p127 = scmp.eq.s32.totalorder %s41, 3
      %p128 = por %p126, %p127
      %p130 = scmp.ne.s32.totalorder %s113, %s129
      %p131 = scmp.eq.s32.totalorder %s41, 0
      %p132 = por %p130, %p131
      %s133 = ssub.s32 %s42, %s54
      %p134 = scmp.eq.s32.totalorder %s133, 0
      %s136 = sadd.s32 %s135, 1
      %s137 = scalar_select %p134, %s135, %s136
      %p140 = pneg %p134
      %p141 = scmp.eq.s32.totalorder %s35, 3
      %p142 = por %p140, %p141
      %p143 = scmp.ne.s32.totalorder %s135, %s138
      %p144 = scmp.eq.s32.totalorder %s35, 0
      %p145 = por %p143, %p144
      %p146 = scmp.ne.s32.totalorder %s135, %s138
      %p147 = scmp.eq.s32.totalorder %s40, 3
      %p148 = por %p146, %p147
      %p149 = scmp.ne.s32.totalorder %s138, %s139
      %p150 = scmp.eq.s32.totalorder %s40, 0
      %p151 = por %p149, %p150
      %p152 = scmp.ne.s32.totalorder %s138, %s139
      %p153 = scmp.eq.s32.totalorder %s41, 3
      %p154 = por %p152, %p153
      %p156 = scmp.ne.s32.totalorder %s139, %s155
      %p157 = scmp.eq.s32.totalorder %s41, 0
      %p158 = por %p156, %p157
      %s160 = sadd.s32 %s159, 1
      %p163 = scmp.eq.s32.totalorder %s35, 3
      %p164 = scmp.ne.s32.totalorder %s159, %s161
      %p165 = scmp.eq.s32.totalorder %s35, 0
      %p166 = por %p164, %p165
      %p167 = scmp.ne.s32.totalorder %s159, %s161
      %p168 = scmp.eq.s32.totalorder %s40, 3
      %p169 = por %p167, %p168
      %p170 = scmp.ne.s32.totalorder %s161, %s162
      %p171 = scmp.eq.s32.totalorder %s40, 0
      %p172 = por %p170, %p171
      %p173 = scmp.ne.s32.totalorder %s161, %s162
      %p174 = scmp.eq.s32.totalorder %s41, 3
      %p175 = por %p173, %p174
      %p177 = scmp.ne.s32.totalorder %s162, %s176
      %p178 = scmp.eq.s32.totalorder %s41, 0
      %p179 = por %p177, %p178
      %s181 = sadd.s32 %s180, 1
      %p184 = scmp.eq.s32.totalorder %s35, 3
      %p185 = scmp.ne.s32.totalorder %s180, %s182
      %p186 = scmp.eq.s32.totalorder %s35, 0
      %p187 = por %p185, %p186
      %p188 = scmp.ne.s32.totalorder %s180, %s182
      %p189 = scmp.eq.s32.totalorder %s40, 3
      %p190 = por %p188, %p189
      %p191 = scmp.ne.s32.totalorder %s182, %s183
      %p192 = scmp.eq.s32.totalorder %s40, 0
      %p193 = por %p191, %p192
      %p194 = scmp.ne.s32.totalorder %s182, %s183
      %p195 = scmp.eq.s32.totalorder %s41, 3
      %p196 = por %p194, %p195
      %p198 = scmp.ne.s32.totalorder %s183, %s197
      %p199 = scmp.eq.s32.totalorder %s41, 0
      %p200 = por %p198, %p199
      %s202 = sadd.s32 %s201, 1
      %p205 = scmp.eq.s32.totalorder %s35, 3
      %p206 = scmp.ne.s32.totalorder %s201, %s203
      %p207 = scmp.eq.s32.totalorder %s35, 0
      %p208 = por %p206, %p207
      %p209 = scmp.ne.s32.totalorder %s201, %s203
      %p210 = scmp.eq.s32.totalorder %s40, 3
      %p211 = por %p209, %p210
      %p212 = scmp.ne.s32.totalorder %s203, %s204
      %p213 = scmp.eq.s32.totalorder %s40, 0
      %p214 = por %p212, %p213
      %p215 = scmp.ne.s32.totalorder %s203, %s204
      %p216 = scmp.eq.s32.totalorder %s41, 3
      %p217 = por %p215, %p216
      %p219 = scmp.ne.s32.totalorder %s204, %s218
      %p220 = scmp.eq.s32.totalorder %s41, 0
      %p221 = por %p219, %p220
      %s223 = sadd.s32 %s222, 1
      %p226 = scmp.eq.s32.totalorder %s35, 3
      %p227 = scmp.ne.s32.totalorder %s222, %s224
      %p228 = scmp.eq.s32.totalorder %s35, 0
      %p229 = por %p227, %p228
      %p230 = scmp.ne.s32.totalorder %s222, %s224
      %p231 = scmp.eq.s32.totalorder %s40, 3
      %p232 = por %p230, %p231
      %p233 = scmp.ne.s32.totalorder %s224, %s225
      %p234 = scmp.eq.s32.totalorder %s40, 0
      %p235 = por %p233, %p234
      %p236 = scmp.ne.s32.totalorder %s224, %s225
      %p237 = scmp.eq.s32.totalorder %s41, 3
      %p238 = por %p236, %p237
      %p240 = scmp.ne.s32.totalorder %s225, %s239
      %p241 = scmp.eq.s32.totalorder %s41, 0
      %p242 = por %p240, %p241
      %s244 = sadd.s32 %s243, 1
      %p247 = scmp.eq.s32.totalorder %s35, 3
      %p248 = scmp.ne.s32.totalorder %s243, %s245
      %p249 = scmp.eq.s32.totalorder %s35, 0
      %p250 = por %p248, %p249
      %p251 = scmp.ne.s32.totalorder %s243, %s245
      %p252 = scmp.eq.s32.totalorder %s40, 3
      %p253 = por %p251, %p252
      %p254 = scmp.ne.s32.totalorder %s245, %s246
      %p255 = scmp.eq.s32.totalorder %s40, 0
      %p256 = por %p254, %p255
      %p257 = scmp.ne.s32.totalorder %s245, %s246
      %p258 = scmp.eq.s32.totalorder %s41, 3
      %p259 = por %p257, %p258
      %p261 = scmp.ne.s32.totalorder %s246, %s260
      %p262 = scmp.eq.s32.totalorder %s41, 0
      %p263 = por %p261, %p262
      %s265 = sadd.s32 %s264, 1
      %p268 = scmp.eq.s32.totalorder %s35, 3
      %p269 = scmp.ne.s32.totalorder %s264, %s266
      %p270 = scmp.eq.s32.totalorder %s35, 0
      %p271 = por %p269, %p270
      %p272 = scmp.ne.s32.totalorder %s264, %s266
      %p273 = scmp.eq.s32.totalorder %s40, 3
      %p274 = por %p272, %p273
      %p275 = scmp.ne.s32.totalorder %s266, %s267
      %p276 = scmp.eq.s32.totalorder %s40, 0
      %p277 = por %p275, %p276
      %p278 = scmp.ne.s32.totalorder %s266, %s267
      %p279 = scmp.eq.s32.totalorder %s41, 3
      %p280 = por %p278, %p279
      %p282 = scmp.ne.s32.totalorder %s267, %s281
      %p283 = scmp.eq.s32.totalorder %s41, 0
      %p284 = por %p282, %p283
      %s286 = sadd.s32 %s285, 1
      %p289 = scmp.eq.s32.totalorder %s35, 3
      %p290 = scmp.ne.s32.totalorder %s285, %s287
      %p291 = scmp.eq.s32.totalorder %s35, 0
      %p292 = por %p290, %p291
      %p293 = scmp.ne.s32.totalorder %s285, %s287
      %p294 = scmp.eq.s32.totalorder %s40, 3
      %p295 = por %p293, %p294
      %p296 = scmp.ne.s32.totalorder %s287, %s288
      %p297 = scmp.eq.s32.totalorder %s40, 0
      %p298 = por %p296, %p297
      %p299 = scmp.ne.s32.totalorder %s287, %s288
      %p300 = scmp.eq.s32.totalorder %s41, 3
      %p301 = por %p299, %p300
      %p303 = scmp.ne.s32.totalorder %s288, %s302
      %p304 = scmp.eq.s32.totalorder %s41, 0
      %p305 = por %p303, %p304
      %s307 = sadd.s32 %s306, 1
      %p310 = scmp.eq.s32.totalorder %s35, 3
      %p311 = scmp.ne.s32.totalorder %s306, %s308
      %p312 = scmp.eq.s32.totalorder %s35, 0
      %p313 = por %p311, %p312
      %p314 = scmp.ne.s32.totalorder %s306, %s308
      %p315 = scmp.eq.s32.totalorder %s40, 3
      %p316 = por %p314, %p315
      %p317 = scmp.ne.s32.totalorder %s308, %s309
      %p318 = scmp.eq.s32.totalorder %s40, 0
      %p319 = por %p317, %p318
      %p320 = scmp.ne.s32.totalorder %s308, %s309
      %p321 = scmp.eq.s32.totalorder %s41, 3
      %p322 = por %p320, %p321
      %p324 = scmp.ne.s32.totalorder %s309, %s323
      %p325 = scmp.eq.s32.totalorder %s41, 0
      %p326 = por %p324, %p325
      %s328 = sadd.s32 %s327, 1
      %p331 = scmp.eq.s32.totalorder %s35, 3
      %p332 = scmp.ne.s32.totalorder %s327, %s329
      %p333 = scmp.eq.s32.totalorder %s35, 0
      %p334 = por %p332, %p333
      %p335 = scmp.ne.s32.totalorder %s327, %s329
      %p336 = scmp.eq.s32.totalorder %s40, 3
      %p337 = por %p335, %p336
      %p338 = scmp.ne.s32.totalorder %s329, %s330
      %p339 = scmp.eq.s32.totalorder %s40, 0
      %p340 = por %p338, %p339
      %p341 = scmp.ne.s32.totalorder %s329, %s330
      %p342 = scmp.eq.s32.totalorder %s41, 3
      %p343 = por %p341, %p342
      %p345 = scmp.ne.s32.totalorder %s330, %s344
      %p346 = scmp.eq.s32.totalorder %s41, 0
      %p347 = por %p345, %p346
      %s349 = sadd.s32 %s348, 1
      %p352 = scmp.eq.s32.totalorder %s35, 3
      %p353 = scmp.ne.s32.totalorder %s348, %s350
      %p354 = scmp.eq.s32.totalorder %s35, 0
      %p355 = por %p353, %p354
      %p356 = scmp.ne.s32.totalorder %s348, %s350
      %p357 = scmp.eq.s32.totalorder %s40, 3
      %p358 = por %p356, %p357
      %p359 = scmp.ne.s32.totalorder %s350, %s351
      %p360 = scmp.eq.s32.totalorder %s40, 0
      %p361 = por %p359, %p360
      %p362 = scmp.ne.s32.totalorder %s350, %s351
      %p363 = scmp.eq.s32.totalorder %s41, 3
      %p364 = por %p362, %p363
      %p366 = scmp.ne.s32.totalorder %s351, %s365
      %p367 = scmp.eq.s32.totalorder %s41, 0
      %p368 = por %p366, %p367
      %s370 = sadd.s32 %s369, 1
      %p373 = scmp.eq.s32.totalorder %s35, 3
      %p374 = scmp.ne.s32.totalorder %s369, %s371
      %p375 = scmp.eq.s32.totalorder %s35, 0
      %p376 = por %p374, %p375
      %p377 = scmp.ne.s32.totalorder %s369, %s371
      %p378 = scmp.eq.s32.totalorder %s40, 3
      %p379 = por %p377, %p378
      %p380 = scmp.ne.s32.totalorder %s371, %s372
      %p381 = scmp.eq.s32.totalorder %s40, 0
      %p382 = por %p380, %p381
      %p383 = scmp.ne.s32.totalorder %s371, %s372
      %p384 = scmp.eq.s32.totalorder %s41, 3
      %p385 = por %p383, %p384
      %p387 = scmp.ne.s32.totalorder %s372, %s386
      %p388 = scmp.eq.s32.totalorder %s41, 0
      %p389 = por %p387, %p388
      %s391 = sadd.s32 %s390, 1
      %p394 = scmp.eq.s32.totalorder %s35, 3
      %p395 = scmp.ne.s32.totalorder %s390, %s392
      %p396 = scmp.eq.s32.totalorder %s35, 0
      %p397 = por %p395, %p396
      %p398 = scmp.ne.s32.totalorder %s390, %s392
      %p399 = scmp.eq.s32.totalorder %s40, 3
      %p400 = por %p398, %p399
      %p401 = scmp.ne.s32.totalorder %s392, %s393
      %p402 = scmp.eq.s32.totalorder %s40, 0
      %p403 = por %p401, %p402
      %p404 = scmp.ne.s32.totalorder %s392, %s393
      %p405 = scmp.eq.s32.totalorder %s41, 3
      %p406 = por %p404, %p405
      %p408 = scmp.ne.s32.totalorder %s393, %s407
      %p409 = scmp.eq.s32.totalorder %s41, 0
      %p410 = por %p408, %p409
      %s411 = ssub.s32 %s42, %s54
      %s412 = ssub.s32 %s43, %s50
      %s413 = sor.u32 %s411, %s412
      %p414 = scmp.eq.s32.totalorder %s413, 0
      %s416 = sadd.s32 %s415, 1
      %s417 = scalar_select %p414, %s415, %s416
      %p420 = pneg %p414
      %p421 = scmp.eq.s32.totalorder %s35, 3
      %p422 = por %p420, %p421
      %p423 = scmp.ne.s32.totalorder %s415, %s418
      %p424 = scmp.eq.s32.totalorder %s35, 0
      %p425 = por %p423, %p424
      %p426 = scmp.ne.s32.totalorder %s415, %s418
      %p427 = scmp.eq.s32.totalorder %s40, 3
      %p428 = por %p426, %p427
      %p429 = scmp.ne.s32.totalorder %s418, %s419
      %p430 = scmp.eq.s32.totalorder %s40, 0
      %p431 = por %p429, %p430
      %p432 = scmp.ne.s32.totalorder %s418, %s419
      %p433 = scmp.eq.s32.totalorder %s41, 3
      %p434 = por %p432, %p433
      %p436 = scmp.ne.s32.totalorder %s419, %s435
      %p437 = scmp.eq.s32.totalorder %s41, 0
      %p438 = por %p436, %p437
      %p439 = scmp.le.s32.totalorder 1, %s35
      %p440 = scmp.lt.s32.totalorder %s35, 5
      %p441 = pnand %p439, %p440
      %p442 = pneg %p441
      // Predicated region
      $region9: #{tpu_custom_call.1} parent=5 // pred_check
        _
      $region10: #{tpu_custom_call.1} parent=5 // pred_check_branch
        %444 = sbr.rel (%p441) target = $region12
      $region11: #{tpu_custom_call.1} parent=5 // pred_region
        %s445 = ssub.s32 %s35, 1
        // Predicated region
        $region13: #{tpu_custom_call.1} parent=11 // pred_check
          %p446 = pneg %p172
        $region14: #{tpu_custom_call.1} parent=11 // pred_check_branch
          %448 = sbr.rel (%p446) target = $region16
        $region15: #{tpu_custom_call.1} parent=11 // pred_region
          %450 = vsyncadd [#allocation10], 0
          %s451 = sshll.u32 %s4, 4
          %s452 = int_to_ptr.hbm [resolvable:$true] %s451
          %s453 = sshll.u32 [#allocation11], 4
          %s454 = int_to_ptr.vmem [resolvable:$true] %s453
          %459 = dma.hbm_to_vmem [thread:$0]  %s452, 4096, %s454, [#allocation10], 64, 64, 4
        $region16: #{tpu_custom_call.1} parent=11 // pred_fallthru
          _
        // Predicated region
        $region17: #{tpu_custom_call.1} parent=11 // pred_check
          %p460 = pneg %p193
        $region18: #{tpu_custom_call.1} parent=11 // pred_check_branch
          %462 = sbr.rel (%p460) target = $region20
        $region19: #{tpu_custom_call.1} parent=11 // pred_region
          _
        $region20: #{tpu_custom_call.1} parent=11 // pred_fallthru
          _
        // Predicated region
        $region21: #{tpu_custom_call.1} parent=11 // pred_check
          %p463 = pneg %p214
        $region22: #{tpu_custom_call.1} parent=11 // pred_check_branch
          %465 = sbr.rel (%p463) target = $region24
        $region23: #{tpu_custom_call.1} parent=11 // pred_region
          %467 = vsyncadd [#allocation13], 0
          %s468 = sshll.u32 %s6, 4
          %s469 = int_to_ptr.hbm [resolvable:$true] %s468
          %s470 = sshll.u32 [#allocation12], 4
          %s471 = int_to_ptr.vmem [resolvable:$true] %s470
          %476 = dma.hbm_to_vmem [thread:$0]  %s469, 4096, %s471, [#allocation13], 64, 64, 4
        $region24: #{tpu_custom_call.1} parent=11 // pred_fallthru
          _
        // Predicated region
        $region25: #{tpu_custom_call.1} parent=11 // pred_check
          %p477 = pneg %p235
        $region26: #{tpu_custom_call.1} parent=11 // pred_check_branch
          %479 = sbr.rel (%p477) target = $region28
        $region27: #{tpu_custom_call.1} parent=11 // pred_region
          _
        $region28: #{tpu_custom_call.1} parent=11 // pred_fallthru
          _
        // Predicated region
        $region29: #{tpu_custom_call.1} parent=11 // pred_check
          %p480 = pneg %p256
        $region30: #{tpu_custom_call.1} parent=11 // pred_check_branch
          %482 = sbr.rel (%p480) target = $region32
        $region31: #{tpu_custom_call.1} parent=11 // pred_region
          %484 = vsyncadd [#allocation13], 0
          %s486 = sshll.u32 %s8, 4
          %s487 = int_to_ptr.hbm [resolvable:$true] %s486
          %s488 = sshll.u32 [#allocation14], 4
          %s489 = int_to_ptr.vmem [resolvable:$true] %s488
          %491 = dma.hbm_to_vmem [thread:$0]  %s487, 64, %s489, [#allocation13]
        $region32: #{tpu_custom_call.1} parent=11 // pred_fallthru
          _
        // Predicated region
        $region33: #{tpu_custom_call.1} parent=11 // pred_check
          %p492 = pneg %p277
        $region34: #{tpu_custom_call.1} parent=11 // pred_check_branch
          %494 = sbr.rel (%p492) target = $region36
        $region35: #{tpu_custom_call.1} parent=11 // pred_region
          %496 = vsyncadd [#allocation16], 0
          %s498 = sshll.u32 %s9, 4
          %s499 = int_to_ptr.hbm [resolvable:$true] %s498
          %s500 = sshll.u32 [#allocation15], 4
          %s501 = int_to_ptr.vmem [resolvable:$true] %s500
          %503 = dma.hbm_to_vmem [thread:$0]  %s499, 64, %s501, [#allocation16]
        $region36: #{tpu_custom_call.1} parent=11 // pred_fallthru
          _
        // Predicated region
        $region37: #{tpu_custom_call.1} parent=11 // pred_check
          %p504 = pneg %p298
        $region38: #{tpu_custom_call.1} parent=11 // pred_check_branch
          %506 = sbr.rel (%p504) target = $region40
        $region39: #{tpu_custom_call.1} parent=11 // pred_region
          %508 = vsyncadd [#allocation16], 0
          %s509 = sshll.u32 %s10, 4
          %s510 = int_to_ptr.hbm [resolvable:$true] %s509
          %s511 = sshll.u32 [#allocation17], 4
          %s512 = int_to_ptr.vmem [resolvable:$true] %s511
          %517 = dma.hbm_to_vmem [thread:$0]  %s510, 256, %s512, [#allocation16], 128, 128, 8
        $region40: #{tpu_custom_call.1} parent=11 // pred_fallthru
          _
        // Predicated region
        $region41: #{tpu_custom_call.1} parent=11 // pred_check
          %p518 = pneg %p319
        $region42: #{tpu_custom_call.1} parent=11 // pred_check_branch
          %520 = sbr.rel (%p518) target = $region44
        $region43: #{tpu_custom_call.1} parent=11 // pred_region
          %522 = vsyncadd [#allocation19], 0
          %s523 = sshll.u32 %s11, 4
          %s524 = int_to_ptr.hbm [resolvable:$true] %s523
          %s525 = sshll.u32 [#allocation18], 4
          %s526 = int_to_ptr.vmem [resolvable:$true] %s525
          %531 = dma.hbm_to_vmem [thread:$0]  %s524, 256, %s526, [#allocation19], 128, 128, 8
        $region44: #{tpu_custom_call.1} parent=11 // pred_fallthru
          _
        // Predicated region
        $region45: #{tpu_custom_call.1} parent=11 // pred_check
          %p532 = pneg %p340
        $region46: #{tpu_custom_call.1} parent=11 // pred_check_branch
          %534 = sbr.rel (%p532) target = $region48
        $region47: #{tpu_custom_call.1} parent=11 // pred_region
          %536 = vsyncadd [#allocation19], 0
          %s537 = sshll.u32 %s12, 4
          %s538 = int_to_ptr.hbm [resolvable:$true] %s537
          %s539 = sshll.u32 [#allocation20], 4
          %s540 = int_to_ptr.vmem [resolvable:$true] %s539
          %545 = dma.hbm_to_vmem [thread:$0]  %s538, 2048, %s540, [#allocation19], 128, 128, 8
        $region48: #{tpu_custom_call.1} parent=11 // pred_fallthru
          _
        // Predicated region
        $region49: #{tpu_custom_call.1} parent=11 // pred_check
          %p546 = pneg %p361
        $region50: #{tpu_custom_call.1} parent=11 // pred_check_branch
          %548 = sbr.rel (%p546) target = $region52
        $region51: #{tpu_custom_call.1} parent=11 // pred_region
          _
        $region52: #{tpu_custom_call.1} parent=11 // pred_fallthru
          _
        // Predicated region
        $region53: #{tpu_custom_call.1} parent=11 // pred_check
          %p549 = pneg %p382
        $region54: #{tpu_custom_call.1} parent=11 // pred_check_branch
          %551 = sbr.rel (%p549) target = $region56
        $region55: #{tpu_custom_call.1} parent=11 // pred_region
          %553 = vsyncadd [#allocation22], 0
          %s554 = sshll.u32 %s14, 4
          %s555 = int_to_ptr.hbm [resolvable:$true] %s554
          %s556 = sshll.u32 [#allocation21], 4
          %s557 = int_to_ptr.vmem [resolvable:$true] %s556
          %562 = dma.hbm_to_vmem [thread:$0]  %s555, 2048, %s557, [#allocation22], 64, 64, 4
        $region56: #{tpu_custom_call.1} parent=11 // pred_fallthru
          _
        // Predicated region
        $region57: #{tpu_custom_call.1} parent=11 // pred_check
          %p563 = pneg %p403
        $region58: #{tpu_custom_call.1} parent=11 // pred_check_branch
          %565 = sbr.rel (%p563) target = $region60
        $region59: #{tpu_custom_call.1} parent=11 // pred_region
          _
        $region60: #{tpu_custom_call.1} parent=11 // pred_fallthru
          _
      $region12: #{tpu_custom_call.1} parent=5 // pred_fallthru
        _
      %p566 = scmp.lt.s32.totalorder %s35, 4
      // Predicated region
      $region61: #{tpu_custom_call.1} parent=5 // pred_check
        %p567 = pneg %p566
      $region62: #{tpu_custom_call.1} parent=5 // pred_check_branch
        %569 = sbr.rel (%p567) target = $region64
      $region63: #{tpu_custom_call.1} parent=5 // pred_region
        // Predicated region
        $region65: #{tpu_custom_call.1} parent=63 // pred_check
          %p570 = pneg %p67
        $region66: #{tpu_custom_call.1} parent=63 // pred_check_branch
          %572 = sbr.rel (%p570) target = $region68
        $region67: #{tpu_custom_call.1} parent=63 // pred_region
          %p573 = scmp.lt.s32.totalorder %s42, 1
          %s574 = scalar_select %p573, %s42, 1
          %s575 = smul.addr %s574, 2
          %s576 = smul.addr %s575, 8
          %s577 = scalar_lea.vmem %s0, %s576
        $region68: #{tpu_custom_call.1} parent=63 // pred_fallthru
          _
        // Predicated region
        $region69: #{tpu_custom_call.1} parent=63 // pred_check
          %p578 = pneg %p93
        $region70: #{tpu_custom_call.1} parent=63 // pred_check_branch
          %580 = sbr.rel (%p578) target = $region72
        $region71: #{tpu_custom_call.1} parent=63 // pred_region
          %s581 = sand.u32 %s83, 1
          %s582 = scalar_lea.sflag [#allocation7], %s581
          %s583 = sand.u32 %s83, 1
          %s584 = smul.addr %s583, 16
          %s585 = scalar_lea.vmem [#allocation6], %s584
          %587 = vsyncadd %s582, 0
          %s588 = smul.addr %s42, 2
          %s589 = smul.addr %s588, 8
          %s590 = scalar_lea.hbm %s1, %s589
          %s591 = sshll.u32 %s590, 4
          %s592 = int_to_ptr.hbm [resolvable:$true] %s591
          %s593 = sshll.u32 %s585, 4
          %s594 = int_to_ptr.vmem [resolvable:$true] %s593
          %599 = dma.hbm_to_vmem [thread:$0]  %s592, 256, %s594, %s582, 128, 128, 8
        $region72: #{tpu_custom_call.1} parent=63 // pred_fallthru
          _
        // Predicated region
        $region73: #{tpu_custom_call.1} parent=63 // pred_check
          %p600 = pneg %p119
        $region74: #{tpu_custom_call.1} parent=63 // pred_check_branch
          %602 = sbr.rel (%p600) target = $region76
        $region75: #{tpu_custom_call.1} parent=63 // pred_region
          %p603 = scmp.lt.s32.totalorder %s42, 1
          %s604 = scalar_select %p603, %s42, 1
          %s605 = smul.addr %s604, 2
          %s606 = smul.addr %s605, 8
          %s607 = scalar_lea.vmem %s2, %s606
        $region76: #{tpu_custom_call.1} parent=63 // pred_fallthru
          _
        // Predicated region
        $region77: #{tpu_custom_call.1} parent=63 // pred_check
          %p608 = pneg %p145
        $region78: #{tpu_custom_call.1} parent=63 // pred_check_branch
          %610 = sbr.rel (%p608) target = $region80
        $region79: #{tpu_custom_call.1} parent=63 // pred_region
          %s611 = sand.u32 %s35, 1
          %s612 = scalar_lea.sflag [#allocation10], %s611
          %s613 = sand.u32 %s135, 1
          %s614 = scalar_lea.vmem [#allocation9], %s613
          %616 = vsyncadd %s612, 0
          %s617 = scalar_lea.hbm %s3, %s42
          %s619 = sshll.u32 %s617, 4
          %s620 = int_to_ptr.hbm [resolvable:$true] %s619
          %s621 = sshll.u32 %s614, 4
          %s622 = int_to_ptr.vmem [resolvable:$true] %s621
          %624 = dma.hbm_to_vmem [thread:$0]  %s620, 16, %s622, %s612
        $region80: #{tpu_custom_call.1} parent=63 // pred_fallthru
          _
      $region64: #{tpu_custom_call.1} parent=5 // pred_fallthru
        _
      %p625 = scmp.le.s32.totalorder 1, %s35
      %p626 = scmp.lt.s32.totalorder %s35, 5
      %p627 = pnand %p625, %p626
      %p628 = pneg %p627
      // Predicated region
      $region81: #{tpu_custom_call.1} parent=5 // pred_check
        _
      $region82: #{tpu_custom_call.1} parent=5 // pred_check_branch
        %630 = sbr.rel (%p627) target = $region84
      $region83: #{tpu_custom_call.1} parent=5 // pred_region
        %s631 = ssub.s32 %s35, 1
        %s632 = sand.u32 %s86, 1
        %s633 = scalar_lea.sflag [#allocation7], %s632
        %s634 = sand.u32 %s86, 1
        %s635 = smul.addr %s634, 16
        %s636 = scalar_lea.vmem [#allocation6], %s635
        // Predicated region
        $region85: #{tpu_custom_call.1} parent=83 // pred_check
          %p637 = pneg %p99
        $region86: #{tpu_custom_call.1} parent=83 // pred_check_branch
          %639 = sbr.rel (%p637) target = $region88
        $region87: #{tpu_custom_call.1} parent=83 // pred_region
          %641 = dma.done %s633, 256
        $region88: #{tpu_custom_call.1} parent=83 // pred_fallthru
          _
        %s642 = sand.u32 %s40, 1
        %s643 = scalar_lea.sflag [#allocation10], %s642
        %s644 = sand.u32 %s138, 1
        %s645 = scalar_lea.vmem [#allocation9], %s644
        // Predicated region
        $region89: #{tpu_custom_call.1} parent=83 // pred_check
          %p646 = pneg %p151
        $region90: #{tpu_custom_call.1} parent=83 // pred_check_branch
          %648 = sbr.rel (%p646) target = $region92
        $region91: #{tpu_custom_call.1} parent=83 // pred_region
          %650 = dma.done %s643, 16
        $region92: #{tpu_custom_call.1} parent=83 // pred_fallthru
          _
        // Predicated region
        $region93: #{tpu_custom_call.1} parent=83 // pred_check
          %p651 = pneg %p172
        $region94: #{tpu_custom_call.1} parent=83 // pred_check_branch
          %653 = sbr.rel (%p651) target = $region96
        $region95: #{tpu_custom_call.1} parent=83 // pred_region
          %655 = dma.done [#allocation10], 4096
        $region96: #{tpu_custom_call.1} parent=83 // pred_fallthru
          _
        // Predicated region
        $region97: #{tpu_custom_call.1} parent=83 // pred_check
          %p656 = pneg %p214
        $region98: #{tpu_custom_call.1} parent=83 // pred_check_branch
          %658 = sbr.rel (%p656) target = $region100
        $region99: #{tpu_custom_call.1} parent=83 // pred_region
          %660 = dma.done [#allocation13], 4096
        $region100: #{tpu_custom_call.1} parent=83 // pred_fallthru
          _
        // Predicated region
        $region101: #{tpu_custom_call.1} parent=83 // pred_check
          %p661 = pneg %p256
        $region102: #{tpu_custom_call.1} parent=83 // pred_check_branch
          %663 = sbr.rel (%p661) target = $region104
        $region103: #{tpu_custom_call.1} parent=83 // pred_region
          %665 = dma.done [#allocation13], 64
        $region104: #{tpu_custom_call.1} parent=83 // pred_fallthru
          _
        // Predicated region
        $region105: #{tpu_custom_call.1} parent=83 // pred_check
          %p666 = pneg %p277
        $region106: #{tpu_custom_call.1} parent=83 // pred_check_branch
          %668 = sbr.rel (%p666) target = $region108
        $region107: #{tpu_custom_call.1} parent=83 // pred_region
          %670 = dma.done [#allocation16], 64
        $region108: #{tpu_custom_call.1} parent=83 // pred_fallthru
          _
        // Predicated region
        $region109: #{tpu_custom_call.1} parent=83 // pred_check
          %p671 = pneg %p298
        $region110: #{tpu_custom_call.1} parent=83 // pred_check_branch
          %673 = sbr.rel (%p671) target = $region112
        $region111: #{tpu_custom_call.1} parent=83 // pred_region
          %675 = dma.done [#allocation16], 256
        $region112: #{tpu_custom_call.1} parent=83 // pred_fallthru
          _
        // Predicated region
        $region113: #{tpu_custom_call.1} parent=83 // pred_check
          %p676 = pneg %p319
        $region114: #{tpu_custom_call.1} parent=83 // pred_check_branch
          %678 = sbr.rel (%p676) target = $region116
        $region115: #{tpu_custom_call.1} parent=83 // pred_region
          %680 = dma.done [#allocation19], 256
        $region116: #{tpu_custom_call.1} parent=83 // pred_fallthru
          _
        // Predicated region
        $region117: #{tpu_custom_call.1} parent=83 // pred_check
          %p681 = pneg %p340
        $region118: #{tpu_custom_call.1} parent=83 // pred_check_branch
          %683 = sbr.rel (%p681) target = $region120
        $region119: #{tpu_custom_call.1} parent=83 // pred_region
          %685 = dma.done [#allocation19], 2048
        $region120: #{tpu_custom_call.1} parent=83 // pred_fallthru
          _
        // Predicated region
        $region121: #{tpu_custom_call.1} parent=83 // pred_check
          %p686 = pneg %p382
        $region122: #{tpu_custom_call.1} parent=83 // pred_check_branch
          %688 = sbr.rel (%p686) target = $region124
        $region123: #{tpu_custom_call.1} parent=83 // pred_region
          %690 = dma.done [#allocation22], 2048
        $region124: #{tpu_custom_call.1} parent=83 // pred_fallthru
          _
        %p691 = scmp.lt.s32.totalorder %s44, 1
        %s692 = scalar_select %p691, %s44, 1
        %s693 = smul.addr %s692, 2
        %s694 = smul.addr %s693, 8
        %s695 = scalar_lea.vmem %s0, %s694
        %p696 = pneg %p73
        %p697 = pneg %p70
        %s698 = sand.u32 %s86, 1
        %s699 = scalar_lea.sflag [#allocation7], %s698
        %s700 = sand.u32 %s86, 1
        %s701 = smul.addr %s700, 16
        %s702 = scalar_lea.vmem [#allocation6], %s701
        %p703 = pneg %p99
        %p704 = pneg %p96
        %p705 = scmp.lt.s32.totalorder %s44, 1
        %s706 = scalar_select %p705, %s44, 1
        %s707 = smul.addr %s706, 2
        %s708 = smul.addr %s707, 8
        %s709 = scalar_lea.vmem %s2, %s708
        %p710 = pneg %p125
        %p711 = pneg %p122
        %s712 = sand.u32 %s40, 1
        %s713 = scalar_lea.sflag [#allocation10], %s712
        %s714 = sand.u32 %s138, 1
        %s715 = scalar_lea.vmem [#allocation9], %s714
        %p716 = pneg %p151
        %p717 = pneg %p148
        %p718 = pneg %p172
        %p719 = pneg %p169
        %p720 = pneg %p193
        %p721 = pneg %p190
        %p722 = pneg %p214
        %p723 = pneg %p211
        %p724 = pneg %p235
        %p725 = pneg %p232
        %p726 = pneg %p256
        %p727 = pneg %p253
        %p728 = pneg %p277
        %p729 = pneg %p274
        %p730 = pneg %p298
        %p731 = pneg %p295
        %p732 = pneg %p319
        %p733 = pneg %p316
        %p734 = pneg %p340
        %p735 = pneg %p337
        %p736 = pneg %p361
        %p737 = pneg %p358
        %p738 = pneg %p382
        %p739 = pneg %p379
        %p740 = pneg %p403
        %p741 = pneg %p400
        %p742 = pneg %p431
        %p743 = pneg %p428
        %s744 = sand.u32 %s418, 1
        %s745 = scalar_lea.sflag [#allocation8], %s744
        %s746 = sand.u32 %s418, 1
        %s747 = smul.addr %s746, 8
        %s748 = scalar_lea.vmem [#allocation23], %s747
        %p749 = scmp.lt.s32.totalorder %s44, 1
        %s750 = scalar_select %p749, %s44, 1
        %s751 = smul.addr %s750, 2
        %s752 = smul.addr %s751, 8
        %s753 = scalar_lea.vmem %s0, %s752
        %p754 = scmp.lt.s32.totalorder %s44, 1
        %s755 = scalar_select %p754, %s44, 1
        %s756 = smul.addr %s755, 2
        %s757 = smul.addr %s756, 8
        %s758 = scalar_lea.vmem %s2, %s757
        %p760 = scmp.eq.s32.totalorder %s45, 0
        // Predicated region
        $region125: #{tpu_custom_call.1} parent=83 // pred_check
          %p761 = pneg %p760
        $region126: #{tpu_custom_call.1} parent=83 // pred_check_branch
          %763 = sbr.rel (%p761) target = $region128
        $region127: #{tpu_custom_call.1} parent=83 // pred_region
          %v764 = vld [vmem:[%s753] sm:$0xff]
          %v765 = vld [vmem:[%s753 + $0x8] sm:$0xff]
          %v766 = vld [vmem:[%s758] sm:$0xff]
          %v767 = vld [vmem:[%s758 + $0x8] sm:$0xff]
          %v768 = vsub.f32 1.0, %v766
          %v769 = vsub.f32 1.0, %v767
          %s770 = scalar_lea.vmem [#allocation11], 64
          %v771 = vld [vmem:[%s770] sm:$0xf]
          %v772 = vld [vmem:[%s770 + $0x4] sm:$0xf]
          %v773 = vld [vmem:[%s770 + $0x8] sm:$0xf]
          %v774 = vld [vmem:[%s770 + $0xc] sm:$0xf]
          %v775 = vld [vmem:[%s770 + $0x10] sm:$0xf]
          %v776 = vld [vmem:[%s770 + $0x14] sm:$0xf]
          %v777 = vld [vmem:[%s770 + $0x18] sm:$0xf]
          %v778 = vld [vmem:[%s770 + $0x1c] sm:$0xf]
          %v779 = vld [vmem:[%s770 + $0x20] sm:$0xf]
          %v780 = vld [vmem:[%s770 + $0x24] sm:$0xf]
          %v781 = vld [vmem:[%s770 + $0x28] sm:$0xf]
          %v782 = vld [vmem:[%s770 + $0x2c] sm:$0xf]
          %v783 = vld [vmem:[%s770 + $0x30] sm:$0xf]
          %v784 = vld [vmem:[%s770 + $0x34] sm:$0xf]
          %v785 = vld [vmem:[%s770 + $0x38] sm:$0xf]
          %v786 = vld [vmem:[%s770 + $0x3c] sm:$0xf]
          %v787 = vpack.c.bf16 %v765, %v764
          %v788 = vld [vmem:[%s5 + $0x1] sm:$0x1]
          %v789 = vperm.slane %v788, 0
          %v806 = vunpack.c.l.b16 %v771
          %v807 = vunpack.c.l.b16 %v772
          %v808 = vunpack.c.l.b16 %v773
          %v809 = vunpack.c.l.b16 %v774
          %v810 = vunpack.c.l.b16 %v775
          %v811 = vunpack.c.l.b16 %v776
          %v812 = vunpack.c.l.b16 %v777
          %v813 = vunpack.c.l.b16 %v778
          %v814 = vunpack.c.l.b16 %v779
          %v815 = vunpack.c.l.b16 %v780
          %v816 = vunpack.c.l.b16 %v781
          %v817 = vunpack.c.l.b16 %v782
          %v818 = vunpack.c.l.b16 %v783
          %v819 = vunpack.c.l.b16 %v784
          %v820 = vunpack.c.l.b16 %v785
          %v821 = vunpack.c.l.b16 %v786
          %v822 = vpack.c.b16 %v807, %v806
          %v823 = vpack.c.b16 %v809, %v808
          %v824 = vpack.c.b16 %v811, %v810
          %v825 = vpack.c.b16 %v813, %v812
          %v826 = vpack.c.b16 %v815, %v814
          %v827 = vpack.c.b16 %v817, %v816
          %v828 = vpack.c.b16 %v819, %v818
          %v829 = vpack.c.b16 %v821, %v820
          %838 = vmatpush.bf16.msra.mxu0 %v829
          %839 = vmatpush.bf16.msra.mxu0 %v828
          %840 = vmatpush.bf16.msra.mxu0 %v827
          %841 = vmatpush.bf16.msra.mxu0 %v826
          %842 = vmatpush.bf16.msra.mxu0 %v825
          %843 = vmatpush.bf16.msra.mxu0 %v824
          %844 = vmatpush.bf16.msra.mxu0 %v823
          %845 = vmatpush.bf16.msra.mxu0 %v822
          %846 = vmatmul.bf16.gmra.mxu0 %v787
          %v847 = vpop.f32.mrf.mxu0
          %v848 = vadd.f32 %v789, %v847
          %v849 = vpop.f32.mrf.mxu0
          %v850 = vadd.f32 %v789, %v849
          %851 = vdwg.mxu0
          %853 = vset.pattern.permute.xlu0 0
          %854 = vperm.xlu0 %853, %v768
          %v855 = vpop.permute.xlu0 %854
          %858 = vset.pattern.permute.xlu0 0
          %859 = vperm.xlu0 %858, %v769
          %v860 = vpop.permute.xlu0 %859
          %v862 = vmul.f32 %v848, %v855
          %v863 = vmul.f32 %v850, %v860
          %s864 = scalar_lea.vmem [#allocation11], 128
          %v865 = vld [vmem:[%s864] sm:$0xf]
          %v866 = vld [vmem:[%s864 + $0x4] sm:$0xf]
          %v867 = vld [vmem:[%s864 + $0x8] sm:$0xf]
          %v868 = vld [vmem:[%s864 + $0xc] sm:$0xf]
          %v869 = vld [vmem:[%s864 + $0x10] sm:$0xf]
          %v870 = vld [vmem:[%s864 + $0x14] sm:$0xf]
          %v871 = vld [vmem:[%s864 + $0x18] sm:$0xf]
          %v872 = vld [vmem:[%s864 + $0x1c] sm:$0xf]
          %v873 = vld [vmem:[%s864 + $0x20] sm:$0xf]
          %v874 = vld [vmem:[%s864 + $0x24] sm:$0xf]
          %v875 = vld [vmem:[%s864 + $0x28] sm:$0xf]
          %v876 = vld [vmem:[%s864 + $0x2c] sm:$0xf]
          %v877 = vld [vmem:[%s864 + $0x30] sm:$0xf]
          %v878 = vld [vmem:[%s864 + $0x34] sm:$0xf]
          %v879 = vld [vmem:[%s864 + $0x38] sm:$0xf]
          %v880 = vld [vmem:[%s864 + $0x3c] sm:$0xf]
          %v881 = vld [vmem:[%s5 + $0x2] sm:$0x1]
          %v882 = vperm.slane %v881, 0
          %v899 = vunpack.c.l.b16 %v865
          %v900 = vunpack.c.l.b16 %v866
          %v901 = vunpack.c.l.b16 %v867
          %v902 = vunpack.c.l.b16 %v868
          %v903 = vunpack.c.l.b16 %v869
          %v904 = vunpack.c.l.b16 %v870
          %v905 = vunpack.c.l.b16 %v871
          %v906 = vunpack.c.l.b16 %v872
          %v907 = vunpack.c.l.b16 %v873
          %v908 = vunpack.c.l.b16 %v874
          %v909 = vunpack.c.l.b16 %v875
          %v910 = vunpack.c.l.b16 %v876
          %v911 = vunpack.c.l.b16 %v877
          %v912 = vunpack.c.l.b16 %v878
          %v913 = vunpack.c.l.b16 %v879
          %v914 = vunpack.c.l.b16 %v880
          %v915 = vpack.c.b16 %v900, %v899
          %v916 = vpack.c.b16 %v902, %v901
          %v917 = vpack.c.b16 %v904, %v903
          %v918 = vpack.c.b16 %v906, %v905
          %v919 = vpack.c.b16 %v908, %v907
          %v920 = vpack.c.b16 %v910, %v909
          %v921 = vpack.c.b16 %v912, %v911
          %v922 = vpack.c.b16 %v914, %v913
          %931 = vmatpush.bf16.msra.mxu0 %v922
          %932 = vmatpush.bf16.msra.mxu0 %v921
          %933 = vmatpush.bf16.msra.mxu0 %v920
          %934 = vmatpush.bf16.msra.mxu0 %v919
          %935 = vmatpush.bf16.msra.mxu0 %v918
          %936 = vmatpush.bf16.msra.mxu0 %v917
          %937 = vmatpush.bf16.msra.mxu0 %v916
          %938 = vmatpush.bf16.msra.mxu0 %v915
          %939 = vmatmul.bf16.gmra.mxu0 %v787
          %v940 = vpop.f32.mrf.mxu0
          %v941 = vadd.f32 %v882, %v940
          %v942 = vpop.f32.mrf.mxu0
          %v943 = vadd.f32 %v882, %v942
          %944 = vdwg.mxu0
          %v945 = vmul.f32 %v941, %v855
          %v946 = vmul.f32 %v943, %v860
          %v947 = vld [vmem:[%s636] sm:$0xff]
          %v948 = vld [vmem:[%s636 + $0x8] sm:$0xff]
          %s949 = scalar_lea.vmem [#allocation12], 64
          %v950 = vld [vmem:[%s949] sm:$0xf]
          %v951 = vld [vmem:[%s949 + $0x4] sm:$0xf]
          %v952 = vld [vmem:[%s949 + $0x8] sm:$0xf]
          %v953 = vld [vmem:[%s949 + $0xc] sm:$0xf]
          %v954 = vld [vmem:[%s949 + $0x10] sm:$0xf]
          %v955 = vld [vmem:[%s949 + $0x14] sm:$0xf]
          %v956 = vld [vmem:[%s949 + $0x18] sm:$0xf]
          %v957 = vld [vmem:[%s949 + $0x1c] sm:$0xf]
          %v958 = vld [vmem:[%s949 + $0x20] sm:$0xf]
          %v959 = vld [vmem:[%s949 + $0x24] sm:$0xf]
          %v960 = vld [vmem:[%s949 + $0x28] sm:$0xf]
          %v961 = vld [vmem:[%s949 + $0x2c] sm:$0xf]
          %v962 = vld [vmem:[%s949 + $0x30] sm:$0xf]
          %v963 = vld [vmem:[%s949 + $0x34] sm:$0xf]
          %v964 = vld [vmem:[%s949 + $0x38] sm:$0xf]
          %v965 = vld [vmem:[%s949 + $0x3c] sm:$0xf]
          %v966 = vpack.c.bf16 %v948, %v947
          %v967 = vld [vmem:[%s7 + $0x1] sm:$0x1]
          %v968 = vperm.slane %v967, 0
          %v985 = vunpack.c.l.b16 %v950
          %v986 = vunpack.c.l.b16 %v951
          %v987 = vunpack.c.l.b16 %v952
          %v988 = vunpack.c.l.b16 %v953
          %v989 = vunpack.c.l.b16 %v954
          %v990 = vunpack.c.l.b16 %v955
          %v991 = vunpack.c.l.b16 %v956
          %v992 = vunpack.c.l.b16 %v957
          %v993 = vunpack.c.l.b16 %v958
          %v994 = vunpack.c.l.b16 %v959
          %v995 = vunpack.c.l.b16 %v960
          %v996 = vunpack.c.l.b16 %v961
          %v997 = vunpack.c.l.b16 %v962
          %v998 = vunpack.c.l.b16 %v963
          %v999 = vunpack.c.l.b16 %v964
          %v1000 = vunpack.c.l.b16 %v965
          %v1001 = vpack.c.b16 %v986, %v985
          %v1002 = vpack.c.b16 %v988, %v987
          %v1003 = vpack.c.b16 %v990, %v989
          %v1004 = vpack.c.b16 %v992, %v991
          %v1005 = vpack.c.b16 %v994, %v993
          %v1006 = vpack.c.b16 %v996, %v995
          %v1007 = vpack.c.b16 %v998, %v997
          %v1008 = vpack.c.b16 %v1000, %v999
          %1017 = vmatpush.bf16.msra.mxu0 %v1008
          %1018 = vmatpush.bf16.msra.mxu0 %v1007
          %1019 = vmatpush.bf16.msra.mxu0 %v1006
          %1020 = vmatpush.bf16.msra.mxu0 %v1005
          %1021 = vmatpush.bf16.msra.mxu0 %v1004
          %1022 = vmatpush.bf16.msra.mxu0 %v1003
          %1023 = vmatpush.bf16.msra.mxu0 %v1002
          %1024 = vmatpush.bf16.msra.mxu0 %v1001
          %1025 = vmatmul.bf16.gmra.mxu0 %v966
          %v1026 = vpop.f32.mrf.mxu0
          %v1027 = vadd.f32 %v968, %v1026
          %v1028 = vpop.f32.mrf.mxu0
          %v1029 = vadd.f32 %v968, %v1028
          %1030 = vdwg.mxu0
          %s1031 = scalar_lea.vmem [#allocation12], 128
          %v1032 = vld [vmem:[%s1031] sm:$0xf]
          %v1033 = vld [vmem:[%s1031 + $0x4] sm:$0xf]
          %v1034 = vld [vmem:[%s1031 + $0x8] sm:$0xf]
          %v1035 = vld [vmem:[%s1031 + $0xc] sm:$0xf]
          %v1036 = vld [vmem:[%s1031 + $0x10] sm:$0xf]
          %v1037 = vld [vmem:[%s1031 + $0x14] sm:$0xf]
          %v1038 = vld [vmem:[%s1031 + $0x18] sm:$0xf]
          %v1039 = vld [vmem:[%s1031 + $0x1c] sm:$0xf]
          %v1040 = vld [vmem:[%s1031 + $0x20] sm:$0xf]
          %v1041 = vld [vmem:[%s1031 + $0x24] sm:$0xf]
          %v1042 = vld [vmem:[%s1031 + $0x28] sm:$0xf]
          %v1043 = vld [vmem:[%s1031 + $0x2c] sm:$0xf]
          %v1044 = vld [vmem:[%s1031 + $0x30] sm:$0xf]
          %v1045 = vld [vmem:[%s1031 + $0x34] sm:$0xf]
          %v1046 = vld [vmem:[%s1031 + $0x38] sm:$0xf]
          %v1047 = vld [vmem:[%s1031 + $0x3c] sm:$0xf]
          %v1048 = vld [vmem:[%s7 + $0x2] sm:$0x1]
          %v1049 = vperm.slane %v1048, 0
          %v1066 = vunpack.c.l.b16 %v1032
          %v1067 = vunpack.c.l.b16 %v1033
          %v1068 = vunpack.c.l.b16 %v1034
          %v1069 = vunpack.c.l.b16 %v1035
          %v1070 = vunpack.c.l.b16 %v1036
          %v1071 = vunpack.c.l.b16 %v1037
          %v1072 = vunpack.c.l.b16 %v1038
          %v1073 = vunpack.c.l.b16 %v1039
          %v1074 = vunpack.c.l.b16 %v1040
          %v1075 = vunpack.c.l.b16 %v1041
          %v1076 = vunpack.c.l.b16 %v1042
          %v1077 = vunpack.c.l.b16 %v1043
          %v1078 = vunpack.c.l.b16 %v1044
          %v1079 = vunpack.c.l.b16 %v1045
          %v1080 = vunpack.c.l.b16 %v1046
          %v1081 = vunpack.c.l.b16 %v1047
          %v1082 = vpack.c.b16 %v1067, %v1066
          %v1083 = vpack.c.b16 %v1069, %v1068
          %v1084 = vpack.c.b16 %v1071, %v1070
          %v1085 = vpack.c.b16 %v1073, %v1072
          %v1086 = vpack.c.b16 %v1075, %v1074
          %v1087 = vpack.c.b16 %v1077, %v1076
          %v1088 = vpack.c.b16 %v1079, %v1078
          %v1089 = vpack.c.b16 %v1081, %v1080
          %1098 = vmatpush.bf16.msra.mxu0 %v1089
          %1099 = vmatpush.bf16.msra.mxu0 %v1088
          %1100 = vmatpush.bf16.msra.mxu0 %v1087
          %1101 = vmatpush.bf16.msra.mxu0 %v1086
          %1102 = vmatpush.bf16.msra.mxu0 %v1085
          %1103 = vmatpush.bf16.msra.mxu0 %v1084
          %1104 = vmatpush.bf16.msra.mxu0 %v1083
          %1105 = vmatpush.bf16.msra.mxu0 %v1082
          %1106 = vmatmul.bf16.gmra.mxu0 %v966
          %v1107 = vpop.f32.mrf.mxu0
          %v1108 = vadd.f32 %v1049, %v1107
          %v1109 = vpop.f32.mrf.mxu0
          %v1110 = vadd.f32 %v1049, %v1109
          %1111 = vdwg.mxu0
          %v1112 = vpack.c.bf16 %v862, %v862
          %v1113 = vpack.c.bf16 %v863, %v863
          %vm1114 = vcmask 257024
          %1115 = vst.msk [vmem:[#allocation2] sm:$0xf] %vm1114, %v1112
          %1116 = vst.msk [vmem:[#allocation2 + $0x4] sm:$0xf] %vm1114, %v1113
          %v1117 = vpack.c.bf16 %v945, %v945
          %v1118 = vpack.c.bf16 %v946, %v946
          %1119 = vst.msk [vmem:[#allocation3] sm:$0xf] %vm1114, %v1117
          %1120 = vst.msk [vmem:[#allocation3 + $0x4] sm:$0xf] %vm1114, %v1118
          %v1121 = vpack.c.bf16 %v1027, %v1027
          %v1122 = vpack.c.bf16 %v1029, %v1029
          %1123 = vst.msk [vmem:[#allocation4] sm:$0xf] %vm1114, %v1121
          %1124 = vst.msk [vmem:[#allocation4 + $0x4] sm:$0xf] %vm1114, %v1122
          %v1125 = vpack.c.bf16 %v1108, %v1108
          %v1126 = vpack.c.bf16 %v1110, %v1110
          %1127 = vst.msk [vmem:[#allocation5] sm:$0xf] %vm1114, %v1125
          %1128 = vst.msk [vmem:[#allocation5 + $0x4] sm:$0xf] %vm1114, %v1126
          %1131 = vrot.lane.b32.xlu0 %v1112, 96
          %v1132 = vpop.permute.xlu0 %1131
          %1133 = vrot.lane.b32.xlu0 %v1113, 96
          %v1134 = vpop.permute.xlu0 %1133
          %s1137 = scalar_lea.vmem [#allocation2], 8
          %1138 = vst.msk [vmem:[%s1137] sm:$0xf] %vm1114, %v1132
          %1139 = vst.msk [vmem:[%s1137 + $0x4] sm:$0xf] %vm1114, %v1134
          %1142 = vrot.lane.b32.xlu0 %v1117, 96
          %v1143 = vpop.permute.xlu0 %1142
          %1144 = vrot.lane.b32.xlu0 %v1118, 96
          %v1145 = vpop.permute.xlu0 %1144
          %s1148 = scalar_lea.vmem [#allocation3], 8
          %1149 = vst.msk [vmem:[%s1148] sm:$0xf] %vm1114, %v1143
          %1150 = vst.msk [vmem:[%s1148 + $0x4] sm:$0xf] %vm1114, %v1145
          %1153 = vrot.lane.b32.xlu0 %v1121, 96
          %v1154 = vpop.permute.xlu0 %1153
          %1155 = vrot.lane.b32.xlu0 %v1122, 96
          %v1156 = vpop.permute.xlu0 %1155
          %s1159 = scalar_lea.vmem [#allocation4], 8
          %1160 = vst.msk [vmem:[%s1159] sm:$0xf] %vm1114, %v1154
          %1161 = vst.msk [vmem:[%s1159 + $0x4] sm:$0xf] %vm1114, %v1156
          %1164 = vrot.lane.b32.xlu0 %v1125, 96
          %v1165 = vpop.permute.xlu0 %1164
          %1166 = vrot.lane.b32.xlu0 %v1126, 96
          %v1167 = vpop.permute.xlu0 %1166
          %s1170 = scalar_lea.vmem [#allocation5], 8
          %1171 = vst.msk [vmem:[%s1170] sm:$0xf] %vm1114, %v1165
          %1172 = vst.msk [vmem:[%s1170 + $0x4] sm:$0xf] %vm1114, %v1167
          %1173 = vrot.lane.b32.xlu0 %v1112, 64
          %v1174 = vpop.permute.xlu0 %1173
          %1175 = vrot.lane.b32.xlu0 %v1113, 64
          %v1176 = vpop.permute.xlu0 %1175
          %s1179 = scalar_lea.vmem [#allocation2], 16
          %1180 = vst.msk [vmem:[%s1179] sm:$0xf] %vm1114, %v1174
          %1181 = vst.msk [vmem:[%s1179 + $0x4] sm:$0xf] %vm1114, %v1176
          %1182 = vrot.lane.b32.xlu0 %v1117, 64
          %v1183 = vpop.permute.xlu0 %1182
          %1184 = vrot.lane.b32.xlu0 %v1118, 64
          %v1185 = vpop.permute.xlu0 %1184
          %s1188 = scalar_lea.vmem [#allocation3], 16
          %1189 = vst.msk [vmem:[%s1188] sm:$0xf] %vm1114, %v1183
          %1190 = vst.msk [vmem:[%s1188 + $0x4] sm:$0xf] %vm1114, %v1185
          %1191 = vrot.lane.b32.xlu0 %v1121, 64
          %v1192 = vpop.permute.xlu0 %1191
          %1193 = vrot.lane.b32.xlu0 %v1122, 64
          %v1194 = vpop.permute.xlu0 %1193
          %s1197 = scalar_lea.vmem [#allocation4], 16
          %1198 = vst.msk [vmem:[%s1197] sm:$0xf] %vm1114, %v1192
          %1199 = vst.msk [vmem:[%s1197 + $0x4] sm:$0xf] %vm1114, %v1194
          %1200 = vrot.lane.b32.xlu0 %v1125, 64
          %v1201 = vpop.permute.xlu0 %1200
          %1202 = vrot.lane.b32.xlu0 %v1126, 64
          %v1203 = vpop.permute.xlu0 %1202
          %s1206 = scalar_lea.vmem [#allocation5], 16
          %1207 = vst.msk [vmem:[%s1206] sm:$0xf] %vm1114, %v1201
          %1208 = vst.msk [vmem:[%s1206 + $0x4] sm:$0xf] %vm1114, %v1203
          %1209 = vrot.lane.b32.xlu0 %v1112, 32
          %v1210 = vpop.permute.xlu0 %1209
          %1211 = vrot.lane.b32.xlu0 %v1113, 32
          %v1212 = vpop.permute.xlu0 %1211
          %s1215 = scalar_lea.vmem [#allocation2], 24
          %1216 = vst.msk [vmem:[%s1215] sm:$0xf] %vm1114, %v1210
          %1217 = vst.msk [vmem:[%s1215 + $0x4] sm:$0xf] %vm1114, %v1212
          %1218 = vrot.lane.b32.xlu0 %v1117, 32
          %v1219 = vpop.permute.xlu0 %1218
          %1220 = vrot.lane.b32.xlu0 %v1118, 32
          %v1221 = vpop.permute.xlu0 %1220
          %s1224 = scalar_lea.vmem [#allocation3], 24
          %1225 = vst.msk [vmem:[%s1224] sm:$0xf] %vm1114, %v1219
          %1226 = vst.msk [vmem:[%s1224 + $0x4] sm:$0xf] %vm1114, %v1221
          %1227 = vrot.lane.b32.xlu0 %v1121, 32
          %v1228 = vpop.permute.xlu0 %1227
          %1229 = vrot.lane.b32.xlu0 %v1122, 32
          %v1230 = vpop.permute.xlu0 %1229
          %s1233 = scalar_lea.vmem [#allocation4], 24
          %1234 = vst.msk [vmem:[%s1233] sm:$0xf] %vm1114, %v1228
          %1235 = vst.msk [vmem:[%s1233 + $0x4] sm:$0xf] %vm1114, %v1230
          %1236 = vrot.lane.b32.xlu0 %v1125, 32
          %v1237 = vpop.permute.xlu0 %1236
          %1238 = vrot.lane.b32.xlu0 %v1126, 32
          %v1239 = vpop.permute.xlu0 %1238
          %s1242 = scalar_lea.vmem [#allocation5], 24
          %1243 = vst.msk [vmem:[%s1242] sm:$0xf] %vm1114, %v1237
          %1244 = vst.msk [vmem:[%s1242 + $0x4] sm:$0xf] %vm1114, %v1239
        $region128: #{tpu_custom_call.1} parent=83 // pred_fallthru
          _
        %s1245 = smul.u32 %s45, 8
        %s1246 = scalar_lea.vmem %s753, %s1245
        %v1247 = vld [vmem:[%s1246] sm:$0xff]
        %s1248 = scalar_lea.vmem %s758, %s1245
        %v1249 = vld [vmem:[%s1248] sm:$0xff]
        %v1250 = vsub.f32 1.0, %v1249
        %v1251 = vld [vmem:[%s645] sm:$0x1]
        %vm1252 = vcmp.gt.f32.partialorder %v1251, 0.5
        %v1253 = vld [vmem:[#allocation11] sm:$0xf]
        %v1254 = vld [vmem:[#allocation11 + $0x4] sm:$0xf]
        %v1255 = vld [vmem:[#allocation11 + $0x8] sm:$0xf]
        %v1256 = vld [vmem:[#allocation11 + $0xc] sm:$0xf]
        %v1257 = vld [vmem:[#allocation11 + $0x10] sm:$0xf]
        %v1258 = vld [vmem:[#allocation11 + $0x14] sm:$0xf]
        %v1259 = vld [vmem:[#allocation11 + $0x18] sm:$0xf]
        %v1260 = vld [vmem:[#allocation11 + $0x1c] sm:$0xf]
        %v1261 = vld [vmem:[#allocation11 + $0x20] sm:$0xf]
        %v1262 = vld [vmem:[#allocation11 + $0x24] sm:$0xf]
        %v1263 = vld [vmem:[#allocation11 + $0x28] sm:$0xf]
        %v1264 = vld [vmem:[#allocation11 + $0x2c] sm:$0xf]
        %v1265 = vld [vmem:[#allocation11 + $0x30] sm:$0xf]
        %v1266 = vld [vmem:[#allocation11 + $0x34] sm:$0xf]
        %v1267 = vld [vmem:[#allocation11 + $0x38] sm:$0xf]
        %v1268 = vld [vmem:[#allocation11 + $0x3c] sm:$0xf]
        %v1269 = vpack.c.bf16 %v1247, %v1247
        %v1270 = vld [vmem:[%s5] sm:$0x1]
        %v1271 = vperm.slane %v1270, 0
        %v1288 = vunpack.c.l.b16 %v1253
        %v1289 = vunpack.c.l.b16 %v1254
        %v1290 = vunpack.c.l.b16 %v1255
        %v1291 = vunpack.c.l.b16 %v1256
        %v1292 = vunpack.c.l.b16 %v1257
        %v1293 = vunpack.c.l.b16 %v1258
        %v1294 = vunpack.c.l.b16 %v1259
        %v1295 = vunpack.c.l.b16 %v1260
        %v1296 = vunpack.c.l.b16 %v1261
        %v1297 = vunpack.c.l.b16 %v1262
        %v1298 = vunpack.c.l.b16 %v1263
        %v1299 = vunpack.c.l.b16 %v1264
        %v1300 = vunpack.c.l.b16 %v1265
        %v1301 = vunpack.c.l.b16 %v1266
        %v1302 = vunpack.c.l.b16 %v1267
        %v1303 = vunpack.c.l.b16 %v1268
        %v1304 = vpack.c.b16 %v1289, %v1288
        %v1305 = vpack.c.b16 %v1291, %v1290
        %v1306 = vpack.c.b16 %v1293, %v1292
        %v1307 = vpack.c.b16 %v1295, %v1294
        %v1308 = vpack.c.b16 %v1297, %v1296
        %v1309 = vpack.c.b16 %v1299, %v1298
        %v1310 = vpack.c.b16 %v1301, %v1300
        %v1311 = vpack.c.b16 %v1303, %v1302
        %1320 = vmatpush.bf16.msra.mxu0 %v1311
        %1321 = vmatpush.bf16.msra.mxu0 %v1310
        %1322 = vmatpush.bf16.msra.mxu0 %v1309
        %1323 = vmatpush.bf16.msra.mxu0 %v1308
        %1324 = vmatpush.bf16.msra.mxu0 %v1307
        %1325 = vmatpush.bf16.msra.mxu0 %v1306
        %1326 = vmatpush.bf16.msra.mxu0 %v1305
        %1327 = vmatpush.bf16.msra.mxu0 %v1304
        %1328 = vmatmul.bf16.gmra.mxu0 %v1269
        %v1329 = vpop.f32.mrf.mxu0
        %v1330 = vadd.f32 %v1271, %v1329
        %v1331 = vpop.f32.mrf.mxu0
        %1332 = vdwg.mxu0
        %v1333 = vmul.f32 %v1330, 0.17677669
        %1335 = vrot.lane.b32.xlu0 %v1333, 96
        %v1336 = vpop.permute.xlu0 %1335
        %1338 = vrot.lane.b32.xlu0 %v1333, 64
        %v1339 = vpop.permute.xlu0 %1338
        %1341 = vrot.lane.b32.xlu0 %v1333, 32
        %v1342 = vpop.permute.xlu0 %1341
        %v1344 = vpack.c.bf16 %v1333, %v1333
        %v1345 = vpack.c.bf16 %v1336, %v1336
        %v1346 = vpack.c.bf16 %v1339, %v1339
        %v1347 = vpack.c.bf16 %v1342, %v1342
        %v1348 = vld [vmem:[#allocation2] sm:$0xf]
        %v1349 = vld [vmem:[#allocation2 + $0x4] sm:$0xf]
        %v1350 = vld [vmem:[#allocation2 + $0x8] sm:$0xf]
        %v1351 = vld [vmem:[#allocation2 + $0xc] sm:$0xf]
        %v1352 = vld [vmem:[#allocation2 + $0x10] sm:$0xf]
        %v1353 = vld [vmem:[#allocation2 + $0x14] sm:$0xf]
        %v1354 = vld [vmem:[#allocation2 + $0x18] sm:$0xf]
        %v1355 = vld [vmem:[#allocation2 + $0x1c] sm:$0xf]
        %v1356 = vld [vmem:[#allocation17] sm:$0xff]
        %v1357 = vpack.c.bf16 %v1356, %v1356
        %v1362 = vunpack.c.l.b16 %v1344
        %v1363 = vunpack.c.l.b16 %v1345
        %v1364 = vunpack.c.l.b16 %v1346
        %v1365 = vunpack.c.l.b16 %v1347
        %v1366 = vpack.c.b16 %v1363, %v1362
        %v1367 = vpack.c.b16 %v1365, %v1364
        %vm1368 = vcmask 261120
        %v1370 = vsel %vm1368, %v1366, 0
        %v1373 = vsel %vm1368, %v1367, 0
        %v1376 = vsel %vm1368, %v1357, 0
        %1378 = vmatpush.bf16.xpose.msra.mxu0 0
        %1379 = vmatpush.bf16.xpose.msra.mxu0 0
        %1380 = vmatpush.bf16.xpose.msra.mxu0 0
        %1381 = vmatpush.bf16.xpose.msra.mxu0 0
        %1382 = vmatpush.bf16.xpose.msra.mxu0 0
        %1383 = vmatpush.bf16.xpose.msra.mxu0 0
        %1384 = vmatpush.bf16.xpose.msra.mxu0 0
        %1385 = vmatpush.bf16.xpose.msra.mxu0 %v1376
        %1386 = vmatmul.bf16.gmra.mxu0 %v1370
        %v1387 = vpop.f32.mrf.mxu0
        %v1388 = vadd.f32 0.0, %v1387
        %v1389 = vpop.f32.mrf.mxu0
        %v1390 = vadd.f32 0.0, %v1389
        %1391 = vmatmul.bf16.gmra.mxu0 %v1373
        %v1392 = vpop.f32.mrf.mxu0
        %v1393 = vadd.f32 0.0, %v1392
        %v1394 = vpop.f32.mrf.mxu0
        %v1395 = vadd.f32 0.0, %v1394
        %1396 = vdwg.mxu0
        %v1397 = vlaneseq
        %v1398 = vshrl.u32 %v1397, 7
        %v1399 = vstv %s1245
        %v1400 = vadd.s32 %v1399, %v1398
        %v1401 = vlaneseq
        %v1402 = vand.u32 %v1401, 127
        %v1403 = vsub.s32 %v1402, %v1400
        %vm1404 = vcmp.gt.s32.totalorder %v1403, 4294967292
        %v1405 = vsel %vm1404, %v1403, 4294967292
        %vm1406 = vcmp.lt.s32.totalorder %v1405, 4
        %v1407 = vsel %vm1406, %v1405, 4
        %v1408 = vadd.s32 %v1407, 4
        %vm1409 = vcmp.gt.s32.totalorder %v1402, %v1400
        %vm1410 = vcmp.eq.s32.totalorder %v1408, 0
        %v1411 = vsel %vm1410, 1, 0
        %v1412 = vcvt.s32.f32 %v1411
        %1414 = vset.pattern.permute.xlu0 0
        %1415 = vperm.xlu0 %1414, %v1388
        %v1416 = vpop.permute.xlu0 %1415
        %1419 = vset.pattern.permute.xlu0 0
        %1420 = vperm.xlu0 %1419, %v1390
        %v1421 = vpop.permute.xlu0 %1420
        %1424 = vset.pattern.permute.xlu0 0
        %1425 = vperm.xlu0 %1424, %v1393
        %v1426 = vpop.permute.xlu0 %1425
        %1429 = vset.pattern.permute.xlu0 0
        %1430 = vperm.xlu0 %1429, %v1395
        %v1431 = vpop.permute.xlu0 %1430
        %v1433 = vmul.f32 %v1416, %v1412
        %v1434 = vmul.f32 %v1421, %v1412
        %v1435 = vmul.f32 %v1426, %v1412
        %v1436 = vmul.f32 %v1431, %v1412
        %v1439 = vunpack.c.l.b16 %v1348
        %v1440 = vunpack.c.l.b16 %v1349
        %v1441 = vpack.c.b16 %v1440, %v1439
        %v1443 = vsel %vm1368, %v1344, 0
        %v1446 = vsel %vm1368, %v1441, 0
        %1448 = vmatpush.bf16.xpose.msra.mxu0 0
        %1449 = vmatpush.bf16.xpose.msra.mxu0 0
        %1450 = vmatpush.bf16.xpose.msra.mxu0 0
        %1451 = vmatpush.bf16.xpose.msra.mxu0 0
        %1452 = vmatpush.bf16.xpose.msra.mxu0 0
        %1453 = vmatpush.bf16.xpose.msra.mxu0 0
        %1454 = vmatpush.bf16.xpose.msra.mxu0 0
        %1455 = vmatpush.bf16.xpose.msra.mxu0 %v1446
        %1456 = vmatmul.bf16.gmra.mxu0 %v1443
        %v1457 = vpop.f32.mrf.mxu0
        %v1458 = vadd.f32 %v1433, %v1457
        %v1459 = vpop.f32.mrf.mxu0
        %1460 = vdwg.mxu0
        %v1463 = vunpack.c.l.b16 %v1350
        %v1464 = vunpack.c.l.b16 %v1351
        %v1465 = vpack.c.b16 %v1464, %v1463
        %v1467 = vsel %vm1368, %v1345, 0
        %v1470 = vsel %vm1368, %v1465, 0
        %1472 = vmatpush.bf16.xpose.msra.mxu0 0
        %1473 = vmatpush.bf16.xpose.msra.mxu0 0
        %1474 = vmatpush.bf16.xpose.msra.mxu0 0
        %1475 = vmatpush.bf16.xpose.msra.mxu0 0
        %1476 = vmatpush.bf16.xpose.msra.mxu0 0
        %1477 = vmatpush.bf16.xpose.msra.mxu0 0
        %1478 = vmatpush.bf16.xpose.msra.mxu0 0
        %1479 = vmatpush.bf16.xpose.msra.mxu0 %v1470
        %1480 = vmatmul.bf16.gmra.mxu0 %v1467
        %v1481 = vpop.f32.mrf.mxu0
        %v1482 = vadd.f32 %v1434, %v1481
        %v1483 = vpop.f32.mrf.mxu0
        %1484 = vdwg.mxu0
        %v1487 = vunpack.c.l.b16 %v1352
        %v1488 = vunpack.c.l.b16 %v1353
        %v1489 = vpack.c.b16 %v1488, %v1487
        %v1491 = vsel %vm1368, %v1346, 0
        %v1494 = vsel %vm1368, %v1489, 0
        %1496 = vmatpush.bf16.xpose.msra.mxu0 0
        %1497 = vmatpush.bf16.xpose.msra.mxu0 0
        %1498 = vmatpush.bf16.xpose.msra.mxu0 0
        %1499 = vmatpush.bf16.xpose.msra.mxu0 0
        %1500 = vmatpush.bf16.xpose.msra.mxu0 0
        %1501 = vmatpush.bf16.xpose.msra.mxu0 0
        %1502 = vmatpush.bf16.xpose.msra.mxu0 0
        %1503 = vmatpush.bf16.xpose.msra.mxu0 %v1494
        %1504 = vmatmul.bf16.gmra.mxu0 %v1491
        %v1505 = vpop.f32.mrf.mxu0
        %v1506 = vadd.f32 %v1435, %v1505
        %v1507 = vpop.f32.mrf.mxu0
        %1508 = vdwg.mxu0
        %v1511 = vunpack.c.l.b16 %v1354
        %v1512 = vunpack.c.l.b16 %v1355
        %v1513 = vpack.c.b16 %v1512, %v1511
        %v1515 = vsel %vm1368, %v1347, 0
        %v1518 = vsel %vm1368, %v1513, 0
        %1520 = vmatpush.bf16.xpose.msra.mxu0 0
        %1521 = vmatpush.bf16.xpose.msra.mxu0 0
        %1522 = vmatpush.bf16.xpose.msra.mxu0 0
        %1523 = vmatpush.bf16.xpose.msra.mxu0 0
        %1524 = vmatpush.bf16.xpose.msra.mxu0 0
        %1525 = vmatpush.bf16.xpose.msra.mxu0 0
        %1526 = vmatpush.bf16.xpose.msra.mxu0 0
        %1527 = vmatpush.bf16.xpose.msra.mxu0 %v1518
        %1528 = vmatmul.bf16.gmra.mxu0 %v1515
        %v1529 = vpop.f32.mrf.mxu0
        %v1530 = vadd.f32 %v1436, %v1529
        %v1531 = vpop.f32.mrf.mxu0
        %1532 = vdwg.mxu0
        %vm1533 = vcmp.eq.s32.totalorder %v1408, 1
        %v1534 = vsel %vm1533, 1, 0
        %v1535 = vcvt.s32.f32 %v1534
        %1536 = vset.pattern.permute.xlu0 1
        %1537 = vperm.xlu0 %1536, %v1388
        %v1538 = vpop.permute.xlu0 %1537
        %1540 = vset.pattern.permute.xlu0 1
        %1541 = vperm.xlu0 %1540, %v1390
        %v1542 = vpop.permute.xlu0 %1541
        %1544 = vset.pattern.permute.xlu0 1
        %1545 = vperm.xlu0 %1544, %v1393
        %v1546 = vpop.permute.xlu0 %1545
        %1548 = vset.pattern.permute.xlu0 1
        %1549 = vperm.xlu0 %1548, %v1395
        %v1550 = vpop.permute.xlu0 %1549
        %v1552 = vmul.f32 %v1538, %v1535
        %v1553 = vmul.f32 %v1542, %v1535
        %v1554 = vmul.f32 %v1546, %v1535
        %v1555 = vmul.f32 %v1550, %v1535
        %v1556 = vadd.f32 %v1458, %v1552
        %v1557 = vadd.f32 %v1482, %v1553
        %v1558 = vadd.f32 %v1506, %v1554
        %v1559 = vadd.f32 %v1530, %v1555
        %vm1560 = vcmp.eq.s32.totalorder %v1408, 2
        %v1561 = vsel %vm1560, 1, 0
        %v1562 = vcvt.s32.f32 %v1561
        %1563 = vset.pattern.permute.xlu0 2
        %1564 = vperm.xlu0 %1563, %v1388
        %v1565 = vpop.permute.xlu0 %1564
        %1567 = vset.pattern.permute.xlu0 2
        %1568 = vperm.xlu0 %1567, %v1390
        %v1569 = vpop.permute.xlu0 %1568
        %1571 = vset.pattern.permute.xlu0 2
        %1572 = vperm.xlu0 %1571, %v1393
        %v1573 = vpop.permute.xlu0 %1572
        %1575 = vset.pattern.permute.xlu0 2
        %1576 = vperm.xlu0 %1575, %v1395
        %v1577 = vpop.permute.xlu0 %1576
        %v1579 = vmul.f32 %v1565, %v1562
        %v1580 = vmul.f32 %v1569, %v1562
        %v1581 = vmul.f32 %v1573, %v1562
        %v1582 = vmul.f32 %v1577, %v1562
        %v1583 = vadd.f32 %v1556, %v1579
        %v1584 = vadd.f32 %v1557, %v1580
        %v1585 = vadd.f32 %v1558, %v1581
        %v1586 = vadd.f32 %v1559, %v1582
        %vm1587 = vcmp.eq.s32.totalorder %v1408, 3
        %v1588 = vsel %vm1587, 1, 0
        %v1589 = vcvt.s32.f32 %v1588
        %1590 = vset.pattern.permute.xlu0 3
        %1591 = vperm.xlu0 %1590, %v1388
        %v1592 = vpop.permute.xlu0 %1591
        %1594 = vset.pattern.permute.xlu0 3
        %1595 = vperm.xlu0 %1594, %v1390
        %v1596 = vpop.permute.xlu0 %1595
        %1598 = vset.pattern.permute.xlu0 3
        %1599 = vperm.xlu0 %1598, %v1393
        %v1600 = vpop.permute.xlu0 %1599
        %1602 = vset.pattern.permute.xlu0 3
        %1603 = vperm.xlu0 %1602, %v1395
        %v1604 = vpop.permute.xlu0 %1603
        %v1606 = vmul.f32 %v1592, %v1589
        %v1607 = vmul.f32 %v1596, %v1589
        %v1608 = vmul.f32 %v1600, %v1589
        %v1609 = vmul.f32 %v1604, %v1589
        %v1610 = vadd.f32 %v1583, %v1606
        %v1611 = vadd.f32 %v1584, %v1607
        %v1612 = vadd.f32 %v1585, %v1608
        %v1613 = vadd.f32 %v1586, %v1609
        %vm1614 = vcmp.eq.s32.totalorder %v1408, 4
        %v1615 = vsel %vm1614, 1, 0
        %v1616 = vcvt.s32.f32 %v1615
        %1617 = vset.pattern.permute.xlu0 4
        %1618 = vperm.xlu0 %1617, %v1388
        %v1619 = vpop.permute.xlu0 %1618
        %1621 = vset.pattern.permute.xlu0 4
        %1622 = vperm.xlu0 %1621, %v1390
        %v1623 = vpop.permute.xlu0 %1622
        %1625 = vset.pattern.permute.xlu0 4
        %1626 = vperm.xlu0 %1625, %v1393
        %v1627 = vpop.permute.xlu0 %1626
        %1629 = vset.pattern.permute.xlu0 4
        %1630 = vperm.xlu0 %1629, %v1395
        %v1631 = vpop.permute.xlu0 %1630
        %v1633 = vmul.f32 %v1619, %v1616
        %v1634 = vmul.f32 %v1623, %v1616
        %v1635 = vmul.f32 %v1627, %v1616
        %v1636 = vmul.f32 %v1631, %v1616
        %v1637 = vadd.f32 %v1610, %v1633
        %v1638 = vadd.f32 %v1611, %v1634
        %v1639 = vadd.f32 %v1612, %v1635
        %v1640 = vadd.f32 %v1613, %v1636
        %v1641 = vsel %vm1409, 1, 0
        %vm1642 = vcmp.eq.s32.totalorder %v1641, 1
        %v1643 = vsel %vm1642, -1e+30, %v1637
        %v1644 = vsel %vm1642, -1e+30, %v1638
        %v1645 = vsel %vm1642, -1e+30, %v1639
        %v1646 = vsel %vm1642, -1e+30, %v1640
        %vm1647 = vcmask 130048
        %v1648 = vsel %vm1647, %v1643, -inf
        %1649 = vmax.xlane.f32.xlu0 %v1648
        %v1650 = vpop.xlane.xlu0 %1649
        %v1651 = vsel %vm1647, %v1644, -inf
        %1652 = vmax.xlane.f32.xlu0 %v1651
        %v1653 = vpop.xlane.xlu0 %1652
        %v1654 = vsel %vm1647, %v1645, -inf
        %1655 = vmax.xlane.f32.xlu0 %v1654
        %v1656 = vpop.xlane.xlu0 %1655
        %v1657 = vsel %vm1647, %v1646, -inf
        %1658 = vmax.xlane.f32.xlu0 %v1657
        %v1659 = vpop.xlane.xlu0 %1658
        %v1660 = vsub.f32 %v1643, %v1650
        %v1661 = vsub.f32 %v1644, %v1653
        %v1662 = vsub.f32 %v1645, %v1656
        %v1663 = vsub.f32 %v1646, %v1659
        %v1664 = vmul.f32 %v1660, 1.442695
        %v1665 = vpow.pop %v1664
        %v1666 = vmul.f32 %v1661, 1.442695
        %v1667 = vpow.pop %v1666
        %v1668 = vmul.f32 %v1662, 1.442695
        %v1669 = vpow.pop %v1668
        %v1670 = vmul.f32 %v1663, 1.442695
        %v1671 = vpow.pop %v1670
        %v1672 = vsel %vm1647, %v1665, 0.0
        %1673 = vadd.xlane.f32.xlu0 %v1672
        %v1674 = vpop.xlane.xlu0 %1673
        %v1675 = vsel %vm1647, %v1667, 0.0
        %1676 = vadd.xlane.f32.xlu0 %v1675
        %v1677 = vpop.xlane.xlu0 %1676
        %v1678 = vsel %vm1647, %v1669, 0.0
        %1679 = vadd.xlane.f32.xlu0 %v1678
        %v1680 = vpop.xlane.xlu0 %1679
        %v1681 = vsel %vm1647, %v1671, 0.0
        %1682 = vadd.xlane.f32.xlu0 %v1681
        %v1683 = vpop.xlane.xlu0 %1682
        %v1684 = vrcp.pop %v1674
        %v1685 = vrcp.pop %v1677
        %v1686 = vrcp.pop %v1680
        %v1687 = vrcp.pop %v1683
        %v1688 = vmul.f32 %v1665, %v1684
        %v1689 = vmul.f32 %v1667, %v1685
        %v1690 = vmul.f32 %v1669, %v1686
        %v1691 = vmul.f32 %v1671, %v1687
        %v1692 = vpack.c.bf16 %v1688, %v1688
        %v1693 = vpack.c.bf16 %v1689, %v1689
        %v1694 = vpack.c.bf16 %v1690, %v1690
        %v1695 = vpack.c.bf16 %v1691, %v1691
        %v1696 = vld [vmem:[#allocation3] sm:$0xf]
        %v1697 = vld [vmem:[#allocation3 + $0x4] sm:$0xf]
        %v1698 = vld [vmem:[#allocation3 + $0x8] sm:$0xf]
        %v1699 = vld [vmem:[#allocation3 + $0xc] sm:$0xf]
        %v1700 = vld [vmem:[#allocation3 + $0x10] sm:$0xf]
        %v1701 = vld [vmem:[#allocation3 + $0x14] sm:$0xf]
        %v1702 = vld [vmem:[#allocation3 + $0x18] sm:$0xf]
        %v1703 = vld [vmem:[#allocation3 + $0x1c] sm:$0xf]
        %vm1704 = vcmp.eq.s32.totalorder %v1411, 1
        %v1705 = vsel %vm1704, %v1688, 0.0
        %v1706 = vsel %vm1704, %v1689, 0.0
        %v1707 = vsel %vm1704, %v1690, 0.0
        %v1708 = vsel %vm1704, %v1691, 0.0
        %v1709 = vsel %vm1647, %v1705, 0.0
        %1710 = vadd.xlane.f32.xlu0 %v1709
        %v1711 = vpop.xlane.xlu0 %1710
        %v1712 = vsel %vm1647, %v1706, 0.0
        %1713 = vadd.xlane.f32.xlu0 %v1712
        %v1714 = vpop.xlane.xlu0 %1713
        %v1715 = vsel %vm1647, %v1707, 0.0
        %1716 = vadd.xlane.f32.xlu0 %v1715
        %v1717 = vpop.xlane.xlu0 %1716
        %v1718 = vsel %vm1647, %v1708, 0.0
        %1719 = vadd.xlane.f32.xlu0 %v1718
        %v1720 = vpop.xlane.xlu0 %1719
        %vm1721 = vcmp.eq.s32.totalorder %v1534, 1
        %v1722 = vsel %vm1721, %v1688, 0.0
        %v1723 = vsel %vm1721, %v1689, 0.0
        %v1724 = vsel %vm1721, %v1690, 0.0
        %v1725 = vsel %vm1721, %v1691, 0.0
        %v1726 = vsel %vm1647, %v1722, 0.0
        %1727 = vadd.xlane.f32.xlu0 %v1726
        %v1728 = vpop.xlane.xlu0 %1727
        %v1729 = vsel %vm1647, %v1723, 0.0
        %1730 = vadd.xlane.f32.xlu0 %v1729
        %v1731 = vpop.xlane.xlu0 %1730
        %v1732 = vsel %vm1647, %v1724, 0.0
        %1733 = vadd.xlane.f32.xlu0 %v1732
        %v1734 = vpop.xlane.xlu0 %1733
        %v1735 = vsel %vm1647, %v1725, 0.0
        %1736 = vadd.xlane.f32.xlu0 %v1735
        %v1737 = vpop.xlane.xlu0 %1736
        %vm1738 = vcmp.eq.s32.totalorder %v1561, 1
        %v1739 = vsel %vm1738, %v1688, 0.0
        %v1740 = vsel %vm1738, %v1689, 0.0
        %v1741 = vsel %vm1738, %v1690, 0.0
        %v1742 = vsel %vm1738, %v1691, 0.0
        %v1743 = vsel %vm1647, %v1739, 0.0
        %1744 = vadd.xlane.f32.xlu0 %v1743
        %v1745 = vpop.xlane.xlu0 %1744
        %v1746 = vsel %vm1647, %v1740, 0.0
        %1747 = vadd.xlane.f32.xlu0 %v1746
        %v1748 = vpop.xlane.xlu0 %1747
        %v1749 = vsel %vm1647, %v1741, 0.0
        %1750 = vadd.xlane.f32.xlu0 %v1749
        %v1751 = vpop.xlane.xlu0 %1750
        %v1752 = vsel %vm1647, %v1742, 0.0
        %1753 = vadd.xlane.f32.xlu0 %v1752
        %v1754 = vpop.xlane.xlu0 %1753
        %vm1755 = vcmp.eq.s32.totalorder %v1588, 1
        %v1756 = vsel %vm1755, %v1688, 0.0
        %v1757 = vsel %vm1755, %v1689, 0.0
        %v1758 = vsel %vm1755, %v1690, 0.0
        %v1759 = vsel %vm1755, %v1691, 0.0
        %v1760 = vsel %vm1647, %v1756, 0.0
        %1761 = vadd.xlane.f32.xlu0 %v1760
        %v1762 = vpop.xlane.xlu0 %1761
        %v1763 = vsel %vm1647, %v1757, 0.0
        %1764 = vadd.xlane.f32.xlu0 %v1763
        %v1765 = vpop.xlane.xlu0 %1764
        %v1766 = vsel %vm1647, %v1758, 0.0
        %1767 = vadd.xlane.f32.xlu0 %v1766
        %v1768 = vpop.xlane.xlu0 %1767
        %v1769 = vsel %vm1647, %v1759, 0.0
        %1770 = vadd.xlane.f32.xlu0 %v1769
        %v1771 = vpop.xlane.xlu0 %1770
        %vm1772 = vcmp.eq.s32.totalorder %v1615, 1
        %v1773 = vsel %vm1772, %v1688, 0.0
        %v1774 = vsel %vm1772, %v1689, 0.0
        %v1775 = vsel %vm1772, %v1690, 0.0
        %v1776 = vsel %vm1772, %v1691, 0.0
        %v1777 = vsel %vm1647, %v1773, 0.0
        %1778 = vadd.xlane.f32.xlu0 %v1777
        %v1779 = vpop.xlane.xlu0 %1778
        %v1780 = vsel %vm1647, %v1774, 0.0
        %1781 = vadd.xlane.f32.xlu0 %v1780
        %v1782 = vpop.xlane.xlu0 %1781
        %v1783 = vsel %vm1647, %v1775, 0.0
        %1784 = vadd.xlane.f32.xlu0 %v1783
        %v1785 = vpop.xlane.xlu0 %1784
        %v1786 = vsel %vm1647, %v1776, 0.0
        %1787 = vadd.xlane.f32.xlu0 %v1786
        %v1788 = vpop.xlane.xlu0 %1787
        %vm1789 = vcmask 7168
        %v1790 = vsel %vm1789, %v1711, %v1728
        %v1791 = vsel %vm1789, %v1714, %v1731
        %v1792 = vsel %vm1789, %v1717, %v1734
        %v1793 = vsel %vm1789, %v1720, %v1737
        %vm1794 = vcmask 15360
        %v1795 = vsel %vm1794, %v1790, %v1745
        %v1796 = vsel %vm1794, %v1791, %v1748
        %v1797 = vsel %vm1794, %v1792, %v1751
        %v1798 = vsel %vm1794, %v1793, %v1754
        %vm1799 = vcmask 23552
        %v1800 = vsel %vm1799, %v1795, %v1762
        %v1801 = vsel %vm1799, %v1796, %v1765
        %v1802 = vsel %vm1799, %v1797, %v1768
        %v1803 = vsel %vm1799, %v1798, %v1771
        %vm1804 = vcmask 31744
        %v1805 = vsel %vm1804, %v1800, %v1779
        %v1806 = vsel %vm1804, %v1801, %v1782
        %v1807 = vsel %vm1804, %v1802, %v1785
        %v1808 = vsel %vm1804, %v1803, %v1788
        %v1809 = vld [vmem:[#allocation18] sm:$0xff]
        %v1810 = vpack.c.bf16 %v1809, %v1809
        %v1811 = vpack.c.bf16 %v1806, %v1805
        %v1812 = vpack.c.bf16 %v1808, %v1807
        %vm1813 = vcmask 39936
        %v1815 = vsel %vm1813, %v1811, 0
        %v1818 = vsel %vm1813, %v1812, 0
        %vm1820 = vcmask 1041408
        %vm1821 = vcmask 1042432
        %v1822 = vsel %vm1820, 4294967295, 65535
        %v1823 = vsel %vm1821, %v1822, 0
        %v1825 = vand.u32 %v1810, %v1823
        %1827 = vmatpush.bf16.msra.mxu0 0
        %1828 = vmatpush.bf16.msra.mxu0 0
        %1829 = vmatpush.bf16.msra.mxu0 0
        %1830 = vmatpush.bf16.msra.mxu0 0
        %1831 = vmatpush.bf16.msra.mxu0 0
        %1832 = vmatpush.bf16.msra.mxu0 0
        %1833 = vmatpush.bf16.msra.mxu0 0
        %1834 = vmatpush.bf16.msra.mxu0 %v1825
        %1835 = vmatmul.bf16.gmra.mxu0 %v1815
        %v1836 = vpop.f32.mrf.mxu0
        %v1837 = vadd.f32 0.0, %v1836
        %v1838 = vpop.f32.mrf.mxu0
        %v1839 = vadd.f32 0.0, %v1838
        %1840 = vmatmul.bf16.gmra.mxu0 %v1818
        %v1841 = vpop.f32.mrf.mxu0
        %v1842 = vadd.f32 0.0, %v1841
        %v1843 = vpop.f32.mrf.mxu0
        %v1844 = vadd.f32 0.0, %v1843
        %1845 = vdwg.mxu0
        %v1848 = vunpack.c.l.b16 %v1696
        %v1849 = vunpack.c.l.b16 %v1697
        %v1850 = vpack.c.b16 %v1849, %v1848
        %v1853 = vsel %vm1647, %v1692, 0
        %1855 = vmatpush.bf16.msra.mxu0 0
        %1856 = vmatpush.bf16.msra.mxu0 0
        %1857 = vmatpush.bf16.msra.mxu0 0
        %1858 = vmatpush.bf16.msra.mxu0 0
        %1859 = vmatpush.bf16.msra.mxu0 0
        %1860 = vmatpush.bf16.msra.mxu0 0
        %1861 = vmatpush.bf16.msra.mxu0 0
        %1862 = vmatpush.bf16.msra.mxu0 %v1850
        %1863 = vmatmul.bf16.gmra.mxu0 %v1853
        %v1864 = vpop.f32.mrf.mxu0
        %v1865 = vadd.f32 %v1837, %v1864
        %v1866 = vpop.f32.mrf.mxu0
        %1867 = vdwg.mxu0
        %v1870 = vunpack.c.l.b16 %v1698
        %v1871 = vunpack.c.l.b16 %v1699
        %v1872 = vpack.c.b16 %v1871, %v1870
        %v1875 = vsel %vm1647, %v1693, 0
        %1877 = vmatpush.bf16.msra.mxu0 0
        %1878 = vmatpush.bf16.msra.mxu0 0
        %1879 = vmatpush.bf16.msra.mxu0 0
        %1880 = vmatpush.bf16.msra.mxu0 0
        %1881 = vmatpush.bf16.msra.mxu0 0
        %1882 = vmatpush.bf16.msra.mxu0 0
        %1883 = vmatpush.bf16.msra.mxu0 0
        %1884 = vmatpush.bf16.msra.mxu0 %v1872
        %1885 = vmatmul.bf16.gmra.mxu0 %v1875
        %v1886 = vpop.f32.mrf.mxu0
        %v1887 = vadd.f32 %v1839, %v1886
        %v1888 = vpop.f32.mrf.mxu0
        %1889 = vdwg.mxu0
        %v1892 = vunpack.c.l.b16 %v1700
        %v1893 = vunpack.c.l.b16 %v1701
        %v1894 = vpack.c.b16 %v1893, %v1892
        %v1897 = vsel %vm1647, %v1694, 0
        %1899 = vmatpush.bf16.msra.mxu0 0
        %1900 = vmatpush.bf16.msra.mxu0 0
        %1901 = vmatpush.bf16.msra.mxu0 0
        %1902 = vmatpush.bf16.msra.mxu0 0
        %1903 = vmatpush.bf16.msra.mxu0 0
        %1904 = vmatpush.bf16.msra.mxu0 0
        %1905 = vmatpush.bf16.msra.mxu0 0
        %1906 = vmatpush.bf16.msra.mxu0 %v1894
        %1907 = vmatmul.bf16.gmra.mxu0 %v1897
        %v1908 = vpop.f32.mrf.mxu0
        %v1909 = vadd.f32 %v1842, %v1908
        %v1910 = vpop.f32.mrf.mxu0
        %1911 = vdwg.mxu0
        %v1914 = vunpack.c.l.b16 %v1702
        %v1915 = vunpack.c.l.b16 %v1703
        %v1916 = vpack.c.b16 %v1915, %v1914
        %v1919 = vsel %vm1647, %v1695, 0
        %1921 = vmatpush.bf16.msra.mxu0 0
        %1922 = vmatpush.bf16.msra.mxu0 0
        %1923 = vmatpush.bf16.msra.mxu0 0
        %1924 = vmatpush.bf16.msra.mxu0 0
        %1925 = vmatpush.bf16.msra.mxu0 0
        %1926 = vmatpush.bf16.msra.mxu0 0
        %1927 = vmatpush.bf16.msra.mxu0 0
        %1928 = vmatpush.bf16.msra.mxu0 %v1916
        %1929 = vmatmul.bf16.gmra.mxu0 %v1919
        %v1930 = vpop.f32.mrf.mxu0
        %v1931 = vadd.f32 %v1844, %v1930
        %v1932 = vpop.f32.mrf.mxu0
        %1933 = vdwg.mxu0
        %1935 = vrot.lane.b32.xlu0 %v1887, 32
        %v1936 = vpop.permute.xlu0 %1935
        %1939 = vrot.lane.b32.xlu0 %v1909, 64
        %v1940 = vpop.permute.xlu0 %1939
        %1943 = vrot.lane.b32.xlu0 %v1931, 96
        %v1944 = vpop.permute.xlu0 %1943
        %v1946 = vsel %vm1368, %v1865, %v1936
        %vm1947 = vcmask 523264
        %v1948 = vsel %vm1947, %v1946, %v1940
        %vm1949 = vcmask 785408
        %v1950 = vsel %vm1949, %v1948, %v1944
        %s1951 = scalar_lea.vmem [#allocation11], 192
        %v1952 = vld [vmem:[%s1951] sm:$0xf]
        %v1953 = vld [vmem:[%s1951 + $0x4] sm:$0xf]
        %v1954 = vld [vmem:[%s1951 + $0x8] sm:$0xf]
        %v1955 = vld [vmem:[%s1951 + $0xc] sm:$0xf]
        %v1956 = vld [vmem:[%s1951 + $0x10] sm:$0xf]
        %v1957 = vld [vmem:[%s1951 + $0x14] sm:$0xf]
        %v1958 = vld [vmem:[%s1951 + $0x18] sm:$0xf]
        %v1959 = vld [vmem:[%s1951 + $0x1c] sm:$0xf]
        %v1960 = vld [vmem:[%s1951 + $0x20] sm:$0xf]
        %v1961 = vld [vmem:[%s1951 + $0x24] sm:$0xf]
        %v1962 = vld [vmem:[%s1951 + $0x28] sm:$0xf]
        %v1963 = vld [vmem:[%s1951 + $0x2c] sm:$0xf]
        %v1964 = vld [vmem:[%s1951 + $0x30] sm:$0xf]
        %v1965 = vld [vmem:[%s1951 + $0x34] sm:$0xf]
        %v1966 = vld [vmem:[%s1951 + $0x38] sm:$0xf]
        %v1967 = vld [vmem:[%s1951 + $0x3c] sm:$0xf]
        %v1968 = vpack.c.bf16 %v1950, %v1950
        %v1969 = vld [vmem:[%s5 + $0x3] sm:$0x1]
        %v1970 = vperm.slane %v1969, 0
        %v1987 = vunpack.c.l.b16 %v1952
        %v1988 = vunpack.c.l.b16 %v1953
        %v1989 = vunpack.c.l.b16 %v1954
        %v1990 = vunpack.c.l.b16 %v1955
        %v1991 = vunpack.c.l.b16 %v1956
        %v1992 = vunpack.c.l.b16 %v1957
        %v1993 = vunpack.c.l.b16 %v1958
        %v1994 = vunpack.c.l.b16 %v1959
        %v1995 = vunpack.c.l.b16 %v1960
        %v1996 = vunpack.c.l.b16 %v1961
        %v1997 = vunpack.c.l.b16 %v1962
        %v1998 = vunpack.c.l.b16 %v1963
        %v1999 = vunpack.c.l.b16 %v1964
        %v2000 = vunpack.c.l.b16 %v1965
        %v2001 = vunpack.c.l.b16 %v1966
        %v2002 = vunpack.c.l.b16 %v1967
        %v2003 = vpack.c.b16 %v1988, %v1987
        %v2004 = vpack.c.b16 %v1990, %v1989
        %v2005 = vpack.c.b16 %v1992, %v1991
        %v2006 = vpack.c.b16 %v1994, %v1993
        %v2007 = vpack.c.b16 %v1996, %v1995
        %v2008 = vpack.c.b16 %v1998, %v1997
        %v2009 = vpack.c.b16 %v2000, %v1999
        %v2010 = vpack.c.b16 %v2002, %v2001
        %2019 = vmatpush.bf16.msra.mxu0 %v2010
        %2020 = vmatpush.bf16.msra.mxu0 %v2009
        %2021 = vmatpush.bf16.msra.mxu0 %v2008
        %2022 = vmatpush.bf16.msra.mxu0 %v2007
        %2023 = vmatpush.bf16.msra.mxu0 %v2006
        %2024 = vmatpush.bf16.msra.mxu0 %v2005
        %2025 = vmatpush.bf16.msra.mxu0 %v2004
        %2026 = vmatpush.bf16.msra.mxu0 %v2003
        %2027 = vmatmul.bf16.gmra.mxu0 %v1968
        %v2028 = vpop.f32.mrf.mxu0
        %v2029 = vadd.f32 %v1970, %v2028
        %v2030 = vpop.f32.mrf.mxu0
        %2031 = vdwg.mxu0
        %2033 = vset.pattern.permute.xlu0 0
        %2034 = vperm.xlu0 %2033, %v1250
        %v2035 = vpop.permute.xlu0 %2034
        %v2037 = vmul.f32 %v2029, %v2035
        %v2038 = vadd.f32 %v2037, %v1247
        %v2039 = vld [vmem:[#allocation14] sm:$0x1]
        %v2040 = vld [vmem:[#allocation15] sm:$0x1]
        %2041 = vadd.xlane.f32.xlu0 %v2038
        %v2042 = vpop.xlane.xlu0 %2041
        %v2043 = vrcp.pop 128.0
        %v2044 = vmul.f32 128.0, %v2043
        %v2045 = vsub.f32 1.0, %v2044
        %v2046 = vmul.f32 %v2043, %v2045
        %v2047 = vadd.f32 %v2043, %v2046
        %vm2048 = vweird.f32 %v2043
        %v2049 = vsel %vm2048, %v2043, %v2047
        %v2050 = vmul.f32 %v2042, %v2049
        %v2051 = vsub.f32 %v2038, %v2050
        %v2052 = vmul.f32 %v2051, %v2051
        %2053 = vadd.xlane.f32.xlu0 %v2052
        %v2054 = vpop.xlane.xlu0 %2053
        %v2055 = vmul.f32 %v2054, %v2049
        %v2056 = vadd.f32 %v2055, 1e-06
        %v2057 = vrsqrt.pop %v2056
        %v2058 = vmul.f32 %v2057, %v2056
        %v2059 = vmul.f32 %v2058, %v2057
        %v2060 = vmul.f32 0.5, %v2059
        %v2061 = vsub.f32 1.5, %v2060
        %v2062 = vmul.f32 %v2057, %v2061
        %vm2063 = vweird.f32 %v2056
        %vm2064 = vweird.f32 %v2057
        %vm2065 = vmor %vm2063, %vm2064
        %v2066 = vsel %vm2065, %v2057, %v2062
        %v2067 = vmul.f32 %v2051, %v2066
        %v2068 = vperm.slane %v2039, 0
        %v2069 = vmul.f32 %v2067, %v2068
        %v2070 = vperm.slane %v2040, 0
        %v2071 = vadd.f32 %v2069, %v2070
        %v2072 = vld [vmem:[#allocation12] sm:$0xf]
        %v2073 = vld [vmem:[#allocation12 + $0x4] sm:$0xf]
        %v2074 = vld [vmem:[#allocation12 + $0x8] sm:$0xf]
        %v2075 = vld [vmem:[#allocation12 + $0xc] sm:$0xf]
        %v2076 = vld [vmem:[#allocation12 + $0x10] sm:$0xf]
        %v2077 = vld [vmem:[#allocation12 + $0x14] sm:$0xf]
        %v2078 = vld [vmem:[#allocation12 + $0x18] sm:$0xf]
        %v2079 = vld [vmem:[#allocation12 + $0x1c] sm:$0xf]
        %v2080 = vld [vmem:[#allocation12 + $0x20] sm:$0xf]
        %v2081 = vld [vmem:[#allocation12 + $0x24] sm:$0xf]
        %v2082 = vld [vmem:[#allocation12 + $0x28] sm:$0xf]
        %v2083 = vld [vmem:[#allocation12 + $0x2c] sm:$0xf]
        %v2084 = vld [vmem:[#allocation12 + $0x30] sm:$0xf]
        %v2085 = vld [vmem:[#allocation12 + $0x34] sm:$0xf]
        %v2086 = vld [vmem:[#allocation12 + $0x38] sm:$0xf]
        %v2087 = vld [vmem:[#allocation12 + $0x3c] sm:$0xf]
        %v2088 = vpack.c.bf16 %v2071, %v2071
        %v2089 = vld [vmem:[%s7] sm:$0x1]
        %v2090 = vperm.slane %v2089, 0
        %v2107 = vunpack.c.l.b16 %v2072
        %v2108 = vunpack.c.l.b16 %v2073
        %v2109 = vunpack.c.l.b16 %v2074
        %v2110 = vunpack.c.l.b16 %v2075
        %v2111 = vunpack.c.l.b16 %v2076
        %v2112 = vunpack.c.l.b16 %v2077
        %v2113 = vunpack.c.l.b16 %v2078
        %v2114 = vunpack.c.l.b16 %v2079
        %v2115 = vunpack.c.l.b16 %v2080
        %v2116 = vunpack.c.l.b16 %v2081
        %v2117 = vunpack.c.l.b16 %v2082
        %v2118 = vunpack.c.l.b16 %v2083
        %v2119 = vunpack.c.l.b16 %v2084
        %v2120 = vunpack.c.l.b16 %v2085
        %v2121 = vunpack.c.l.b16 %v2086
        %v2122 = vunpack.c.l.b16 %v2087
        %v2123 = vpack.c.b16 %v2108, %v2107
        %v2124 = vpack.c.b16 %v2110, %v2109
        %v2125 = vpack.c.b16 %v2112, %v2111
        %v2126 = vpack.c.b16 %v2114, %v2113
        %v2127 = vpack.c.b16 %v2116, %v2115
        %v2128 = vpack.c.b16 %v2118, %v2117
        %v2129 = vpack.c.b16 %v2120, %v2119
        %v2130 = vpack.c.b16 %v2122, %v2121
        %2139 = vmatpush.bf16.msra.mxu0 %v2130
        %2140 = vmatpush.bf16.msra.mxu0 %v2129
        %2141 = vmatpush.bf16.msra.mxu0 %v2128
        %2142 = vmatpush.bf16.msra.mxu0 %v2127
        %2143 = vmatpush.bf16.msra.mxu0 %v2126
        %2144 = vmatpush.bf16.msra.mxu0 %v2125
        %2145 = vmatpush.bf16.msra.mxu0 %v2124
        %2146 = vmatpush.bf16.msra.mxu0 %v2123
        %2147 = vmatmul.bf16.gmra.mxu0 %v2088
        %v2148 = vpop.f32.mrf.mxu0
        %v2149 = vadd.f32 %v2090, %v2148
        %v2150 = vpop.f32.mrf.mxu0
        %2151 = vdwg.mxu0
        %v2152 = vmul.f32 %v2149, 0.17677669
        %2154 = vrot.lane.b32.xlu0 %v2152, 96
        %v2155 = vpop.permute.xlu0 %2154
        %2157 = vrot.lane.b32.xlu0 %v2152, 64
        %v2158 = vpop.permute.xlu0 %2157
        %2160 = vrot.lane.b32.xlu0 %v2152, 32
        %v2161 = vpop.permute.xlu0 %2160
        %v2163 = vpack.c.bf16 %v2152, %v2152
        %v2164 = vpack.c.bf16 %v2155, %v2155
        %v2165 = vpack.c.bf16 %v2158, %v2158
        %v2166 = vpack.c.bf16 %v2161, %v2161
        %v2167 = vld [vmem:[#allocation4] sm:$0xf]
        %v2168 = vld [vmem:[#allocation4 + $0x4] sm:$0xf]
        %v2169 = vld [vmem:[#allocation4 + $0x8] sm:$0xf]
        %v2170 = vld [vmem:[#allocation4 + $0xc] sm:$0xf]
        %v2171 = vld [vmem:[#allocation4 + $0x10] sm:$0xf]
        %v2172 = vld [vmem:[#allocation4 + $0x14] sm:$0xf]
        %v2173 = vld [vmem:[#allocation4 + $0x18] sm:$0xf]
        %v2174 = vld [vmem:[#allocation4 + $0x1c] sm:$0xf]
        %v2177 = vunpack.c.l.b16 %v2167
        %v2178 = vunpack.c.l.b16 %v2168
        %v2179 = vpack.c.b16 %v2178, %v2177
        %v2181 = vsel %vm1368, %v2163, 0
        %v2184 = vsel %vm1368, %v2179, 0
        %2186 = vmatpush.bf16.xpose.msra.mxu0 0
        %2187 = vmatpush.bf16.xpose.msra.mxu0 0
        %2188 = vmatpush.bf16.xpose.msra.mxu0 0
        %2189 = vmatpush.bf16.xpose.msra.mxu0 0
        %2190 = vmatpush.bf16.xpose.msra.mxu0 0
        %2191 = vmatpush.bf16.xpose.msra.mxu0 0
        %2192 = vmatpush.bf16.xpose.msra.mxu0 0
        %2193 = vmatpush.bf16.xpose.msra.mxu0 %v2184
        %2194 = vmatmul.bf16.gmra.mxu0 %v2181
        %v2195 = vpop.f32.mrf.mxu0
        %v2196 = vadd.f32 0.0, %v2195
        %v2197 = vpop.f32.mrf.mxu0
        %2198 = vdwg.mxu0
        %v2201 = vunpack.c.l.b16 %v2169
        %v2202 = vunpack.c.l.b16 %v2170
        %v2203 = vpack.c.b16 %v2202, %v2201
        %v2205 = vsel %vm1368, %v2164, 0
        %v2208 = vsel %vm1368, %v2203, 0
        %2210 = vmatpush.bf16.xpose.msra.mxu0 0
        %2211 = vmatpush.bf16.xpose.msra.mxu0 0
        %2212 = vmatpush.bf16.xpose.msra.mxu0 0
        %2213 = vmatpush.bf16.xpose.msra.mxu0 0
        %2214 = vmatpush.bf16.xpose.msra.mxu0 0
        %2215 = vmatpush.bf16.xpose.msra.mxu0 0
        %2216 = vmatpush.bf16.xpose.msra.mxu0 0
        %2217 = vmatpush.bf16.xpose.msra.mxu0 %v2208
        %2218 = vmatmul.bf16.gmra.mxu0 %v2205
        %v2219 = vpop.f32.mrf.mxu0
        %v2220 = vadd.f32 0.0, %v2219
        %v2221 = vpop.f32.mrf.mxu0
        %2222 = vdwg.mxu0
        %v2225 = vunpack.c.l.b16 %v2171
        %v2226 = vunpack.c.l.b16 %v2172
        %v2227 = vpack.c.b16 %v2226, %v2225
        %v2229 = vsel %vm1368, %v2165, 0
        %v2232 = vsel %vm1368, %v2227, 0
        %2234 = vmatpush.bf16.xpose.msra.mxu0 0
        %2235 = vmatpush.bf16.xpose.msra.mxu0 0
        %2236 = vmatpush.bf16.xpose.msra.mxu0 0
        %2237 = vmatpush.bf16.xpose.msra.mxu0 0
        %2238 = vmatpush.bf16.xpose.msra.mxu0 0
        %2239 = vmatpush.bf16.xpose.msra.mxu0 0
        %2240 = vmatpush.bf16.xpose.msra.mxu0 0
        %2241 = vmatpush.bf16.xpose.msra.mxu0 %v2232
        %2242 = vmatmul.bf16.gmra.mxu0 %v2229
        %v2243 = vpop.f32.mrf.mxu0
        %v2244 = vadd.f32 0.0, %v2243
        %v2245 = vpop.f32.mrf.mxu0
        %2246 = vdwg.mxu0
        %v2249 = vunpack.c.l.b16 %v2173
        %v2250 = vunpack.c.l.b16 %v2174
        %v2251 = vpack.c.b16 %v2250, %v2249
        %v2253 = vsel %vm1368, %v2166, 0
        %v2256 = vsel %vm1368, %v2251, 0
        %2258 = vmatpush.bf16.xpose.msra.mxu0 0
        %2259 = vmatpush.bf16.xpose.msra.mxu0 0
        %2260 = vmatpush.bf16.xpose.msra.mxu0 0
        %2261 = vmatpush.bf16.xpose.msra.mxu0 0
        %2262 = vmatpush.bf16.xpose.msra.mxu0 0
        %2263 = vmatpush.bf16.xpose.msra.mxu0 0
        %2264 = vmatpush.bf16.xpose.msra.mxu0 0
        %2265 = vmatpush.bf16.xpose.msra.mxu0 %v2256
        %2266 = vmatmul.bf16.gmra.mxu0 %v2253
        %v2267 = vpop.f32.mrf.mxu0
        %v2268 = vadd.f32 0.0, %v2267
        %v2269 = vpop.f32.mrf.mxu0
        %2270 = vdwg.mxu0
        %v2271 = vsel %vm1252, 1, 0
        %v2272 = vperm.slane %v2271, 0
        %vm2273 = vcmp.eq.s32.totalorder %v2272, 1
        %v2274 = vsel %vm2273, -1e+30, %v2196
        %v2275 = vsel %vm2273, -1e+30, %v2220
        %v2276 = vsel %vm2273, -1e+30, %v2244
        %v2277 = vsel %vm2273, -1e+30, %v2268
        %v2278 = vsel %vm1647, %v2274, -inf
        %2279 = vmax.xlane.f32.xlu0 %v2278
        %v2280 = vpop.xlane.xlu0 %2279
        %v2281 = vsel %vm1647, %v2275, -inf
        %2282 = vmax.xlane.f32.xlu0 %v2281
        %v2283 = vpop.xlane.xlu0 %2282
        %v2284 = vsel %vm1647, %v2276, -inf
        %2285 = vmax.xlane.f32.xlu0 %v2284
        %v2286 = vpop.xlane.xlu0 %2285
        %v2287 = vsel %vm1647, %v2277, -inf
        %2288 = vmax.xlane.f32.xlu0 %v2287
        %v2289 = vpop.xlane.xlu0 %2288
        %v2290 = vsub.f32 %v2274, %v2280
        %v2291 = vsub.f32 %v2275, %v2283
        %v2292 = vsub.f32 %v2276, %v2286
        %v2293 = vsub.f32 %v2277, %v2289
        %v2294 = vmul.f32 %v2290, 1.442695
        %v2295 = vpow.pop %v2294
        %v2296 = vmul.f32 %v2291, 1.442695
        %v2297 = vpow.pop %v2296
        %v2298 = vmul.f32 %v2292, 1.442695
        %v2299 = vpow.pop %v2298
        %v2300 = vmul.f32 %v2293, 1.442695
        %v2301 = vpow.pop %v2300
        %v2302 = vsel %vm1647, %v2295, 0.0
        %2303 = vadd.xlane.f32.xlu0 %v2302
        %v2304 = vpop.xlane.xlu0 %2303
        %v2305 = vsel %vm1647, %v2297, 0.0
        %2306 = vadd.xlane.f32.xlu0 %v2305
        %v2307 = vpop.xlane.xlu0 %2306
        %v2308 = vsel %vm1647, %v2299, 0.0
        %2309 = vadd.xlane.f32.xlu0 %v2308
        %v2310 = vpop.xlane.xlu0 %2309
        %v2311 = vsel %vm1647, %v2301, 0.0
        %2312 = vadd.xlane.f32.xlu0 %v2311
        %v2313 = vpop.xlane.xlu0 %2312
        %v2314 = vrcp.pop %v2304
        %v2315 = vrcp.pop %v2307
        %v2316 = vrcp.pop %v2310
        %v2317 = vrcp.pop %v2313
        %v2318 = vmul.f32 %v2295, %v2314
        %v2319 = vmul.f32 %v2297, %v2315
        %v2320 = vmul.f32 %v2299, %v2316
        %v2321 = vmul.f32 %v2301, %v2317
        %v2322 = vpack.c.bf16 %v2318, %v2318
        %v2323 = vpack.c.bf16 %v2319, %v2319
        %v2324 = vpack.c.bf16 %v2320, %v2320
        %v2325 = vpack.c.bf16 %v2321, %v2321
        %v2326 = vld [vmem:[#allocation5] sm:$0xf]
        %v2327 = vld [vmem:[#allocation5 + $0x4] sm:$0xf]
        %v2328 = vld [vmem:[#allocation5 + $0x8] sm:$0xf]
        %v2329 = vld [vmem:[#allocation5 + $0xc] sm:$0xf]
        %v2330 = vld [vmem:[#allocation5 + $0x10] sm:$0xf]
        %v2331 = vld [vmem:[#allocation5 + $0x14] sm:$0xf]
        %v2332 = vld [vmem:[#allocation5 + $0x18] sm:$0xf]
        %v2333 = vld [vmem:[#allocation5 + $0x1c] sm:$0xf]
        %v2336 = vunpack.c.l.b16 %v2326
        %v2337 = vunpack.c.l.b16 %v2327
        %v2338 = vpack.c.b16 %v2337, %v2336
        %v2341 = vsel %vm1647, %v2322, 0
        %2343 = vmatpush.bf16.msra.mxu0 0
        %2344 = vmatpush.bf16.msra.mxu0 0
        %2345 = vmatpush.bf16.msra.mxu0 0
        %2346 = vmatpush.bf16.msra.mxu0 0
        %2347 = vmatpush.bf16.msra.mxu0 0
        %2348 = vmatpush.bf16.msra.mxu0 0
        %2349 = vmatpush.bf16.msra.mxu0 0
        %2350 = vmatpush.bf16.msra.mxu0 %v2338
        %2351 = vmatmul.bf16.gmra.mxu0 %v2341
        %v2352 = vpop.f32.mrf.mxu0
        %v2353 = vadd.f32 0.0, %v2352
        %v2354 = vpop.f32.mrf.mxu0
        %2355 = vdwg.mxu0
        %v2358 = vunpack.c.l.b16 %v2328
        %v2359 = vunpack.c.l.b16 %v2329
        %v2360 = vpack.c.b16 %v2359, %v2358
        %v2363 = vsel %vm1647, %v2323, 0
        %2365 = vmatpush.bf16.msra.mxu0 0
        %2366 = vmatpush.bf16.msra.mxu0 0
        %2367 = vmatpush.bf16.msra.mxu0 0
        %2368 = vmatpush.bf16.msra.mxu0 0
        %2369 = vmatpush.bf16.msra.mxu0 0
        %2370 = vmatpush.bf16.msra.mxu0 0
        %2371 = vmatpush.bf16.msra.mxu0 0
        %2372 = vmatpush.bf16.msra.mxu0 %v2360
        %2373 = vmatmul.bf16.gmra.mxu0 %v2363
        %v2374 = vpop.f32.mrf.mxu0
        %v2375 = vadd.f32 0.0, %v2374
        %v2376 = vpop.f32.mrf.mxu0
        %2377 = vdwg.mxu0
        %v2380 = vunpack.c.l.b16 %v2330
        %v2381 = vunpack.c.l.b16 %v2331
        %v2382 = vpack.c.b16 %v2381, %v2380
        %v2385 = vsel %vm1647, %v2324, 0
        %2387 = vmatpush.bf16.msra.mxu0 0
        %2388 = vmatpush.bf16.msra.mxu0 0
        %2389 = vmatpush.bf16.msra.mxu0 0
        %2390 = vmatpush.bf16.msra.mxu0 0
        %2391 = vmatpush.bf16.msra.mxu0 0
        %2392 = vmatpush.bf16.msra.mxu0 0
        %2393 = vmatpush.bf16.msra.mxu0 0
        %2394 = vmatpush.bf16.msra.mxu0 %v2382
        %2395 = vmatmul.bf16.gmra.mxu0 %v2385
        %v2396 = vpop.f32.mrf.mxu0
        %v2397 = vadd.f32 0.0, %v2396
        %v2398 = vpop.f32.mrf.mxu0
        %2399 = vdwg.mxu0
        %v2402 = vunpack.c.l.b16 %v2332
        %v2403 = vunpack.c.l.b16 %v2333
        %v2404 = vpack.c.b16 %v2403, %v2402
        %v2407 = vsel %vm1647, %v2325, 0
        %2409 = vmatpush.bf16.msra.mxu0 0
        %2410 = vmatpush.bf16.msra.mxu0 0
        %2411 = vmatpush.bf16.msra.mxu0 0
        %2412 = vmatpush.bf16.msra.mxu0 0
        %2413 = vmatpush.bf16.msra.mxu0 0
        %2414 = vmatpush.bf16.msra.mxu0 0
        %2415 = vmatpush.bf16.msra.mxu0 0
        %2416 = vmatpush.bf16.msra.mxu0 %v2404
        %2417 = vmatmul.bf16.gmra.mxu0 %v2407
        %v2418 = vpop.f32.mrf.mxu0
        %v2419 = vadd.f32 0.0, %v2418
        %v2420 = vpop.f32.mrf.mxu0
        %2421 = vdwg.mxu0
        %2423 = vrot.lane.b32.xlu0 %v2375, 32
        %v2424 = vpop.permute.xlu0 %2423
        %2427 = vrot.lane.b32.xlu0 %v2397, 64
        %v2428 = vpop.permute.xlu0 %2427
        %2431 = vrot.lane.b32.xlu0 %v2419, 96
        %v2432 = vpop.permute.xlu0 %2431
        %v2434 = vsel %vm1368, %v2353, %v2424
        %v2435 = vsel %vm1947, %v2434, %v2428
        %v2436 = vsel %vm1949, %v2435, %v2432
        %s2437 = scalar_lea.vmem [#allocation12], 192
        %v2438 = vld [vmem:[%s2437] sm:$0xf]
        %v2439 = vld [vmem:[%s2437 + $0x4] sm:$0xf]
        %v2440 = vld [vmem:[%s2437 + $0x8] sm:$0xf]
        %v2441 = vld [vmem:[%s2437 + $0xc] sm:$0xf]
        %v2442 = vld [vmem:[%s2437 + $0x10] sm:$0xf]
        %v2443 = vld [vmem:[%s2437 + $0x14] sm:$0xf]
        %v2444 = vld [vmem:[%s2437 + $0x18] sm:$0xf]
        %v2445 = vld [vmem:[%s2437 + $0x1c] sm:$0xf]
        %v2446 = vld [vmem:[%s2437 + $0x20] sm:$0xf]
        %v2447 = vld [vmem:[%s2437 + $0x24] sm:$0xf]
        %v2448 = vld [vmem:[%s2437 + $0x28] sm:$0xf]
        %v2449 = vld [vmem:[%s2437 + $0x2c] sm:$0xf]
        %v2450 = vld [vmem:[%s2437 + $0x30] sm:$0xf]
        %v2451 = vld [vmem:[%s2437 + $0x34] sm:$0xf]
        %v2452 = vld [vmem:[%s2437 + $0x38] sm:$0xf]
        %v2453 = vld [vmem:[%s2437 + $0x3c] sm:$0xf]
        %v2454 = vpack.c.bf16 %v2436, %v2436
        %v2455 = vld [vmem:[%s7 + $0x3] sm:$0x1]
        %v2456 = vperm.slane %v2455, 0
        %v2473 = vunpack.c.l.b16 %v2438
        %v2474 = vunpack.c.l.b16 %v2439
        %v2475 = vunpack.c.l.b16 %v2440
        %v2476 = vunpack.c.l.b16 %v2441
        %v2477 = vunpack.c.l.b16 %v2442
        %v2478 = vunpack.c.l.b16 %v2443
        %v2479 = vunpack.c.l.b16 %v2444
        %v2480 = vunpack.c.l.b16 %v2445
        %v2481 = vunpack.c.l.b16 %v2446
        %v2482 = vunpack.c.l.b16 %v2447
        %v2483 = vunpack.c.l.b16 %v2448
        %v2484 = vunpack.c.l.b16 %v2449
        %v2485 = vunpack.c.l.b16 %v2450
        %v2486 = vunpack.c.l.b16 %v2451
        %v2487 = vunpack.c.l.b16 %v2452
        %v2488 = vunpack.c.l.b16 %v2453
        %v2489 = vpack.c.b16 %v2474, %v2473
        %v2490 = vpack.c.b16 %v2476, %v2475
        %v2491 = vpack.c.b16 %v2478, %v2477
        %v2492 = vpack.c.b16 %v2480, %v2479
        %v2493 = vpack.c.b16 %v2482, %v2481
        %v2494 = vpack.c.b16 %v2484, %v2483
        %v2495 = vpack.c.b16 %v2486, %v2485
        %v2496 = vpack.c.b16 %v2488, %v2487
        %2505 = vmatpush.bf16.msra.mxu0 %v2496
        %2506 = vmatpush.bf16.msra.mxu0 %v2495
        %2507 = vmatpush.bf16.msra.mxu0 %v2494
        %2508 = vmatpush.bf16.msra.mxu0 %v2493
        %2509 = vmatpush.bf16.msra.mxu0 %v2492
        %2510 = vmatpush.bf16.msra.mxu0 %v2491
        %2511 = vmatpush.bf16.msra.mxu0 %v2490
        %2512 = vmatpush.bf16.msra.mxu0 %v2489
        %2513 = vmatmul.bf16.gmra.mxu0 %v2454
        %v2514 = vpop.f32.mrf.mxu0
        %v2515 = vadd.f32 %v2456, %v2514
        %v2516 = vpop.f32.mrf.mxu0
        %2517 = vdwg.mxu0
        %v2518 = vmul.f32 %v2515, %v2035
        %v2519 = vadd.f32 %v2518, %v2071
        %v2520 = vld [vmem:[#allocation14 + $0x1] sm:$0x1]
        %v2521 = vld [vmem:[#allocation15 + $0x1] sm:$0x1]
        %2522 = vadd.xlane.f32.xlu0 %v2519
        %v2523 = vpop.xlane.xlu0 %2522
        %v2524 = vmul.f32 %v2523, %v2049
        %v2525 = vsub.f32 %v2519, %v2524
        %v2526 = vmul.f32 %v2525, %v2525
        %2527 = vadd.xlane.f32.xlu0 %v2526
        %v2528 = vpop.xlane.xlu0 %2527
        %v2529 = vmul.f32 %v2528, %v2049
        %v2530 = vadd.f32 %v2529, 1e-06
        %v2531 = vrsqrt.pop %v2530
        %v2532 = vmul.f32 %v2531, %v2530
        %v2533 = vmul.f32 %v2532, %v2531
        %v2534 = vmul.f32 0.5, %v2533
        %v2535 = vsub.f32 1.5, %v2534
        %v2536 = vmul.f32 %v2531, %v2535
        %vm2537 = vweird.f32 %v2530
        %vm2538 = vweird.f32 %v2531
        %vm2539 = vmor %vm2537, %vm2538
        %v2540 = vsel %vm2539, %v2531, %v2536
        %v2541 = vmul.f32 %v2525, %v2540
        %v2542 = vperm.slane %v2520, 0
        %v2543 = vmul.f32 %v2541, %v2542
        %v2544 = vperm.slane %v2521, 0
        %v2545 = vadd.f32 %v2543, %v2544
        %v2546 = vld [vmem:[#allocation20] sm:$0xff]
        %v2547 = vld [vmem:[#allocation20 + $0x8] sm:$0xff]
        %v2548 = vld [vmem:[#allocation20 + $0x10] sm:$0xff]
        %v2549 = vld [vmem:[#allocation20 + $0x18] sm:$0xff]
        %v2550 = vld [vmem:[#allocation20 + $0x20] sm:$0xff]
        %v2551 = vld [vmem:[#allocation20 + $0x28] sm:$0xff]
        %v2552 = vld [vmem:[#allocation20 + $0x30] sm:$0xff]
        %v2553 = vld [vmem:[#allocation20 + $0x38] sm:$0xff]
        %v2554 = vld [vmem:[#allocation20 + $0x40] sm:$0xff]
        %v2555 = vld [vmem:[#allocation20 + $0x48] sm:$0xff]
        %v2556 = vld [vmem:[#allocation20 + $0x50] sm:$0xff]
        %v2557 = vld [vmem:[#allocation20 + $0x58] sm:$0xff]
        %v2558 = vld [vmem:[#allocation20 + $0x60] sm:$0xff]
        %v2559 = vld [vmem:[#allocation20 + $0x68] sm:$0xff]
        %v2560 = vld [vmem:[#allocation20 + $0x70] sm:$0xff]
        %v2561 = vld [vmem:[#allocation20 + $0x78] sm:$0xff]
        %v2562 = vpack.c.bf16 %v2545, %v2545
        %v2563 = vld [vmem:[%s13] sm:$0x3]
        %v2565 = vperm.slane %v2563, 0
        %v2566 = vperm.slane %v2563, 1
        %v2585 = vunpack.c.l.b16 %v2546
        %v2586 = vunpack.c.h.b16 %v2546
        %v2587 = vunpack.c.l.b16 %v2547
        %v2588 = vunpack.c.h.b16 %v2547
        %v2589 = vunpack.c.l.b16 %v2548
        %v2590 = vunpack.c.h.b16 %v2548
        %v2591 = vunpack.c.l.b16 %v2549
        %v2592 = vunpack.c.h.b16 %v2549
        %v2593 = vunpack.c.l.b16 %v2550
        %v2594 = vunpack.c.h.b16 %v2550
        %v2595 = vunpack.c.l.b16 %v2551
        %v2596 = vunpack.c.h.b16 %v2551
        %v2597 = vunpack.c.l.b16 %v2552
        %v2598 = vunpack.c.h.b16 %v2552
        %v2599 = vunpack.c.l.b16 %v2553
        %v2600 = vunpack.c.h.b16 %v2553
        %v2601 = vunpack.c.l.b16 %v2554
        %v2602 = vunpack.c.h.b16 %v2554
        %v2603 = vunpack.c.l.b16 %v2555
        %v2604 = vunpack.c.h.b16 %v2555
        %v2605 = vunpack.c.l.b16 %v2556
        %v2606 = vunpack.c.h.b16 %v2556
        %v2607 = vunpack.c.l.b16 %v2557
        %v2608 = vunpack.c.h.b16 %v2557
        %v2609 = vunpack.c.l.b16 %v2558
        %v2610 = vunpack.c.h.b16 %v2558
        %v2611 = vunpack.c.l.b16 %v2559
        %v2612 = vunpack.c.h.b16 %v2559
        %v2613 = vunpack.c.l.b16 %v2560
        %v2614 = vunpack.c.h.b16 %v2560
        %v2615 = vunpack.c.l.b16 %v2561
        %v2616 = vunpack.c.h.b16 %v2561
        %v2617 = vpack.c.b16 %v2587, %v2585
        %v2618 = vpack.c.b16 %v2588, %v2586
        %v2619 = vpack.c.b16 %v2591, %v2589
        %v2620 = vpack.c.b16 %v2592, %v2590
        %v2621 = vpack.c.b16 %v2595, %v2593
        %v2622 = vpack.c.b16 %v2596, %v2594
        %v2623 = vpack.c.b16 %v2599, %v2597
        %v2624 = vpack.c.b16 %v2600, %v2598
        %v2625 = vpack.c.b16 %v2603, %v2601
        %v2626 = vpack.c.b16 %v2604, %v2602
        %v2627 = vpack.c.b16 %v2607, %v2605
        %v2628 = vpack.c.b16 %v2608, %v2606
        %v2629 = vpack.c.b16 %v2611, %v2609
        %v2630 = vpack.c.b16 %v2612, %v2610
        %v2631 = vpack.c.b16 %v2615, %v2613
        %v2632 = vpack.c.b16 %v2616, %v2614
        %2649 = vmatpush.bf16.msra.mxu0 %v2631
        %2650 = vmatpush.bf16.msra.mxu0 %v2629
        %2651 = vmatpush.bf16.msra.mxu0 %v2627
        %2652 = vmatpush.bf16.msra.mxu0 %v2625
        %2653 = vmatpush.bf16.msra.mxu0 %v2623
        %2654 = vmatpush.bf16.msra.mxu0 %v2621
        %2655 = vmatpush.bf16.msra.mxu0 %v2619
        %2656 = vmatpush.bf16.msra.mxu0 %v2617
        %2657 = vmatmul.bf16.gmra.mxu0 %v2562
        %v2658 = vpop.f32.mrf.mxu0
        %v2659 = vadd.f32 %v2565, %v2658
        %v2660 = vpop.f32.mrf.mxu0
        %2661 = vdwg.mxu0
        %2662 = vmatpush.bf16.msra.mxu0 %v2632
        %2663 = vmatpush.bf16.msra.mxu0 %v2630
        %2664 = vmatpush.bf16.msra.mxu0 %v2628
        %2665 = vmatpush.bf16.msra.mxu0 %v2626
        %2666 = vmatpush.bf16.msra.mxu0 %v2624
        %2667 = vmatpush.bf16.msra.mxu0 %v2622
        %2668 = vmatpush.bf16.msra.mxu0 %v2620
        %2669 = vmatpush.bf16.msra.mxu0 %v2618
        %2670 = vmatmul.bf16.gmra.mxu0 %v2562
        %v2671 = vpop.f32.mrf.mxu0
        %v2672 = vadd.f32 %v2566, %v2671
        %v2673 = vpop.f32.mrf.mxu0
        %2674 = vdwg.mxu0
        %v2675 = vmax.f32 %v2659, 0.0
        %v2676 = vmax.f32 %v2672, 0.0
        %v2677 = vld [vmem:[#allocation21] sm:$0xf]
        %v2678 = vld [vmem:[#allocation21 + $0x4] sm:$0xf]
        %v2679 = vld [vmem:[#allocation21 + $0x8] sm:$0xf]
        %v2680 = vld [vmem:[#allocation21 + $0xc] sm:$0xf]
        %v2681 = vld [vmem:[#allocation21 + $0x10] sm:$0xf]
        %v2682 = vld [vmem:[#allocation21 + $0x14] sm:$0xf]
        %v2683 = vld [vmem:[#allocation21 + $0x18] sm:$0xf]
        %v2684 = vld [vmem:[#allocation21 + $0x1c] sm:$0xf]
        %v2685 = vld [vmem:[#allocation21 + $0x20] sm:$0xf]
        %v2686 = vld [vmem:[#allocation21 + $0x24] sm:$0xf]
        %v2687 = vld [vmem:[#allocation21 + $0x28] sm:$0xf]
        %v2688 = vld [vmem:[#allocation21 + $0x2c] sm:$0xf]
        %v2689 = vld [vmem:[#allocation21 + $0x30] sm:$0xf]
        %v2690 = vld [vmem:[#allocation21 + $0x34] sm:$0xf]
        %v2691 = vld [vmem:[#allocation21 + $0x38] sm:$0xf]
        %v2692 = vld [vmem:[#allocation21 + $0x3c] sm:$0xf]
        %v2693 = vld [vmem:[#allocation21 + $0x40] sm:$0xf]
        %v2694 = vld [vmem:[#allocation21 + $0x44] sm:$0xf]
        %v2695 = vld [vmem:[#allocation21 + $0x48] sm:$0xf]
        %v2696 = vld [vmem:[#allocation21 + $0x4c] sm:$0xf]
        %v2697 = vld [vmem:[#allocation21 + $0x50] sm:$0xf]
        %v2698 = vld [vmem:[#allocation21 + $0x54] sm:$0xf]
        %v2699 = vld [vmem:[#allocation21 + $0x58] sm:$0xf]
        %v2700 = vld [vmem:[#allocation21 + $0x5c] sm:$0xf]
        %v2701 = vld [vmem:[#allocation21 + $0x60] sm:$0xf]
        %v2702 = vld [vmem:[#allocation21 + $0x64] sm:$0xf]
        %v2703 = vld [vmem:[#allocation21 + $0x68] sm:$0xf]
        %v2704 = vld [vmem:[#allocation21 + $0x6c] sm:$0xf]
        %v2705 = vld [vmem:[#allocation21 + $0x70] sm:$0xf]
        %v2706 = vld [vmem:[#allocation21 + $0x74] sm:$0xf]
        %v2707 = vld [vmem:[#allocation21 + $0x78] sm:$0xf]
        %v2708 = vld [vmem:[#allocation21 + $0x7c] sm:$0xf]
        %v2709 = vpack.c.bf16 %v2675, %v2675
        %v2710 = vpack.c.bf16 %v2676, %v2676
        %v2711 = vld [vmem:[%s15] sm:$0x1]
        %v2713 = vperm.slane %v2711, 0
        %v2747 = vunpack.c.l.b16 %v2677
        %v2748 = vunpack.c.l.b16 %v2678
        %v2749 = vunpack.c.l.b16 %v2679
        %v2750 = vunpack.c.l.b16 %v2680
        %v2751 = vunpack.c.l.b16 %v2681
        %v2752 = vunpack.c.l.b16 %v2682
        %v2753 = vunpack.c.l.b16 %v2683
        %v2754 = vunpack.c.l.b16 %v2684
        %v2755 = vunpack.c.l.b16 %v2685
        %v2756 = vunpack.c.l.b16 %v2686
        %v2757 = vunpack.c.l.b16 %v2687
        %v2758 = vunpack.c.l.b16 %v2688
        %v2759 = vunpack.c.l.b16 %v2689
        %v2760 = vunpack.c.l.b16 %v2690
        %v2761 = vunpack.c.l.b16 %v2691
        %v2762 = vunpack.c.l.b16 %v2692
        %v2763 = vunpack.c.l.b16 %v2693
        %v2764 = vunpack.c.l.b16 %v2694
        %v2765 = vunpack.c.l.b16 %v2695
        %v2766 = vunpack.c.l.b16 %v2696
        %v2767 = vunpack.c.l.b16 %v2697
        %v2768 = vunpack.c.l.b16 %v2698
        %v2769 = vunpack.c.l.b16 %v2699
        %v2770 = vunpack.c.l.b16 %v2700
        %v2771 = vunpack.c.l.b16 %v2701
        %v2772 = vunpack.c.l.b16 %v2702
        %v2773 = vunpack.c.l.b16 %v2703
        %v2774 = vunpack.c.l.b16 %v2704
        %v2775 = vunpack.c.l.b16 %v2705
        %v2776 = vunpack.c.l.b16 %v2706
        %v2777 = vunpack.c.l.b16 %v2707
        %v2778 = vunpack.c.l.b16 %v2708
        %v2779 = vpack.c.b16 %v2748, %v2747
        %v2780 = vpack.c.b16 %v2750, %v2749
        %v2781 = vpack.c.b16 %v2752, %v2751
        %v2782 = vpack.c.b16 %v2754, %v2753
        %v2783 = vpack.c.b16 %v2756, %v2755
        %v2784 = vpack.c.b16 %v2758, %v2757
        %v2785 = vpack.c.b16 %v2760, %v2759
        %v2786 = vpack.c.b16 %v2762, %v2761
        %v2787 = vpack.c.b16 %v2764, %v2763
        %v2788 = vpack.c.b16 %v2766, %v2765
        %v2789 = vpack.c.b16 %v2768, %v2767
        %v2790 = vpack.c.b16 %v2770, %v2769
        %v2791 = vpack.c.b16 %v2772, %v2771
        %v2792 = vpack.c.b16 %v2774, %v2773
        %v2793 = vpack.c.b16 %v2776, %v2775
        %v2794 = vpack.c.b16 %v2778, %v2777
        %2811 = vmatpush.bf16.msra.mxu0 %v2786
        %2812 = vmatpush.bf16.msra.mxu0 %v2785
        %2813 = vmatpush.bf16.msra.mxu0 %v2784
        %2814 = vmatpush.bf16.msra.mxu0 %v2783
        %2815 = vmatpush.bf16.msra.mxu0 %v2782
        %2816 = vmatpush.bf16.msra.mxu0 %v2781
        %2817 = vmatpush.bf16.msra.mxu0 %v2780
        %2818 = vmatpush.bf16.msra.mxu0 %v2779
        %2819 = vmatmul.bf16.gmra.mxu0 %v2709
        %v2820 = vpop.f32.mrf.mxu0
        %v2821 = vadd.f32 %v2713, %v2820
        %v2822 = vpop.f32.mrf.mxu0
        %2823 = vdwg.mxu0
        %2824 = vmatpush.bf16.msra.mxu0 %v2794
        %2825 = vmatpush.bf16.msra.mxu0 %v2793
        %2826 = vmatpush.bf16.msra.mxu0 %v2792
        %2827 = vmatpush.bf16.msra.mxu0 %v2791
        %2828 = vmatpush.bf16.msra.mxu0 %v2790
        %2829 = vmatpush.bf16.msra.mxu0 %v2789
        %2830 = vmatpush.bf16.msra.mxu0 %v2788
        %2831 = vmatpush.bf16.msra.mxu0 %v2787
        %2832 = vmatmul.bf16.gmra.mxu0 %v2710
        %v2833 = vpop.f32.mrf.mxu0
        %v2834 = vadd.f32 %v2821, %v2833
        %v2835 = vpop.f32.mrf.mxu0
        %2836 = vdwg.mxu0
        %v2837 = vmul.f32 %v2834, %v2035
        %v2838 = vadd.f32 %v2837, %v2545
        %v2839 = vld [vmem:[#allocation14 + $0x2] sm:$0x1]
        %v2840 = vld [vmem:[#allocation15 + $0x2] sm:$0x1]
        %2841 = vadd.xlane.f32.xlu0 %v2838
        %v2842 = vpop.xlane.xlu0 %2841
        %v2843 = vmul.f32 %v2842, %v2049
        %v2844 = vsub.f32 %v2838, %v2843
        %v2845 = vmul.f32 %v2844, %v2844
        %2846 = vadd.xlane.f32.xlu0 %v2845
        %v2847 = vpop.xlane.xlu0 %2846
        %v2848 = vmul.f32 %v2847, %v2049
        %v2849 = vadd.f32 %v2848, 1e-06
        %v2850 = vrsqrt.pop %v2849
        %v2851 = vmul.f32 %v2850, %v2849
        %v2852 = vmul.f32 %v2851, %v2850
        %v2853 = vmul.f32 0.5, %v2852
        %v2854 = vsub.f32 1.5, %v2853
        %v2855 = vmul.f32 %v2850, %v2854
        %vm2856 = vweird.f32 %v2849
        %vm2857 = vweird.f32 %v2850
        %vm2858 = vmor %vm2856, %vm2857
        %v2859 = vsel %vm2858, %v2850, %v2855
        %v2860 = vmul.f32 %v2844, %v2859
        %v2861 = vperm.slane %v2839, 0
        %v2862 = vmul.f32 %v2860, %v2861
        %v2863 = vperm.slane %v2840, 0
        %v2864 = vadd.f32 %v2862, %v2863
        %2865 = vst [vmem:[%s748] sm:$0xff] %v2864
        %s2866 = sand.u32 %s418, 1
        %s2867 = scalar_lea.sflag [#allocation8], %s2866
        %s2868 = sand.u32 %s418, 1
        %s2869 = smul.addr %s2868, 8
        %s2870 = scalar_lea.vmem [#allocation23], %s2869
        // Predicated region
        $region129: #{tpu_custom_call.1} parent=83 // pred_check
          %p2871 = pneg %p428
        $region130: #{tpu_custom_call.1} parent=83 // pred_check_branch
          %2873 = sbr.rel (%p2871) target = $region132
        $region131: #{tpu_custom_call.1} parent=83 // pred_region
          %2875 = vsyncadd %s2867, 0
          %s2876 = smul.addr %s44, 2
          %s2877 = sadd.s32 %s45, %s2876
          %s2878 = smul.addr %s2877, 8
          %s2879 = scalar_lea.hbm %s16, %s2878
          %s2881 = sshll.u32 %s2870, 4
          %s2882 = int_to_ptr.vmem [resolvable:$true] %s2881
          %s2883 = sshll.u32 %s2879, 4
          %s2884 = int_to_ptr.hbm [resolvable:$true] %s2883
          %2886 = dma.vmem_to_hbm [thread:$0]  %s2882, 128, %s2884, %s2867
        $region132: #{tpu_custom_call.1} parent=83 // pred_fallthru
          _
      $region84: #{tpu_custom_call.1} parent=5 // pred_fallthru
        _
      %p2887 = scmp.le.s32.totalorder 2, %s35
      // Predicated region
      $region133: #{tpu_custom_call.1} parent=5 // pred_check
        %p2888 = pneg %p2887
      $region134: #{tpu_custom_call.1} parent=5 // pred_check_branch
        %2890 = sbr.rel (%p2888) target = $region136
      $region135: #{tpu_custom_call.1} parent=5 // pred_region
        %s2891 = ssub.s32 %s35, 2
        // Predicated region
        $region137: #{tpu_custom_call.1} parent=135 // pred_check
          %p2892 = pneg %p434
        $region138: #{tpu_custom_call.1} parent=135 // pred_check_branch
          %2894 = sbr.rel (%p2892) target = $region140
        $region139: #{tpu_custom_call.1} parent=135 // pred_region
          %s2895 = sand.u32 %s419, 1
          %s2896 = scalar_lea.sflag [#allocation8], %s2895
          %s2897 = sand.u32 %s419, 1
          %s2898 = smul.addr %s2897, 8
          %s2899 = scalar_lea.vmem [#allocation23], %s2898
          %2901 = dma.done %s2896, 128
        $region140: #{tpu_custom_call.1} parent=135 // pred_fallthru
          _
      $region136: #{tpu_custom_call.1} parent=5 // pred_fallthru
        _
    $region6: #{tpu_custom_call.1} parent=1 // loop_footer
      %s39 = sadd.s32 1, %s35
    $region7: #{tpu_custom_call.1} parent=1 // loop_footer_branch
      %34 = sbr.rel target = $region3
    $region8: #{tpu_custom_call.1} parent=1 // loop_exit
      _
    %2902 = vsyncpa [#allocation7], 1
    %s2903 = scalar_lea.sflag [#allocation7], 1
    %2904 = vsyncpa %s2903, 1
    %2905 = vsyncpa [#allocation10], 1
    %s2906 = scalar_lea.sflag [#allocation10], 1
    %2907 = vsyncpa %s2906, 1
    %2908 = vsyncpa [#allocation13], 1
    %2909 = vsyncpa [#allocation16], 1
    %2910 = vsyncpa [#allocation19], 1
    %2911 = vsyncpa [#allocation22], 1
    %2912 = vsyncpa [#allocation8], 1
    %s2913 = scalar_lea.sflag [#allocation8], 1
    %2914 = vsyncpa %s2913, 1

</llo_original>
